<compile_context>
chip_gen: v5e
topology: v5e:2x2
jax: 0.10.0
libtpu: 0.0.40
codegen_flags: <defaults>
</compile_context>

<pallas_src>
import functools

import jax
import jax.numpy as jnp
from jax.experimental import pallas as pl
from jax.experimental.pallas import tpu as pltpu

DEFAULT_ACTS = ("relu", "sigmoid")   # gvp-pytorch default activations
NO_ACTS = (None, None)

# Set to jnp.bfloat16 on v6e/v7x (bf16-native MXU) to halve operand DMA bytes; the
# accumulators stay f32. Default f32 keeps exact reference semantics on all chips.
MATMUL_DTYPE = jnp.float32


def _round_up(x, m):
    return (x + m - 1) // m * m


def _apply_act(y, act):
    if act is None:
        return y
    if act == "relu":
        return jnp.maximum(y, 0.0)
    if act == "leaky_relu":
        return jnp.where(y > 0, y, 0.01 * y)
    raise ValueError(f"unsupported scalar activation: {act}")


def _vmem_call(kernel, out_shape, *inputs):
    """pallas_call with no grid: every operand/result is a whole-array VMEM block."""
    vmem = pl.BlockSpec(memory_space=pltpu.MemorySpace.VMEM)
    multi = isinstance(out_shape, tuple)
    return pl.pallas_call(
        kernel,
        out_shape=out_shape,
        in_specs=[vmem] * len(inputs),
        out_specs=tuple([vmem] * len(out_shape)) if multi else vmem,
    )(*inputs)


# ----------------------------- Pallas kernels -------------------------------

def _conv_chain_kernel(x_ref, w1_ref, b1_ref, w2_ref, b2_ref, o_ref, *, L):
    # x_ref: (B*L, 3*Cin) im2col of the zero-padded input (channels-last),
    # w1_ref: (3*Cin, C1), w2_ref: (3*C1, C2), o_ref: (B*L, C2).
    h = jnp.dot(x_ref[...].astype(MATMUL_DTYPE), w1_ref[...],
                preferred_element_type=jnp.float32) + b1_ref[...]
    h = jnp.maximum(h, 0.0)                                    # ReLU after conv1
    # Within-sequence row shifts for conv2's k=0 / k=2 taps as constant band matrices
    # (replaces zero-row concatenation shifts; unambiguous and runs on the MXU).
    BL = h.shape[0]
    r = jax.lax.broadcasted_iota(jnp.int32, (BL, BL), 0)
    c = jax.lax.broadcasted_iota(jnp.int32, (BL, BL), 1)
    sh_prev = jnp.where((c == r - 1) & (r % L != 0), 1.0, 0.0)          # h[r-1]
    sh_next = jnp.where((c == r + 1) & (r % L != L - 1), 1.0, 0.0)      # h[r+1]
    h_prev = jnp.dot(sh_prev, h, preferred_element_type=jnp.float32)
    h_next = jnp.dot(sh_next, h, preferred_element_type=jnp.float32)
    him = jnp.concatenate([h_prev, h, h_next], axis=1)                  # (B*L, 3*C1)
    y = jnp.dot(him.astype(MATMUL_DTYPE), w2_ref[...],
                preferred_element_type=jnp.float32) + b2_ref[...]
    o_ref[...] = jnp.maximum(y, 0.0)                           # ReLU after conv2


def pallas_conv_chain(x, w1, b1, w2, b2, L):
    """Conv1d(k3,s1,p1)+ReLU+Conv1d(k3,s1,p1)+ReLU; x channels-last (B, L, Cin)."""
    B, _, Cin = x.shape
    C1, C2 = b1.shape[0], b2.shape[0]
    xp = jnp.pad(x, ((0, 0), (1, 1), (0, 0)))                  # zero pad along L
    xim = jnp.concatenate([xp[:, 0:L], xp[:, 1:L + 1], xp[:, 2:L + 2]], axis=-1)
    xim = xim.reshape(B * L, 3 * Cin)                          # im2col for conv1
    return _vmem_call(
        functools.partial(_conv_chain_kernel, L=L),
        jax.ShapeDtypeStruct((B * L, C2), jnp.float32),
        xim, w1, b1.reshape(1, C1), w2, b2.reshape(1, C2))


def _gvp_fused_kernel(*refs, n, vo, ln, scalar_act, vector_act):
    """Fused (optional LayerNorm +) GVP (gvp-pytorch, vector_gate=False).

    Ref order: s (n,si), v (3n,vi) [, gamma (1,si), beta (1,si)], wh (vi,h),
    ws_s (si,so), ws_v (h,so), ws_b (1,so) [, wv (h,vo)] | s_out (n,so) [, v_out (3n,vo)].
    Vectors are coordinate-major: rows [0,n)=x, [n,2n)=y, [2n,3n)=z components, so the
    three coordinate matmuls are batched into single (3n, K) MXU dots.
    """
    it = iter(refs)
    s_ref, v_ref = next(it), next(it)
    if ln:
        g_ref, beta_ref = next(it), next(it)
    wh_ref, ws_s_ref, ws_v_ref, ws_b_ref = next(it), next(it), next(it), next(it)
    wv_ref = next(it) if vo else None
    s_out_ref = next(it)
    v_out_ref = next(it) if vo else None

    s = s_ref[...]
    v = v_ref[...]
    if ln:
        mu = jnp.mean(s, axis=-1, keepdims=True)
        var = jnp.mean(jnp.square(s - mu), axis=-1, keepdims=True)
        s = (s - mu) * jax.lax.rsqrt(var + 1e-5) * g_ref[...] + beta_ref[...]
        v0, v1, v2 = v[0:n], v[n:2 * n], v[2 * n:3 * n]
        sq = jnp.maximum(v0 * v0 + v1 * v1 + v2 * v2, 1e-8)             # (n, vi)
        inv = jax.lax.rsqrt(jnp.mean(sq, axis=-1, keepdims=True))       # (n, 1)
        v = v * jnp.concatenate([inv, inv, inv], axis=0)

    vh = jnp.dot(v.astype(MATMUL_DTYPE), wh_ref[...],
                 preferred_element_type=jnp.float32)                    # (3n, h)
    vh0, vh1, vh2 = vh[0:n], vh[n:2 * n], vh[2 * n:3 * n]
    vn = jnp.sqrt(jnp.maximum(vh0 * vh0 + vh1 * vh1 + vh2 * vh2, 1e-8))  # (n, h)
    y = (jnp.dot(s.astype(MATMUL_DTYPE), ws_s_ref[...], preferred_element_type=jnp.float32)
         + jnp.dot(vn.astype(MATMUL_DTYPE), ws_v_ref[...], preferred_element_type=jnp.float32)
         + ws_b_ref[...])
    s_out_ref[...] = _apply_act(y, scalar_act)

    if vo:
        vout = jnp.dot(vh.astype(MATMUL_DTYPE), wv_ref[...],
                       preferred_element_type=jnp.float32)              # (3n, vo)
        if vector_act == "sigmoid":
            w0, w1, w2 = vout[0:n], vout[n:2 * n], vout[2 * n:3 * n]
            gate = jax.nn.sigmoid(jnp.sqrt(jnp.maximum(w0 * w0 + w1 * w1 + w2 * w2, 1e-8)))
            vout = vout * jnp.concatenate([gate, gate, gate], axis=0)
        elif vector_act is not None:
            raise ValueError(f"unsupported vector activation: {vector_act}")
        v_out_ref[...] = vout


def _gvp_layernorm_kernel(s_ref, v_ref, g_ref, b_ref, s_out_ref, v_out_ref, *, n):
    # Fused GVP LayerNorm: scalar LayerNorm + per-node vector-channel norm.
    s = s_ref[...]
    mu = jnp.mean(s, axis=-1, keepdims=True)
    var = jnp.mean(jnp.square(s - mu), axis=-1, keepdims=True)
    s_out_ref[...] = (s - mu) * jax.lax.rsqrt(var + 1e-5) * g_ref[...] + b_ref[...]
    v = v_ref[...]                                                      # (3n, vdim)
    v0, v1, v2 = v[0:n], v[n:2 * n], v[2 * n:3 * n]
    sq = jnp.maximum(v0 * v0 + v1 * v1 + v2 * v2, 1e-8)
    inv = jax.lax.rsqrt(jnp.mean(sq, axis=-1, keepdims=True))
    v_out_ref[...] = v * jnp.concatenate([inv, inv, inv], axis=0)


def _reward_head_kernel(x_ref, w1_ref, b1_ref, w2_ref, b2_ref, o_ref):
    # Linear + LeakyReLU + Linear, fused.
    h = jnp.dot(x_ref[...].astype(MATMUL_DTYPE), w1_ref[...],
                preferred_element_type=jnp.float32) + b1_ref[...]
    h = _apply_act(h, "leaky_relu")
    o_ref[...] = jnp.dot(h.astype(MATMUL_DTYPE), w2_ref[...],
                         preferred_element_type=jnp.float32) + b2_ref[...]


def pallas_reward_head(x, p1, p2):
    B = x.shape[0]
    n1, n2 = p1["w"].shape[1], p2["w"].shape[1]
    return _vmem_call(_reward_head_kernel,
                      jax.ShapeDtypeStruct((B, n2), jnp.float32),
                      x, p1["w"], p1["b"].reshape(1, n1), p2["w"], p2["b"].reshape(1, n2))


# --------------------------- GVP building blocks ----------------------------

class KeyGen:
    def __init__(self, seed=0):
        self._key = jax.random.PRNGKey(seed)

    def __call__(self):
        self._key, sub = jax.random.split(self._key)
        return sub


def init_linear(kg, fan_in, fan_out, bias=True, zero=False):
    if zero:
        w = jnp.zeros((fan_in, fan_out), jnp.float32)
        b = jnp.zeros((fan_out,), jnp.float32) if bias else None
    else:
        bound = 1.0 / float(fan_in) ** 0.5
        w = jax.random.uniform(kg(), (fan_in, fan_out), jnp.float32, -bound, bound)
        b = (jax.random.uniform(kg(), (fan_out,), jnp.float32, -bound, bound)
             if bias else None)
    return {"w": w.astype(MATMUL_DTYPE), "b": b}


def init_gvp(kg, in_dims, out_dims):
    si, vi = in_dims
    so, vo = out_dims
    p = {"in": in_dims, "out": out_dims}
    if vi:
        h = max(vi, vo)
        p["h_dim"] = h
        p["wh"] = init_linear(kg, vi, h, bias=False)["w"]
        ws = init_linear(kg, si + h, so, bias=True)
        p["ws_s"], p["ws_v"], p["ws_b"] = ws["w"][:si], ws["w"][si:], ws["b"]
        if vo:
            p["wv"] = init_linear(kg, h, vo, bias=False)["w"]
    else:
        ws = init_linear(kg, si, so, bias=True)
        p["ws_s"], p["ws_b"] = ws["w"], ws["b"]
    return p


def init_layernorm(dims):
    s_dim, v_dim = dims
    return {"v": v_dim,
            "gamma": jnp.ones((s_dim,), jnp.float32),
            "beta": jnp.zeros((s_dim,), jnp.float32)}


def gvp_apply(p, s, v3, activations, ln=None):
    """Fused (optional LayerNorm +) GVP.  s:(N,si), v3:(3,N,vi).  Returns (s,v3) or s."""
    si, vi = p["in"]
    so, vo = p["out"]
    scalar_act, vector_act = activations
    n = s.shape[0]

    if not vi:
        # vi == 0 path is unused by DynamicsNetwork configs: plain XLA fallback.
        if ln is not None:
            mu = jnp.mean(s, -1, keepdims=True)
            var = jnp.mean(jnp.square(s - mu), -1, keepdims=True)
            s = (s - mu) * jax.lax.rsqrt(var + 1e-5) * ln["gamma"] + ln["beta"]
        s = _apply_act(jnp.dot(s, p["ws_s"].astype(jnp.float32)) + p["ws_b"], scalar_act)
        return (s, jnp.zeros((3, n, vo), jnp.float32)) if vo else s

    # pad rows to a multiple of 8 so the coordinate-block slices stay sublane-aligned
    n_pad = _round_up(n, 8)
    pad = n_pad - n
    s_p = jnp.pad(s, ((0, pad), (0, 0))) if pad else s
    v_p = jnp.pad(v3, ((0, 0), (0, pad), (0, 0))) if pad else v3
    v_flat = v_p.reshape(3 * n_pad, vi)

    inputs = [s_p, v_flat]
    if ln is not None:
        inputs += [ln["gamma"].reshape(1, si), ln["beta"].reshape(1, si)]
    inputs += [p["wh"], p["ws_s"], p["ws_v"], p["ws_b"].reshape(1, so)]
    if vo:
        inputs.append(p["wv"])
        out_shape = (jax.ShapeDtypeStruct((n_pad, so), jnp.float32),
                     jax.ShapeDtypeStruct((3 * n_pad, vo), jnp.float32))
    else:
        out_shape = jax.ShapeDtypeStruct((n_pad, so), jnp.float32)

    kernel = functools.partial(_gvp_fused_kernel, n=n_pad, vo=vo, ln=ln is not None,
                               scalar_act=scalar_act, vector_act=vector_act)
    out = _vmem_call(kernel, out_shape, *inputs)
    if vo:
        s_out, v_out = out
        return s_out[:n], v_out.reshape(3, n_pad, vo)[:, :n]
    return out[:n]


def gvp_layernorm_apply(p, s, v3):
    n, si = s.shape
    if not p["v"]:
        # scalar-only LayerNorm (unused by DynamicsNetwork configs): XLA fallback.
        mu = jnp.mean(s, -1, keepdims=True)
        var = jnp.mean(jnp.square(s - mu), -1, keepdims=True)
        return (s - mu) * jax.lax.rsqrt(var + 1e-5) * p["gamma"] + p["beta"], v3
    vd = v3.shape[2]
    n_pad = _round_up(n, 8)
    pad = n_pad - n
    s_p = jnp.pad(s, ((0, pad), (0, 0))) if pad else s
    v_p = jnp.pad(v3, ((0, 0), (0, pad), (0, 0))) if pad else v3
    s_out, v_out = _vmem_call(
        functools.partial(_gvp_layernorm_kernel, n=n_pad),
        (jax.ShapeDtypeStruct((n_pad, si), jnp.float32),
         jax.ShapeDtypeStruct((3 * n_pad, vd), jnp.float32)),
        s_p, v_p.reshape(3 * n_pad, vd), p["gamma"].reshape(1, si), p["beta"].reshape(1, si))
    return s_out[:n], v_out.reshape(3, n_pad, vd)[:, :n]


def init_gvp_conv(kg, node_dims, edge_dims, n_message=3):
    ns, nv = node_dims
    es, ev = edge_dims
    msg_in = (2 * ns + es, 2 * nv + ev)
    gvps = [init_gvp(kg, msg_in, node_dims)]
    for _ in range(n_message - 2):
        gvps.append(init_gvp(kg, node_dims, node_dims))
    gvps.append(init_gvp(kg, node_dims, node_dims))
    return {"message": gvps}


def gvp_conv_apply(p, s, v3, edge_index, e_s, e_v3):
    n_nodes = s.shape[0]
    src, dst = edge_index[0], edge_index[1]                  # message j(src) -> i(dst)
    # TODO(synk): edge gather/concat + mean scatter stay as XLA ops (data-dependent
    # indexing); fusing them into the message GVP kernel via PrefetchScalarGridSpec is
    # the next step if edge counts grow.
    ms = jnp.concatenate([s[src], e_s, s[dst]], axis=-1)
    mv3 = jnp.concatenate([v3[:, src], e_v3, v3[:, dst]], axis=-1)
    n_g = len(p["message"])
    for idx, gp in enumerate(p["message"]):
        acts = DEFAULT_ACTS if idx < n_g - 1 else NO_ACTS
        ms, mv3 = gvp_apply(gp, ms, mv3, acts)
    cnt = jnp.maximum(jax.ops.segment_sum(jnp.ones((ms.shape[0],), jnp.float32), dst,
                                          num_segments=n_nodes), 1.0)
    agg_s = jax.ops.segment_sum(ms, dst, num_segments=n_nodes) / cnt[:, None]
    vo = mv3.shape[2]
    agg_v3 = (jnp.zeros((3, n_nodes, vo), jnp.float32).at[:, dst, :].add(mv3)
              / cnt[None, :, None])
    return agg_s, agg_v3


def init_gvp_conv_layer(kg, node_dims, edge_dims, n_message=3, n_feedforward=2):
    ns, nv = node_dims
    hid = (4 * ns, 2 * nv)
    ff = [init_gvp(kg, node_dims, hid)]
    for _ in range(n_feedforward - 2):
        ff.append(init_gvp(kg, hid, hid))
    ff.append(init_gvp(kg, hid, node_dims))
    return {"conv": init_gvp_conv(kg, node_dims, edge_dims, n_message),
            "norm0": init_layernorm(node_dims),
            "norm1": init_layernorm(node_dims),
            "ff": ff}


def gvp_conv_layer_apply(p, s, v3, edge_index, e_s, e_v3):
    dh_s, dh_v3 = gvp_conv_apply(p["conv"], s, v3, edge_index, e_s, e_v3)
    # Dropout is eval-mode identity.
    s, v3 = gvp_layernorm_apply(p["norm0"], s + dh_s, v3 + dh_v3)
    fs, fv3 = s, v3
    n_g = len(p["ff"])
    for idx, gp in enumerate(p["ff"]):
        acts = DEFAULT_ACTS if idx < n_g - 1 else NO_ACTS
        fs, fv3 = gvp_apply(gp, fs, fv3, acts)
    s, v3 = gvp_layernorm_apply(p["norm1"], s + fs, v3 + fv3)
    return s, v3


# --------------------------- DynamicsNetwork --------------------------------

def init_dynamics_network(config, seed=0):
    kg = KeyGen(seed)
    H = config["hidden_dim"]
    ns_in, nv_in = config["node_in_dim"]
    node_h = config["node_h_dim"]
    edge_in = config["edge_in_dim"]
    edge_h = config["edge_h_dim"]
    node_out = config["node_out_dim"]
    output_size = 2 * config["support_size"] + 1

    params = {}
    # Conv weights are generated in PyTorch layout (Cout, Cin, 3) then pre-flattened to
    # im2col layout (3*Cin, Cout) once at init: W_flat[k*Cin+ci, co] = W_pt[co, ci, k].
    cin = H + 20
    b1 = 1.0 / float(cin * 3) ** 0.5
    w1 = jax.random.uniform(kg(), (H, cin, 3), jnp.float32, -b1, b1)
    params["conv_w1"] = jnp.transpose(w1, (2, 1, 0)).reshape(3 * cin, H).astype(MATMUL_DTYPE)
    params["conv_b1"] = jax.random.uniform(kg(), (H,), jnp.float32, -b1, b1)
    b2 = 1.0 / float(H * 3) ** 0.5
    w2 = jax.random.uniform(kg(), (H, H, 3), jnp.float32, -b2, b2)
    params["conv_w2"] = jnp.transpose(w2, (2, 1, 0)).reshape(3 * H, H).astype(MATMUL_DTYPE)
    params["conv_b2"] = jax.random.uniform(kg(), (H,), jnp.float32, -b2, b2)

    params["gvp_node_r_ln"] = init_layernorm((ns_in + 20, nv_in))
    params["gvp_node_r"] = init_gvp(kg, (ns_in + 20, nv_in), node_h)
    params["gvp_edge_r_ln"] = init_layernorm(edge_in)
    params["gvp_edge_r"] = init_gvp(kg, edge_in, edge_h)
    params["dynamics_layers"] = [init_gvp_conv_layer(kg, node_h, edge_h)
                                 for _ in range(config["n_layers"])]
    params["reward_ln"] = init_layernorm(node_h)
    params["reward_gvp"] = init_gvp(kg, node_h, (node_out, 0))
    params["rout1"] = init_linear(kg, node_out, node_out // 2)
    # final layer weight/bias filled with zeros (as in the module __init__)
    params["rout2"] = init_linear(kg, node_out // 2, output_size, zero=True)
    return params


def dynamics_forward(params, hidden_state, action, *, config):
    assert action.ndim == 2 and action.shape[1] == 1
    B = action.shape[0]
    L = config["length"]
    H = config["hidden_dim"]
    a = action[:, 0]

    # action one-hot scatter
    action_onehot = jax.nn.one_hot(a, L * 20, dtype=jnp.float32).reshape(B, L, 20)
    node_scalar = hidden_state["node_s"].reshape(B, L, H)
    curr_seq_state = jnp.concatenate([node_scalar, action_onehot], axis=-1)  # (B, L, H+20)

    # state branch: fully fused Conv1d+ReLU+Conv1d+ReLU Pallas kernel (channels-last)
    next_node_s = pallas_conv_chain(curr_seq_state, params["conv_w1"], params["conv_b1"],
                                    params["conv_w2"], params["conv_b2"], L)  # (B*L, H)
    avail = hidden_state["avaliable_pos"].at[jnp.arange(B), a // 20].set(0.0)
    next_hidden_state = dict(hidden_state)
    next_hidden_state["node_s"] = next_node_s
    next_hidden_state["avaliable_pos"] = avail

    # reward branch (GVP graph network); vectors kept coordinate-major (3, N, vdim)
    s = curr_seq_state.reshape(B * L, H + 20)
    v3 = jnp.transpose(hidden_state["node_v"], (2, 0, 1))
    e_v3 = jnp.transpose(hidden_state["edge_v"], (2, 0, 1))
    s, v3 = gvp_apply(params["gvp_node_r"], s, v3, NO_ACTS, ln=params["gvp_node_r_ln"])
    es, ev3 = gvp_apply(params["gvp_edge_r"], hidden_state["edge_s"], e_v3, NO_ACTS,
                        ln=params["gvp_edge_r_ln"])
    for lp in params["dynamics_layers"]:
        s, v3 = gvp_conv_layer_apply(lp, s, v3, hidden_state["edge_index"], es, ev3)
    reward = gvp_apply(params["reward_gvp"], s, v3, NO_ACTS,
                       ln=params["reward_ln"])                         # (N, node_out)
    # TODO(synk): per-graph scatter_sum stays in XLA (data-dependent segment ids).
    reward = jax.ops.segment_sum(reward, hidden_state["batch"], num_segments=B)
    reward = pallas_reward_head(reward, params["rout1"], params["rout2"])
    return next_hidden_state, reward


# --------------------------------- main --------------------------------------

if __name__ == "__main__":
    config = dict(hidden_dim=32, length=8, support_size=5,
                  node_in_dim=(32, 3), node_h_dim=(32, 4),
                  edge_in_dim=(16, 2), edge_h_dim=(16, 2),
                  node_out_dim=16, n_layers=1, dropout=0.1)
    B = 2
    L = config["length"]
    N = B * L

    key = jax.random.PRNGKey(0)
    ks = jax.random.split(key, 6)
    node_s = jax.random.normal(ks[0], (N, config["hidden_dim"]), jnp.float32)
    node_v = jax.random.normal(ks[1], (N, config["node_in_dim"][1], 3), jnp.float32)

    # bidirectional chain edges inside each graph
    src_list, dst_list = [], []
    for b in range(B):
        base = b * L
        for i in range(L - 1):
            src_list += [base + i, base + i + 1]
            dst_list += [base + i + 1, base + i]
    edge_index = jnp.array([src_list, dst_list], dtype=jnp.int32)
    E = edge_index.shape[1]
    edge_s = jax.random.normal(ks[2], (E, config["edge_in_dim"][0]), jnp.float32)
    edge_v = jax.random.normal(ks[3], (E, config["edge_in_dim"][1], 3), jnp.float32)
    batch = jnp.repeat(jnp.arange(B, dtype=jnp.int32), L)
    avail = jnp.ones((B, L), jnp.float32)

    hidden_state = dict(node_s=node_s, node_v=node_v, edge_s=edge_s, edge_v=edge_v,
                        edge_index=edge_index, batch=batch, avaliable_pos=avail)
    action = jax.random.randint(ks[4], (B, 1), 0, L * 20, dtype=jnp.int32)

    params = init_dynamics_network(config, seed=42)

    # One jitted XLA program for the whole forward pass: weights + static config are
    # bound via the closure, so only (hidden_state, action) are traced arguments.
    forward = jax.jit(functools.partial(dynamics_forward, params, config=config))

    next_hidden_state, reward = forward(hidden_state, action)
    jax.block_until_ready(next_hidden_state["node_s"])
    jax.block_until_ready(reward)

    assert next_hidden_state["node_s"].shape == (N, config["hidden_dim"])
    assert reward.shape == (B, 2 * config["support_size"] + 1)
    print("KERNEL_OK")
</pallas_src>

<mosaic_0001>
module attributes {stable_mosaic.version = 11 : i64} {
  func.func @_gvp_fused_kernel(%arg0: memref<16x52xf32, #tpu.memory_space<vmem>>, %arg1: memref<48x3xf32, #tpu.memory_space<vmem>>, %arg2: memref<1x52xf32, #tpu.memory_space<vmem>>, %arg3: memref<1x52xf32, #tpu.memory_space<vmem>>, %arg4: memref<3x4xf32, #tpu.memory_space<vmem>>, %arg5: memref<52x32xf32, #tpu.memory_space<vmem>>, %arg6: memref<4x32xf32, #tpu.memory_space<vmem>>, %arg7: memref<1x32xf32, #tpu.memory_space<vmem>>, %arg8: memref<4x4xf32, #tpu.memory_space<vmem>>, %arg9: memref<16x32xf32, #tpu.memory_space<vmem>>, %arg10: memref<48x4xf32, #tpu.memory_space<vmem>>) attributes {dimension_semantics = [], scalar_prefetch = 0 : i64, scratch_operands = 0 : i64, tpu.core_type = #tpu.core_type<tc>} {
    %c0 = arith.constant 0 : index
    %c0_0 = arith.constant 0 : index
    %0 = vector.load %arg0[%c0, %c0_0] : memref<16x52xf32, #tpu.memory_space<vmem>>, vector<16x52xf32>
    %c0_1 = arith.constant 0 : index
    %c0_2 = arith.constant 0 : index
    %1 = vector.load %arg1[%c0_1, %c0_2] : memref<48x3xf32, #tpu.memory_space<vmem>>, vector<48x3xf32>
    %cst = arith.constant dense<0.000000e+00> : vector<16xf32>
    %2 = vector.multi_reduction <add>, %0, %cst [1] : vector<16x52xf32> to vector<16xf32>
    %3 = vector.shape_cast %2 : vector<16xf32> to vector<16x1xf32>
    %cst_3 = arith.constant 5.200000e+01 : f32
    %4 = vector.broadcast %cst_3 : f32 to vector<16x1xf32>
    %5 = arith.divf %3, %4 : vector<16x1xf32>
    %6 = vector.broadcast %5 : vector<16x1xf32> to vector<16x52xf32>
    %7 = arith.subf %0, %6 : vector<16x52xf32>
    %8 = arith.mulf %7, %7 : vector<16x52xf32>
    %cst_4 = arith.constant dense<0.000000e+00> : vector<16xf32>
    %9 = vector.multi_reduction <add>, %8, %cst_4 [1] : vector<16x52xf32> to vector<16xf32>
    %10 = vector.shape_cast %9 : vector<16xf32> to vector<16x1xf32>
    %cst_5 = arith.constant 5.200000e+01 : f32
    %11 = vector.broadcast %cst_5 : f32 to vector<16x1xf32>
    %12 = arith.divf %10, %11 : vector<16x1xf32>
    %13 = vector.broadcast %5 : vector<16x1xf32> to vector<16x52xf32>
    %14 = arith.subf %0, %13 : vector<16x52xf32>
    %cst_6 = arith.constant 9.99999974E-6 : f32
    %15 = vector.broadcast %cst_6 : f32 to vector<16x1xf32>
    %16 = arith.addf %12, %15 : vector<16x1xf32>
    %17 = math.rsqrt %16 : vector<16x1xf32>
    %18 = vector.broadcast %17 : vector<16x1xf32> to vector<16x52xf32>
    %19 = arith.mulf %14, %18 : vector<16x52xf32>
    %c0_7 = arith.constant 0 : index
    %c0_8 = arith.constant 0 : index
    %20 = vector.load %arg2[%c0_7, %c0_8] : memref<1x52xf32, #tpu.memory_space<vmem>>, vector<1x52xf32>
    %21 = vector.broadcast %20 : vector<1x52xf32> to vector<16x52xf32>
    %22 = arith.mulf %19, %21 : vector<16x52xf32>
    %c0_9 = arith.constant 0 : index
    %c0_10 = arith.constant 0 : index
    %23 = vector.load %arg3[%c0_9, %c0_10] : memref<1x52xf32, #tpu.memory_space<vmem>>, vector<1x52xf32>
    %24 = vector.broadcast %23 : vector<1x52xf32> to vector<16x52xf32>
    %25 = arith.addf %22, %24 : vector<16x52xf32>
    %26 = vector.extract_strided_slice %1 {offsets = [0, 0], sizes = [16, 3], strides = [1, 1]} : vector<48x3xf32> to vector<16x3xf32>
    %27 = vector.extract_strided_slice %1 {offsets = [16, 0], sizes = [16, 3], strides = [1, 1]} : vector<48x3xf32> to vector<16x3xf32>
    %28 = vector.extract_strided_slice %1 {offsets = [32, 0], sizes = [16, 3], strides = [1, 1]} : vector<48x3xf32> to vector<16x3xf32>
    %29 = arith.mulf %26, %26 : vector<16x3xf32>
    %30 = arith.mulf %27, %27 : vector<16x3xf32>
    %31 = arith.addf %29, %30 : vector<16x3xf32>
    %32 = arith.mulf %28, %28 : vector<16x3xf32>
    %33 = arith.addf %31, %32 : vector<16x3xf32>
    %cst_11 = arith.constant 9.99999993E-9 : f32
    %34 = vector.broadcast %cst_11 : f32 to vector<16x3xf32>
    %35 = arith.maximumf %33, %34 : vector<16x3xf32>
    %cst_12 = arith.constant dense<0.000000e+00> : vector<16xf32>
    %36 = vector.multi_reduction <add>, %35, %cst_12 [1] : vector<16x3xf32> to vector<16xf32>
    %37 = vector.shape_cast %36 : vector<16xf32> to vector<16x1xf32>
    %cst_13 = arith.constant 3.000000e+00 : f32
    %38 = vector.broadcast %cst_13 : f32 to vector<16x1xf32>
    %39 = arith.divf %37, %38 : vector<16x1xf32>
    %40 = math.rsqrt %39 : vector<16x1xf32>
    %41 = tpu.concatenate %40, %40, %40 in 0 : vector<16x1xf32>, vector<16x1xf32>, vector<16x1xf32> -> vector<48x1xf32>
    %42 = vector.broadcast %41 : vector<48x1xf32> to vector<48x3xf32>
    %43 = arith.mulf %1, %42 : vector<48x3xf32>
    %c0_14 = arith.constant 0 : index
    %c0_15 = arith.constant 0 : index
    %44 = vector.load %arg4[%c0_14, %c0_15] : memref<3x4xf32, #tpu.memory_space<vmem>>, vector<3x4xf32>
    %cst_16 = arith.constant dense<0.000000e+00> : vector<48x4xf32>
    %45 = tpu.matmul %43, %44, %cst_16 {dimension_numbers = #tpu.dot_dimension_numbers<[1], [0], [0], [1], [0, 0, 1, 1], [], []>} : vector<48x3xf32>, vector<3x4xf32>, vector<48x4xf32> -> vector<48x4xf32>
    %46 = vector.extract_strided_slice %45 {offsets = [0, 0], sizes = [16, 4], strides = [1, 1]} : vector<48x4xf32> to vector<16x4xf32>
    %47 = vector.extract_strided_slice %45 {offsets = [16, 0], sizes = [16, 4], strides = [1, 1]} : vector<48x4xf32> to vector<16x4xf32>
    %48 = vector.extract_strided_slice %45 {offsets = [32, 0], sizes = [16, 4], strides = [1, 1]} : vector<48x4xf32> to vector<16x4xf32>
    %49 = arith.mulf %46, %46 : vector<16x4xf32>
    %50 = arith.mulf %47, %47 : vector<16x4xf32>
    %51 = arith.addf %49, %50 : vector<16x4xf32>
    %52 = arith.mulf %48, %48 : vector<16x4xf32>
    %53 = arith.addf %51, %52 : vector<16x4xf32>
    %cst_17 = arith.constant 9.99999993E-9 : f32
    %54 = vector.broadcast %cst_17 : f32 to vector<16x4xf32>
    %55 = arith.maximumf %53, %54 : vector<16x4xf32>
    %56 = math.sqrt %55 : vector<16x4xf32>
    %c0_18 = arith.constant 0 : index
    %c0_19 = arith.constant 0 : index
    %57 = vector.load %arg5[%c0_18, %c0_19] : memref<52x32xf32, #tpu.memory_space<vmem>>, vector<52x32xf32>
    %cst_20 = arith.constant dense<0.000000e+00> : vector<16x32xf32>
    %58 = tpu.matmul %25, %57, %cst_20 {dimension_numbers = #tpu.dot_dimension_numbers<[1], [0], [0], [1], [0, 0, 1, 1], [], []>} : vector<16x52xf32>, vector<52x32xf32>, vector<16x32xf32> -> vector<16x32xf32>
    %c0_21 = arith.constant 0 : index
    %c0_22 = arith.constant 0 : index
    %59 = vector.load %arg6[%c0_21, %c0_22] : memref<4x32xf32, #tpu.memory_space<vmem>>, vector<4x32xf32>
    %cst_23 = arith.constant dense<0.000000e+00> : vector<16x32xf32>
    %60 = tpu.matmul %56, %59, %cst_23 {dimension_numbers = #tpu.dot_dimension_numbers<[1], [0], [0], [1], [0, 0, 1, 1], [], []>} : vector<16x4xf32>, vector<4x32xf32>, vector<16x32xf32> -> vector<16x32xf32>
    %61 = arith.addf %58, %60 : vector<16x32xf32>
    %c0_24 = arith.constant 0 : index
    %c0_25 = arith.constant 0 : index
    %62 = vector.load %arg7[%c0_24, %c0_25] : memref<1x32xf32, #tpu.memory_space<vmem>>, vector<1x32xf32>
    %63 = vector.broadcast %62 : vector<1x32xf32> to vector<16x32xf32>
    %64 = arith.addf %61, %63 : vector<16x32xf32>
    %c0_26 = arith.constant 0 : index
    %c0_27 = arith.constant 0 : index
    %65 = vector.load %arg9[%c0_26, %c0_27] : memref<16x32xf32, #tpu.memory_space<vmem>>, vector<16x32xf32>
    tpu.vector_store %arg9[%c0_26, %c0_27], %64 {strides = array<i32>} : memref<16x32xf32, #tpu.memory_space<vmem>>, vector<16x32xf32>,
    %c0_28 = arith.constant 0 : index
    %c0_29 = arith.constant 0 : index
    %66 = vector.load %arg8[%c0_28, %c0_29] : memref<4x4xf32, #tpu.memory_space<vmem>>, vector<4x4xf32>
    %cst_30 = arith.constant dense<0.000000e+00> : vector<48x4xf32>
    %67 = tpu.matmul %45, %66, %cst_30 {dimension_numbers = #tpu.dot_dimension_numbers<[1], [0], [0], [1], [0, 0, 1, 1], [], []>} : vector<48x4xf32>, vector<4x4xf32>, vector<48x4xf32> -> vector<48x4xf32>
    %c0_31 = arith.constant 0 : index
    %c0_32 = arith.constant 0 : index
    %68 = vector.load %arg10[%c0_31, %c0_32] : memref<48x4xf32, #tpu.memory_space<vmem>>, vector<48x4xf32>
    tpu.vector_store %arg10[%c0_31, %c0_32], %67 {strides = array<i32>} : memref<48x4xf32, #tpu.memory_space<vmem>>, vector<48x4xf32>,
    return
  }
}

module attributes {stable_mosaic.version = 11 : i64} {
  func.func @_gvp_fused_kernel(%arg0: memref<32x16xf32, #tpu.memory_space<vmem>>, %arg1: memref<96x2xf32, #tpu.memory_space<vmem>>, %arg2: memref<1x16xf32, #tpu.memory_space<vmem>>, %arg3: memref<1x16xf32, #tpu.memory_space<vmem>>, %arg4: memref<2x2xf32, #tpu.memory_space<vmem>>, %arg5: memref<16x16xf32, #tpu.memory_space<vmem>>, %arg6: memref<2x16xf32, #tpu.memory_space<vmem>>, %arg7: memref<1x16xf32, #tpu.memory_space<vmem>>, %arg8: memref<2x2xf32, #tpu.memory_space<vmem>>, %arg9: memref<32x16xf32, #tpu.memory_space<vmem>>, %arg10: memref<96x2xf32, #tpu.memory_space<vmem>>) attributes {dimension_semantics = [], scalar_prefetch = 0 : i64, scratch_operands = 0 : i64, tpu.core_type = #tpu.core_type<tc>} {
    %c0 = arith.constant 0 : index
    %c0_0 = arith.constant 0 : index
    %0 = vector.load %arg0[%c0, %c0_0] : memref<32x16xf32, #tpu.memory_space<vmem>>, vector<32x16xf32>
    %c0_1 = arith.constant 0 : index
    %c0_2 = arith.constant 0 : index
    %1 = vector.load %arg1[%c0_1, %c0_2] : memref<96x2xf32, #tpu.memory_space<vmem>>, vector<96x2xf32>
    %cst = arith.constant dense<0.000000e+00> : vector<32xf32>
    %2 = vector.multi_reduction <add>, %0, %cst [1] : vector<32x16xf32> to vector<32xf32>
    %3 = vector.shape_cast %2 : vector<32xf32> to vector<32x1xf32>
    %cst_3 = arith.constant 1.600000e+01 : f32
    %4 = vector.broadcast %cst_3 : f32 to vector<32x1xf32>
    %5 = arith.divf %3, %4 : vector<32x1xf32>
    %6 = vector.broadcast %5 : vector<32x1xf32> to vector<32x16xf32>
    %7 = arith.subf %0, %6 : vector<32x16xf32>
    %8 = arith.mulf %7, %7 : vector<32x16xf32>
    %cst_4 = arith.constant dense<0.000000e+00> : vector<32xf32>
    %9 = vector.multi_reduction <add>, %8, %cst_4 [1] : vector<32x16xf32> to vector<32xf32>
    %10 = vector.shape_cast %9 : vector<32xf32> to vector<32x1xf32>
    %cst_5 = arith.constant 1.600000e+01 : f32
    %11 = vector.broadcast %cst_5 : f32 to vector<32x1xf32>
    %12 = arith.divf %10, %11 : vector<32x1xf32>
    %13 = vector.broadcast %5 : vector<32x1xf32> to vector<32x16xf32>
    %14 = arith.subf %0, %13 : vector<32x16xf32>
    %cst_6 = arith.constant 9.99999974E-6 : f32
    %15 = vector.broadcast %cst_6 : f32 to vector<32x1xf32>
    %16 = arith.addf %12, %15 : vector<32x1xf32>
    %17 = math.rsqrt %16 : vector<32x1xf32>
    %18 = vector.broadcast %17 : vector<32x1xf32> to vector<32x16xf32>
    %19 = arith.mulf %14, %18 : vector<32x16xf32>
    %c0_7 = arith.constant 0 : index
    %c0_8 = arith.constant 0 : index
    %20 = vector.load %arg2[%c0_7, %c0_8] : memref<1x16xf32, #tpu.memory_space<vmem>>, vector<1x16xf32>
    %21 = vector.broadcast %20 : vector<1x16xf32> to vector<32x16xf32>
    %22 = arith.mulf %19, %21 : vector<32x16xf32>
    %c0_9 = arith.constant 0 : index
    %c0_10 = arith.constant 0 : index
    %23 = vector.load %arg3[%c0_9, %c0_10] : memref<1x16xf32, #tpu.memory_space<vmem>>, vector<1x16xf32>
    %24 = vector.broadcast %23 : vector<1x16xf32> to vector<32x16xf32>
    %25 = arith.addf %22, %24 : vector<32x16xf32>
    %26 = vector.extract_strided_slice %1 {offsets = [0, 0], sizes = [32, 2], strides = [1, 1]} : vector<96x2xf32> to vector<32x2xf32>
    %27 = vector.extract_strided_slice %1 {offsets = [32, 0], sizes = [32, 2], strides = [1, 1]} : vector<96x2xf32> to vector<32x2xf32>
    %28 = vector.extract_strided_slice %1 {offsets = [64, 0], sizes = [32, 2], strides = [1, 1]} : vector<96x2xf32> to vector<32x2xf32>
    %29 = arith.mulf %26, %26 : vector<32x2xf32>
    %30 = arith.mulf %27, %27 : vector<32x2xf32>
    %31 = arith.addf %29, %30 : vector<32x2xf32>
    %32 = arith.mulf %28, %28 : vector<32x2xf32>
    %33 = arith.addf %31, %32 : vector<32x2xf32>
    %cst_11 = arith.constant 9.99999993E-9 : f32
    %34 = vector.broadcast %cst_11 : f32 to vector<32x2xf32>
    %35 = arith.maximumf %33, %34 : vector<32x2xf32>
    %cst_12 = arith.constant dense<0.000000e+00> : vector<32xf32>
    %36 = vector.multi_reduction <add>, %35, %cst_12 [1] : vector<32x2xf32> to vector<32xf32>
    %37 = vector.shape_cast %36 : vector<32xf32> to vector<32x1xf32>
    %cst_13 = arith.constant 2.000000e+00 : f32
    %38 = vector.broadcast %cst_13 : f32 to vector<32x1xf32>
    %39 = arith.divf %37, %38 : vector<32x1xf32>
    %40 = math.rsqrt %39 : vector<32x1xf32>
    %41 = tpu.concatenate %40, %40, %40 in 0 : vector<32x1xf32>, vector<32x1xf32>, vector<32x1xf32> -> vector<96x1xf32>
    %42 = vector.broadcast %41 : vector<96x1xf32> to vector<96x2xf32>
    %43 = arith.mulf %1, %42 : vector<96x2xf32>
    %c0_14 = arith.constant 0 : index
    %c0_15 = arith.constant 0 : index
    %44 = vector.load %arg4[%c0_14, %c0_15] : memref<2x2xf32, #tpu.memory_space<vmem>>, vector<2x2xf32>
    %cst_16 = arith.constant dense<0.000000e+00> : vector<96x2xf32>
    %45 = tpu.matmul %43, %44, %cst_16 {dimension_numbers = #tpu.dot_dimension_numbers<[1], [0], [0], [1], [0, 0, 1, 1], [], []>} : vector<96x2xf32>, vector<2x2xf32>, vector<96x2xf32> -> vector<96x2xf32>
    %46 = vector.extract_strided_slice %45 {offsets = [0, 0], sizes = [32, 2], strides = [1, 1]} : vector<96x2xf32> to vector<32x2xf32>
    %47 = vector.extract_strided_slice %45 {offsets = [32, 0], sizes = [32, 2], strides = [1, 1]} : vector<96x2xf32> to vector<32x2xf32>
    %48 = vector.extract_strided_slice %45 {offsets = [64, 0], sizes = [32, 2], strides = [1, 1]} : vector<96x2xf32> to vector<32x2xf32>
    %49 = arith.mulf %46, %46 : vector<32x2xf32>
    %50 = arith.mulf %47, %47 : vector<32x2xf32>
    %51 = arith.addf %49, %50 : vector<32x2xf32>
    %52 = arith.mulf %48, %48 : vector<32x2xf32>
    %53 = arith.addf %51, %52 : vector<32x2xf32>
    %cst_17 = arith.constant 9.99999993E-9 : f32
    %54 = vector.broadcast %cst_17 : f32 to vector<32x2xf32>
    %55 = arith.maximumf %53, %54 : vector<32x2xf32>
    %56 = math.sqrt %55 : vector<32x2xf32>
    %c0_18 = arith.constant 0 : index
    %c0_19 = arith.constant 0 : index
    %57 = vector.load %arg5[%c0_18, %c0_19] : memref<16x16xf32, #tpu.memory_space<vmem>>, vector<16x16xf32>
    %cst_20 = arith.constant dense<0.000000e+00> : vector<32x16xf32>
    %58 = tpu.matmul %25, %57, %cst_20 {dimension_numbers = #tpu.dot_dimension_numbers<[1], [0], [0], [1], [0, 0, 1, 1], [], []>} : vector<32x16xf32>, vector<16x16xf32>, vector<32x16xf32> -> vector<32x16xf32>
    %c0_21 = arith.constant 0 : index
    %c0_22 = arith.constant 0 : index
    %59 = vector.load %arg6[%c0_21, %c0_22] : memref<2x16xf32, #tpu.memory_space<vmem>>, vector<2x16xf32>
    %cst_23 = arith.constant dense<0.000000e+00> : vector<32x16xf32>
    %60 = tpu.matmul %56, %59, %cst_23 {dimension_numbers = #tpu.dot_dimension_numbers<[1], [0], [0], [1], [0, 0, 1, 1], [], []>} : vector<32x2xf32>, vector<2x16xf32>, vector<32x16xf32> -> vector<32x16xf32>
    %61 = arith.addf %58, %60 : vector<32x16xf32>
    %c0_24 = arith.constant 0 : index
    %c0_25 = arith.constant 0 : index
    %62 = vector.load %arg7[%c0_24, %c0_25] : memref<1x16xf32, #tpu.memory_space<vmem>>, vector<1x16xf32>
    %63 = vector.broadcast %62 : vector<1x16xf32> to vector<32x16xf32>
    %64 = arith.addf %61, %63 : vector<32x16xf32>
    %c0_26 = arith.constant 0 : index
    %c0_27 = arith.constant 0 : index
    %65 = vector.load %arg9[%c0_26, %c0_27] : memref<32x16xf32, #tpu.memory_space<vmem>>, vector<32x16xf32>
    tpu.vector_store %arg9[%c0_26, %c0_27], %64 {strides = array<i32>} : memref<32x16xf32, #tpu.memory_space<vmem>>, vector<32x16xf32>,
    %c0_28 = arith.constant 0 : index
    %c0_29 = arith.constant 0 : index
    %66 = vector.load %arg8[%c0_28, %c0_29] : memref<2x2xf32, #tpu.memory_space<vmem>>, vector<2x2xf32>
    %cst_30 = arith.constant dense<0.000000e+00> : vector<96x2xf32>
    %67 = tpu.matmul %45, %66, %cst_30 {dimension_numbers = #tpu.dot_dimension_numbers<[1], [0], [0], [1], [0, 0, 1, 1], [], []>} : vector<96x2xf32>, vector<2x2xf32>, vector<96x2xf32> -> vector<96x2xf32>
    %c0_31 = arith.constant 0 : index
    %c0_32 = arith.constant 0 : index
    %68 = vector.load %arg10[%c0_31, %c0_32] : memref<96x2xf32, #tpu.memory_space<vmem>>, vector<96x2xf32>
    tpu.vector_store %arg10[%c0_31, %c0_32], %67 {strides = array<i32>} : memref<96x2xf32, #tpu.memory_space<vmem>>, vector<96x2xf32>,
    return
  }
}

module attributes {stable_mosaic.version = 11 : i64} {
  func.func @_gvp_fused_kernel(%arg0: memref<32x80xf32, #tpu.memory_space<vmem>>, %arg1: memref<96x10xf32, #tpu.memory_space<vmem>>, %arg2: memref<10x10xf32, #tpu.memory_space<vmem>>, %arg3: memref<80x32xf32, #tpu.memory_space<vmem>>, %arg4: memref<10x32xf32, #tpu.memory_space<vmem>>, %arg5: memref<1x32xf32, #tpu.memory_space<vmem>>, %arg6: memref<10x4xf32, #tpu.memory_space<vmem>>, %arg7: memref<32x32xf32, #tpu.memory_space<vmem>>, %arg8: memref<96x4xf32, #tpu.memory_space<vmem>>) attributes {dimension_semantics = [], scalar_prefetch = 0 : i64, scratch_operands = 0 : i64, tpu.core_type = #tpu.core_type<tc>} {
    %c0 = arith.constant 0 : index
    %c0_0 = arith.constant 0 : index
    %0 = vector.load %arg0[%c0, %c0_0] : memref<32x80xf32, #tpu.memory_space<vmem>>, vector<32x80xf32>
    %c0_1 = arith.constant 0 : index
    %c0_2 = arith.constant 0 : index
    %1 = vector.load %arg1[%c0_1, %c0_2] : memref<96x10xf32, #tpu.memory_space<vmem>>, vector<96x10xf32>
    %c0_3 = arith.constant 0 : index
    %c0_4 = arith.constant 0 : index
    %2 = vector.load %arg2[%c0_3, %c0_4] : memref<10x10xf32, #tpu.memory_space<vmem>>, vector<10x10xf32>
    %cst = arith.constant dense<0.000000e+00> : vector<96x10xf32>
    %3 = tpu.matmul %1, %2, %cst {dimension_numbers = #tpu.dot_dimension_numbers<[1], [0], [0], [1], [0, 0, 1, 1], [], []>} : vector<96x10xf32>, vector<10x10xf32>, vector<96x10xf32> -> vector<96x10xf32>
    %4 = vector.extract_strided_slice %3 {offsets = [0, 0], sizes = [32, 10], strides = [1, 1]} : vector<96x10xf32> to vector<32x10xf32>
    %5 = vector.extract_strided_slice %3 {offsets = [32, 0], sizes = [32, 10], strides = [1, 1]} : vector<96x10xf32> to vector<32x10xf32>
    %6 = vector.extract_strided_slice %3 {offsets = [64, 0], sizes = [32, 10], strides = [1, 1]} : vector<96x10xf32> to vector<32x10xf32>
    %7 = arith.mulf %4, %4 : vector<32x10xf32>
    %8 = arith.mulf %5, %5 : vector<32x10xf32>
    %9 = arith.addf %7, %8 : vector<32x10xf32>
    %10 = arith.mulf %6, %6 : vector<32x10xf32>
    %11 = arith.addf %9, %10 : vector<32x10xf32>
    %cst_5 = arith.constant 9.99999993E-9 : f32
    %12 = vector.broadcast %cst_5 : f32 to vector<32x10xf32>
    %13 = arith.maximumf %11, %12 : vector<32x10xf32>
    %14 = math.sqrt %13 : vector<32x10xf32>
    %c0_6 = arith.constant 0 : index
    %c0_7 = arith.constant 0 : index
    %15 = vector.load %arg3[%c0_6, %c0_7] : memref<80x32xf32, #tpu.memory_space<vmem>>, vector<80x32xf32>
    %cst_8 = arith.constant dense<0.000000e+00> : vector<32x32xf32>
    %16 = tpu.matmul %0, %15, %cst_8 {dimension_numbers = #tpu.dot_dimension_numbers<[1], [0], [0], [1], [0, 0, 1, 1], [], []>} : vector<32x80xf32>, vector<80x32xf32>, vector<32x32xf32> -> vector<32x32xf32>
    %c0_9 = arith.constant 0 : index
    %c0_10 = arith.constant 0 : index
    %17 = vector.load %arg4[%c0_9, %c0_10] : memref<10x32xf32, #tpu.memory_space<vmem>>, vector<10x32xf32>
    %cst_11 = arith.constant dense<0.000000e+00> : vector<32x32xf32>
    %18 = tpu.matmul %14, %17, %cst_11 {dimension_numbers = #tpu.dot_dimension_numbers<[1], [0], [0], [1], [0, 0, 1, 1], [], []>} : vector<32x10xf32>, vector<10x32xf32>, vector<32x32xf32> -> vector<32x32xf32>
    %19 = arith.addf %16, %18 : vector<32x32xf32>
    %c0_12 = arith.constant 0 : index
    %c0_13 = arith.constant 0 : index
    %20 = vector.load %arg5[%c0_12, %c0_13] : memref<1x32xf32, #tpu.memory_space<vmem>>, vector<1x32xf32>
    %21 = vector.broadcast %20 : vector<1x32xf32> to vector<32x32xf32>
    %22 = arith.addf %19, %21 : vector<32x32xf32>
    %cst_14 = arith.constant 0.000000e+00 : f32
    %23 = vector.broadcast %cst_14 : f32 to vector<32x32xf32>
    %24 = arith.maximumf %22, %23 : vector<32x32xf32>
    %c0_15 = arith.constant 0 : index
    %c0_16 = arith.constant 0 : index
    %25 = vector.load %arg7[%c0_15, %c0_16] : memref<32x32xf32, #tpu.memory_space<vmem>>, vector<32x32xf32>
    tpu.vector_store %arg7[%c0_15, %c0_16], %24 {strides = array<i32>} : memref<32x32xf32, #tpu.memory_space<vmem>>, vector<32x32xf32>,
    %c0_17 = arith.constant 0 : index
    %c0_18 = arith.constant 0 : index
    %26 = vector.load %arg6[%c0_17, %c0_18] : memref<10x4xf32, #tpu.memory_space<vmem>>, vector<10x4xf32>
    %cst_19 = arith.constant dense<0.000000e+00> : vector<96x4xf32>
    %27 = tpu.matmul %3, %26, %cst_19 {dimension_numbers = #tpu.dot_dimension_numbers<[1], [0], [0], [1], [0, 0, 1, 1], [], []>} : vector<96x10xf32>, vector<10x4xf32>, vector<96x4xf32> -> vector<96x4xf32>
    %28 = vector.extract_strided_slice %27 {offsets = [0, 0], sizes = [32, 4], strides = [1, 1]} : vector<96x4xf32> to vector<32x4xf32>
    %29 = vector.extract_strided_slice %27 {offsets = [32, 0], sizes = [32, 4], strides = [1, 1]} : vector<96x4xf32> to vector<32x4xf32>
    %30 = vector.extract_strided_slice %27 {offsets = [64, 0], sizes = [32, 4], strides = [1, 1]} : vector<96x4xf32> to vector<32x4xf32>
    %31 = arith.mulf %28, %28 : vector<32x4xf32>
    %32 = arith.mulf %29, %29 : vector<32x4xf32>
    %33 = arith.addf %31, %32 : vector<32x4xf32>
    %34 = arith.mulf %30, %30 : vector<32x4xf32>
    %35 = arith.addf %33, %34 : vector<32x4xf32>
    %cst_20 = arith.constant 9.99999993E-9 : f32
    %36 = vector.broadcast %cst_20 : f32 to vector<32x4xf32>
    %37 = arith.maximumf %35, %36 : vector<32x4xf32>
    %38 = math.sqrt %37 : vector<32x4xf32>
    %39 = arith.negf %38 : vector<32x4xf32>
    %40 = math.exp %39 : vector<32x4xf32>
    %cst_21 = arith.constant 1.000000e+00 : f32
    %41 = vector.broadcast %cst_21 : f32 to vector<32x4xf32>
    %42 = arith.addf %41, %40 : vector<32x4xf32>
    %43 = arith.divf %41, %42 : vector<32x4xf32>
    %44 = tpu.concatenate %43, %43, %43 in 0 : vector<32x4xf32>, vector<32x4xf32>, vector<32x4xf32> -> vector<96x4xf32>
    %45 = arith.mulf %27, %44 : vector<96x4xf32>
    %c0_22 = arith.constant 0 : index
    %c0_23 = arith.constant 0 : index
    %46 = vector.load %arg8[%c0_22, %c0_23] : memref<96x4xf32, #tpu.memory_space<vmem>>, vector<96x4xf32>
    tpu.vector_store %arg8[%c0_22, %c0_23], %45 {strides = array<i32>} : memref<96x4xf32, #tpu.memory_space<vmem>>, vector<96x4xf32>,
    return
  }
}

module attributes {stable_mosaic.version = 11 : i64} {
  func.func @_gvp_fused_kernel(%arg0: memref<32x32xf32, #tpu.memory_space<vmem>>, %arg1: memref<96x4xf32, #tpu.memory_space<vmem>>, %arg2: memref<4x4xf32, #tpu.memory_space<vmem>>, %arg3: memref<32x32xf32, #tpu.memory_space<vmem>>, %arg4: memref<4x32xf32, #tpu.memory_space<vmem>>, %arg5: memref<1x32xf32, #tpu.memory_space<vmem>>, %arg6: memref<4x4xf32, #tpu.memory_space<vmem>>, %arg7: memref<32x32xf32, #tpu.memory_space<vmem>>, %arg8: memref<96x4xf32, #tpu.memory_space<vmem>>) attributes {dimension_semantics = [], scalar_prefetch = 0 : i64, scratch_operands = 0 : i64, tpu.core_type = #tpu.core_type<tc>} {
    %c0 = arith.constant 0 : index
    %c0_0 = arith.constant 0 : index
    %0 = vector.load %arg0[%c0, %c0_0] : memref<32x32xf32, #tpu.memory_space<vmem>>, vector<32x32xf32>
    %c0_1 = arith.constant 0 : index
    %c0_2 = arith.constant 0 : index
    %1 = vector.load %arg1[%c0_1, %c0_2] : memref<96x4xf32, #tpu.memory_space<vmem>>, vector<96x4xf32>
    %c0_3 = arith.constant 0 : index
    %c0_4 = arith.constant 0 : index
    %2 = vector.load %arg2[%c0_3, %c0_4] : memref<4x4xf32, #tpu.memory_space<vmem>>, vector<4x4xf32>
    %cst = arith.constant dense<0.000000e+00> : vector<96x4xf32>
    %3 = tpu.matmul %1, %2, %cst {dimension_numbers = #tpu.dot_dimension_numbers<[1], [0], [0], [1], [0, 0, 1, 1], [], []>} : vector<96x4xf32>, vector<4x4xf32>, vector<96x4xf32> -> vector<96x4xf32>
    %4 = vector.extract_strided_slice %3 {offsets = [0, 0], sizes = [32, 4], strides = [1, 1]} : vector<96x4xf32> to vector<32x4xf32>
    %5 = vector.extract_strided_slice %3 {offsets = [32, 0], sizes = [32, 4], strides = [1, 1]} : vector<96x4xf32> to vector<32x4xf32>
    %6 = vector.extract_strided_slice %3 {offsets = [64, 0], sizes = [32, 4], strides = [1, 1]} : vector<96x4xf32> to vector<32x4xf32>
    %7 = arith.mulf %4, %4 : vector<32x4xf32>
    %8 = arith.mulf %5, %5 : vector<32x4xf32>
    %9 = arith.addf %7, %8 : vector<32x4xf32>
    %10 = arith.mulf %6, %6 : vector<32x4xf32>
    %11 = arith.addf %9, %10 : vector<32x4xf32>
    %cst_5 = arith.constant 9.99999993E-9 : f32
    %12 = vector.broadcast %cst_5 : f32 to vector<32x4xf32>
    %13 = arith.maximumf %11, %12 : vector<32x4xf32>
    %14 = math.sqrt %13 : vector<32x4xf32>
    %c0_6 = arith.constant 0 : index
    %c0_7 = arith.constant 0 : index
    %15 = vector.load %arg3[%c0_6, %c0_7] : memref<32x32xf32, #tpu.memory_space<vmem>>, vector<32x32xf32>
    %cst_8 = arith.constant dense<0.000000e+00> : vector<32x32xf32>
    %16 = tpu.matmul %0, %15, %cst_8 {dimension_numbers = #tpu.dot_dimension_numbers<[1], [0], [0], [1], [0, 0, 1, 1], [], []>} : vector<32x32xf32>, vector<32x32xf32>, vector<32x32xf32> -> vector<32x32xf32>
    %c0_9 = arith.constant 0 : index
    %c0_10 = arith.constant 0 : index
    %17 = vector.load %arg4[%c0_9, %c0_10] : memref<4x32xf32, #tpu.memory_space<vmem>>, vector<4x32xf32>
    %cst_11 = arith.constant dense<0.000000e+00> : vector<32x32xf32>
    %18 = tpu.matmul %14, %17, %cst_11 {dimension_numbers = #tpu.dot_dimension_numbers<[1], [0], [0], [1], [0, 0, 1, 1], [], []>} : vector<32x4xf32>, vector<4x32xf32>, vector<32x32xf32> -> vector<32x32xf32>
    %19 = arith.addf %16, %18 : vector<32x32xf32>
    %c0_12 = arith.constant 0 : index
    %c0_13 = arith.constant 0 : index
    %20 = vector.load %arg5[%c0_12, %c0_13] : memref<1x32xf32, #tpu.memory_space<vmem>>, vector<1x32xf32>
    %21 = vector.broadcast %20 : vector<1x32xf32> to vector<32x32xf32>
    %22 = arith.addf %19, %21 : vector<32x32xf32>
    %cst_14 = arith.constant 0.000000e+00 : f32
    %23 = vector.broadcast %cst_14 : f32 to vector<32x32xf32>
    %24 = arith.maximumf %22, %23 : vector<32x32xf32>
    %c0_15 = arith.constant 0 : index
    %c0_16 = arith.constant 0 : index
    %25 = vector.load %arg7[%c0_15, %c0_16] : memref<32x32xf32, #tpu.memory_space<vmem>>, vector<32x32xf32>
    tpu.vector_store %arg7[%c0_15, %c0_16], %24 {strides = array<i32>} : memref<32x32xf32, #tpu.memory_space<vmem>>, vector<32x32xf32>,
    %c0_17 = arith.constant 0 : index
    %c0_18 = arith.constant 0 : index
    %26 = vector.load %arg6[%c0_17, %c0_18] : memref<4x4xf32, #tpu.memory_space<vmem>>, vector<4x4xf32>
    %cst_19 = arith.constant dense<0.000000e+00> : vector<96x4xf32>
    %27 = tpu.matmul %3, %26, %cst_19 {dimension_numbers = #tpu.dot_dimension_numbers<[1], [0], [0], [1], [0, 0, 1, 1], [], []>} : vector<96x4xf32>, vector<4x4xf32>, vector<96x4xf32> -> vector<96x4xf32>
    %28 = vector.extract_strided_slice %27 {offsets = [0, 0], sizes = [32, 4], strides = [1, 1]} : vector<96x4xf32> to vector<32x4xf32>
    %29 = vector.extract_strided_slice %27 {offsets = [32, 0], sizes = [32, 4], strides = [1, 1]} : vector<96x4xf32> to vector<32x4xf32>
    %30 = vector.extract_strided_slice %27 {offsets = [64, 0], sizes = [32, 4], strides = [1, 1]} : vector<96x4xf32> to vector<32x4xf32>
    %31 = arith.mulf %28, %28 : vector<32x4xf32>
    %32 = arith.mulf %29, %29 : vector<32x4xf32>
    %33 = arith.addf %31, %32 : vector<32x4xf32>
    %34 = arith.mulf %30, %30 : vector<32x4xf32>
    %35 = arith.addf %33, %34 : vector<32x4xf32>
    %cst_20 = arith.constant 9.99999993E-9 : f32
    %36 = vector.broadcast %cst_20 : f32 to vector<32x4xf32>
    %37 = arith.maximumf %35, %36 : vector<32x4xf32>
    %38 = math.sqrt %37 : vector<32x4xf32>
    %39 = arith.negf %38 : vector<32x4xf32>
    %40 = math.exp %39 : vector<32x4xf32>
    %cst_21 = arith.constant 1.000000e+00 : f32
    %41 = vector.broadcast %cst_21 : f32 to vector<32x4xf32>
    %42 = arith.addf %41, %40 : vector<32x4xf32>
    %43 = arith.divf %41, %42 : vector<32x4xf32>
    %44 = tpu.concatenate %43, %43, %43 in 0 : vector<32x4xf32>, vector<32x4xf32>, vector<32x4xf32> -> vector<96x4xf32>
    %45 = arith.mulf %27, %44 : vector<96x4xf32>
    %c0_22 = arith.constant 0 : index
    %c0_23 = arith.constant 0 : index
    %46 = vector.load %arg8[%c0_22, %c0_23] : memref<96x4xf32, #tpu.memory_space<vmem>>, vector<96x4xf32>
    tpu.vector_store %arg8[%c0_22, %c0_23], %45 {strides = array<i32>} : memref<96x4xf32, #tpu.memory_space<vmem>>, vector<96x4xf32>,
    return
  }
}

module attributes {stable_mosaic.version = 11 : i64} {
  func.func @_gvp_fused_kernel(%arg0: memref<32x32xf32, #tpu.memory_space<vmem>>, %arg1: memref<96x4xf32, #tpu.memory_space<vmem>>, %arg2: memref<4x4xf32, #tpu.memory_space<vmem>>, %arg3: memref<32x32xf32, #tpu.memory_space<vmem>>, %arg4: memref<4x32xf32, #tpu.memory_space<vmem>>, %arg5: memref<1x32xf32, #tpu.memory_space<vmem>>, %arg6: memref<4x4xf32, #tpu.memory_space<vmem>>, %arg7: memref<32x32xf32, #tpu.memory_space<vmem>>, %arg8: memref<96x4xf32, #tpu.memory_space<vmem>>) attributes {dimension_semantics = [], scalar_prefetch = 0 : i64, scratch_operands = 0 : i64, tpu.core_type = #tpu.core_type<tc>} {
    %c0 = arith.constant 0 : index
    %c0_0 = arith.constant 0 : index
    %0 = vector.load %arg0[%c0, %c0_0] : memref<32x32xf32, #tpu.memory_space<vmem>>, vector<32x32xf32>
    %c0_1 = arith.constant 0 : index
    %c0_2 = arith.constant 0 : index
    %1 = vector.load %arg1[%c0_1, %c0_2] : memref<96x4xf32, #tpu.memory_space<vmem>>, vector<96x4xf32>
    %c0_3 = arith.constant 0 : index
    %c0_4 = arith.constant 0 : index
    %2 = vector.load %arg2[%c0_3, %c0_4] : memref<4x4xf32, #tpu.memory_space<vmem>>, vector<4x4xf32>
    %cst = arith.constant dense<0.000000e+00> : vector<96x4xf32>
    %3 = tpu.matmul %1, %2, %cst {dimension_numbers = #tpu.dot_dimension_numbers<[1], [0], [0], [1], [0, 0, 1, 1], [], []>} : vector<96x4xf32>, vector<4x4xf32>, vector<96x4xf32> -> vector<96x4xf32>
    %4 = vector.extract_strided_slice %3 {offsets = [0, 0], sizes = [32, 4], strides = [1, 1]} : vector<96x4xf32> to vector<32x4xf32>
    %5 = vector.extract_strided_slice %3 {offsets = [32, 0], sizes = [32, 4], strides = [1, 1]} : vector<96x4xf32> to vector<32x4xf32>
    %6 = vector.extract_strided_slice %3 {offsets = [64, 0], sizes = [32, 4], strides = [1, 1]} : vector<96x4xf32> to vector<32x4xf32>
    %7 = arith.mulf %4, %4 : vector<32x4xf32>
    %8 = arith.mulf %5, %5 : vector<32x4xf32>
    %9 = arith.addf %7, %8 : vector<32x4xf32>
    %10 = arith.mulf %6, %6 : vector<32x4xf32>
    %11 = arith.addf %9, %10 : vector<32x4xf32>
    %cst_5 = arith.constant 9.99999993E-9 : f32
    %12 = vector.broadcast %cst_5 : f32 to vector<32x4xf32>
    %13 = arith.maximumf %11, %12 : vector<32x4xf32>
    %14 = math.sqrt %13 : vector<32x4xf32>
    %c0_6 = arith.constant 0 : index
    %c0_7 = arith.constant 0 : index
    %15 = vector.load %arg3[%c0_6, %c0_7] : memref<32x32xf32, #tpu.memory_space<vmem>>, vector<32x32xf32>
    %cst_8 = arith.constant dense<0.000000e+00> : vector<32x32xf32>
    %16 = tpu.matmul %0, %15, %cst_8 {dimension_numbers = #tpu.dot_dimension_numbers<[1], [0], [0], [1], [0, 0, 1, 1], [], []>} : vector<32x32xf32>, vector<32x32xf32>, vector<32x32xf32> -> vector<32x32xf32>
    %c0_9 = arith.constant 0 : index
    %c0_10 = arith.constant 0 : index
    %17 = vector.load %arg4[%c0_9, %c0_10] : memref<4x32xf32, #tpu.memory_space<vmem>>, vector<4x32xf32>
    %cst_11 = arith.constant dense<0.000000e+00> : vector<32x32xf32>
    %18 = tpu.matmul %14, %17, %cst_11 {dimension_numbers = #tpu.dot_dimension_numbers<[1], [0], [0], [1], [0, 0, 1, 1], [], []>} : vector<32x4xf32>, vector<4x32xf32>, vector<32x32xf32> -> vector<32x32xf32>
    %19 = arith.addf %16, %18 : vector<32x32xf32>
    %c0_12 = arith.constant 0 : index
    %c0_13 = arith.constant 0 : index
    %20 = vector.load %arg5[%c0_12, %c0_13] : memref<1x32xf32, #tpu.memory_space<vmem>>, vector<1x32xf32>
    %21 = vector.broadcast %20 : vector<1x32xf32> to vector<32x32xf32>
    %22 = arith.addf %19, %21 : vector<32x32xf32>
    %c0_14 = arith.constant 0 : index
    %c0_15 = arith.constant 0 : index
    %23 = vector.load %arg7[%c0_14, %c0_15] : memref<32x32xf32, #tpu.memory_space<vmem>>, vector<32x32xf32>
    tpu.vector_store %arg7[%c0_14, %c0_15], %22 {strides = array<i32>} : memref<32x32xf32, #tpu.memory_space<vmem>>, vector<32x32xf32>,
    %c0_16 = arith.constant 0 : index
    %c0_17 = arith.constant 0 : index
    %24 = vector.load %arg6[%c0_16, %c0_17] : memref<4x4xf32, #tpu.memory_space<vmem>>, vector<4x4xf32>
    %cst_18 = arith.constant dense<0.000000e+00> : vector<96x4xf32>
    %25 = tpu.matmul %3, %24, %cst_18 {dimension_numbers = #tpu.dot_dimension_numbers<[1], [0], [0], [1], [0, 0, 1, 1], [], []>} : vector<96x4xf32>, vector<4x4xf32>, vector<96x4xf32> -> vector<96x4xf32>
    %c0_19 = arith.constant 0 : index
    %c0_20 = arith.constant 0 : index
    %26 = vector.load %arg8[%c0_19, %c0_20] : memref<96x4xf32, #tpu.memory_space<vmem>>, vector<96x4xf32>
    tpu.vector_store %arg8[%c0_19, %c0_20], %25 {strides = array<i32>} : memref<96x4xf32, #tpu.memory_space<vmem>>, vector<96x4xf32>,
    return
  }
}

module attributes {stable_mosaic.version = 11 : i64} {
  func.func @_gvp_layernorm_kernel(%arg0: memref<16x32xf32, #tpu.memory_space<vmem>>, %arg1: memref<48x4xf32, #tpu.memory_space<vmem>>, %arg2: memref<1x32xf32, #tpu.memory_space<vmem>>, %arg3: memref<1x32xf32, #tpu.memory_space<vmem>>, %arg4: memref<16x32xf32, #tpu.memory_space<vmem>>, %arg5: memref<48x4xf32, #tpu.memory_space<vmem>>) attributes {dimension_semantics = [], scalar_prefetch = 0 : i64, scratch_operands = 0 : i64, tpu.core_type = #tpu.core_type<tc>} {
    %c0 = arith.constant 0 : index
    %c0_0 = arith.constant 0 : index
    %0 = vector.load %arg0[%c0, %c0_0] : memref<16x32xf32, #tpu.memory_space<vmem>>, vector<16x32xf32>
    %cst = arith.constant dense<0.000000e+00> : vector<16xf32>
    %1 = vector.multi_reduction <add>, %0, %cst [1] : vector<16x32xf32> to vector<16xf32>
    %2 = vector.shape_cast %1 : vector<16xf32> to vector<16x1xf32>
    %cst_1 = arith.constant 3.200000e+01 : f32
    %3 = vector.broadcast %cst_1 : f32 to vector<16x1xf32>
    %4 = arith.divf %2, %3 : vector<16x1xf32>
    %5 = vector.broadcast %4 : vector<16x1xf32> to vector<16x32xf32>
    %6 = arith.subf %0, %5 : vector<16x32xf32>
    %7 = arith.mulf %6, %6 : vector<16x32xf32>
    %cst_2 = arith.constant dense<0.000000e+00> : vector<16xf32>
    %8 = vector.multi_reduction <add>, %7, %cst_2 [1] : vector<16x32xf32> to vector<16xf32>
    %9 = vector.shape_cast %8 : vector<16xf32> to vector<16x1xf32>
    %cst_3 = arith.constant 3.200000e+01 : f32
    %10 = vector.broadcast %cst_3 : f32 to vector<16x1xf32>
    %11 = arith.divf %9, %10 : vector<16x1xf32>
    %12 = vector.broadcast %4 : vector<16x1xf32> to vector<16x32xf32>
    %13 = arith.subf %0, %12 : vector<16x32xf32>
    %cst_4 = arith.constant 9.99999974E-6 : f32
    %14 = vector.broadcast %cst_4 : f32 to vector<16x1xf32>
    %15 = arith.addf %11, %14 : vector<16x1xf32>
    %16 = math.rsqrt %15 : vector<16x1xf32>
    %17 = vector.broadcast %16 : vector<16x1xf32> to vector<16x32xf32>
    %18 = arith.mulf %13, %17 : vector<16x32xf32>
    %c0_5 = arith.constant 0 : index
    %c0_6 = arith.constant 0 : index
    %19 = vector.load %arg2[%c0_5, %c0_6] : memref<1x32xf32, #tpu.memory_space<vmem>>, vector<1x32xf32>
    %20 = vector.broadcast %19 : vector<1x32xf32> to vector<16x32xf32>
    %21 = arith.mulf %18, %20 : vector<16x32xf32>
    %c0_7 = arith.constant 0 : index
    %c0_8 = arith.constant 0 : index
    %22 = vector.load %arg3[%c0_7, %c0_8] : memref<1x32xf32, #tpu.memory_space<vmem>>, vector<1x32xf32>
    %23 = vector.broadcast %22 : vector<1x32xf32> to vector<16x32xf32>
    %24 = arith.addf %21, %23 : vector<16x32xf32>
    %c0_9 = arith.constant 0 : index
    %c0_10 = arith.constant 0 : index
    %25 = vector.load %arg4[%c0_9, %c0_10] : memref<16x32xf32, #tpu.memory_space<vmem>>, vector<16x32xf32>
    tpu.vector_store %arg4[%c0_9, %c0_10], %24 {strides = array<i32>} : memref<16x32xf32, #tpu.memory_space<vmem>>, vector<16x32xf32>,
    %c0_11 = arith.constant 0 : index
    %c0_12 = arith.constant 0 : index
    %26 = vector.load %arg1[%c0_11, %c0_12] : memref<48x4xf32, #tpu.memory_space<vmem>>, vector<48x4xf32>
    %27 = vector.extract_strided_slice %26 {offsets = [0, 0], sizes = [16, 4], strides = [1, 1]} : vector<48x4xf32> to vector<16x4xf32>
    %28 = vector.extract_strided_slice %26 {offsets = [16, 0], sizes = [16, 4], strides = [1, 1]} : vector<48x4xf32> to vector<16x4xf32>
    %29 = vector.extract_strided_slice %26 {offsets = [32, 0], sizes = [16, 4], strides = [1, 1]} : vector<48x4xf32> to vector<16x4xf32>
    %30 = arith.mulf %27, %27 : vector<16x4xf32>
    %31 = arith.mulf %28, %28 : vector<16x4xf32>
    %32 = arith.addf %30, %31 : vector<16x4xf32>
    %33 = arith.mulf %29, %29 : vector<16x4xf32>
    %34 = arith.addf %32, %33 : vector<16x4xf32>
    %cst_13 = arith.constant 9.99999993E-9 : f32
    %35 = vector.broadcast %cst_13 : f32 to vector<16x4xf32>
    %36 = arith.maximumf %34, %35 : vector<16x4xf32>
    %cst_14 = arith.constant dense<0.000000e+00> : vector<16xf32>
    %37 = vector.multi_reduction <add>, %36, %cst_14 [1] : vector<16x4xf32> to vector<16xf32>
    %38 = vector.shape_cast %37 : vector<16xf32> to vector<16x1xf32>
    %cst_15 = arith.constant 4.000000e+00 : f32
    %39 = vector.broadcast %cst_15 : f32 to vector<16x1xf32>
    %40 = arith.divf %38, %39 : vector<16x1xf32>
    %41 = math.rsqrt %40 : vector<16x1xf32>
    %42 = tpu.concatenate %41, %41, %41 in 0 : vector<16x1xf32>, vector<16x1xf32>, vector<16x1xf32> -> vector<48x1xf32>
    %43 = vector.broadcast %42 : vector<48x1xf32> to vector<48x4xf32>
    %44 = arith.mulf %26, %43 : vector<48x4xf32>
    %c0_16 = arith.constant 0 : index
    %c0_17 = arith.constant 0 : index
    %45 = vector.load %arg5[%c0_16, %c0_17] : memref<48x4xf32, #tpu.memory_space<vmem>>, vector<48x4xf32>
    tpu.vector_store %arg5[%c0_16, %c0_17], %44 {strides = array<i32>} : memref<48x4xf32, #tpu.memory_space<vmem>>, vector<48x4xf32>,
    return
  }
}

module attributes {stable_mosaic.version = 11 : i64} {
  func.func @_gvp_fused_kernel(%arg0: memref<16x128xf32, #tpu.memory_space<vmem>>, %arg1: memref<48x8xf32, #tpu.memory_space<vmem>>, %arg2: memref<8x8xf32, #tpu.memory_space<vmem>>, %arg3: memref<128x32xf32, #tpu.memory_space<vmem>>, %arg4: memref<8x32xf32, #tpu.memory_space<vmem>>, %arg5: memref<1x32xf32, #tpu.memory_space<vmem>>, %arg6: memref<8x4xf32, #tpu.memory_space<vmem>>, %arg7: memref<16x32xf32, #tpu.memory_space<vmem>>, %arg8: memref<48x4xf32, #tpu.memory_space<vmem>>) attributes {dimension_semantics = [], scalar_prefetch = 0 : i64, scratch_operands = 0 : i64, tpu.core_type = #tpu.core_type<tc>} {
    %c0 = arith.constant 0 : index
    %c0_0 = arith.constant 0 : index
    %0 = vector.load %arg0[%c0, %c0_0] : memref<16x128xf32, #tpu.memory_space<vmem>>, vector<16x128xf32>
    %c0_1 = arith.constant 0 : index
    %c0_2 = arith.constant 0 : index
    %1 = vector.load %arg1[%c0_1, %c0_2] : memref<48x8xf32, #tpu.memory_space<vmem>>, vector<48x8xf32>
    %c0_3 = arith.constant 0 : index
    %c0_4 = arith.constant 0 : index
    %2 = vector.load %arg2[%c0_3, %c0_4] : memref<8x8xf32, #tpu.memory_space<vmem>>, vector<8x8xf32>
    %cst = arith.constant dense<0.000000e+00> : vector<48x8xf32>
    %3 = tpu.matmul %1, %2, %cst {dimension_numbers = #tpu.dot_dimension_numbers<[1], [0], [0], [1], [0, 0, 1, 1], [], []>} : vector<48x8xf32>, vector<8x8xf32>, vector<48x8xf32> -> vector<48x8xf32>
    %4 = vector.extract_strided_slice %3 {offsets = [0, 0], sizes = [16, 8], strides = [1, 1]} : vector<48x8xf32> to vector<16x8xf32>
    %5 = vector.extract_strided_slice %3 {offsets = [16, 0], sizes = [16, 8], strides = [1, 1]} : vector<48x8xf32> to vector<16x8xf32>
    %6 = vector.extract_strided_slice %3 {offsets = [32, 0], sizes = [16, 8], strides = [1, 1]} : vector<48x8xf32> to vector<16x8xf32>
    %7 = arith.mulf %4, %4 : vector<16x8xf32>
    %8 = arith.mulf %5, %5 : vector<16x8xf32>
    %9 = arith.addf %7, %8 : vector<16x8xf32>
    %10 = arith.mulf %6, %6 : vector<16x8xf32>
    %11 = arith.addf %9, %10 : vector<16x8xf32>
    %cst_5 = arith.constant 9.99999993E-9 : f32
    %12 = vector.broadcast %cst_5 : f32 to vector<16x8xf32>
    %13 = arith.maximumf %11, %12 : vector<16x8xf32>
    %14 = math.sqrt %13 : vector<16x8xf32>
    %c0_6 = arith.constant 0 : index
    %c0_7 = arith.constant 0 : index
    %15 = vector.load %arg3[%c0_6, %c0_7] : memref<128x32xf32, #tpu.memory_space<vmem>>, vector<128x32xf32>
    %cst_8 = arith.constant dense<0.000000e+00> : vector<16x32xf32>
    %16 = tpu.matmul %0, %15, %cst_8 {dimension_numbers = #tpu.dot_dimension_numbers<[1], [0], [0], [1], [0, 0, 1, 1], [], []>} : vector<16x128xf32>, vector<128x32xf32>, vector<16x32xf32> -> vector<16x32xf32>
    %c0_9 = arith.constant 0 : index
    %c0_10 = arith.constant 0 : index
    %17 = vector.load %arg4[%c0_9, %c0_10] : memref<8x32xf32, #tpu.memory_space<vmem>>, vector<8x32xf32>
    %cst_11 = arith.constant dense<0.000000e+00> : vector<16x32xf32>
    %18 = tpu.matmul %14, %17, %cst_11 {dimension_numbers = #tpu.dot_dimension_numbers<[1], [0], [0], [1], [0, 0, 1, 1], [], []>} : vector<16x8xf32>, vector<8x32xf32>, vector<16x32xf32> -> vector<16x32xf32>
    %19 = arith.addf %16, %18 : vector<16x32xf32>
    %c0_12 = arith.constant 0 : index
    %c0_13 = arith.constant 0 : index
    %20 = vector.load %arg5[%c0_12, %c0_13] : memref<1x32xf32, #tpu.memory_space<vmem>>, vector<1x32xf32>
    %21 = vector.broadcast %20 : vector<1x32xf32> to vector<16x32xf32>
    %22 = arith.addf %19, %21 : vector<16x32xf32>
    %c0_14 = arith.constant 0 : index
    %c0_15 = arith.constant 0 : index
    %23 = vector.load %arg7[%c0_14, %c0_15] : memref<16x32xf32, #tpu.memory_space<vmem>>, vector<16x32xf32>
    tpu.vector_store %arg7[%c0_14, %c0_15], %22 {strides = array<i32>} : memref<16x32xf32, #tpu.memory_space<vmem>>, vector<16x32xf32>,
    %c0_16 = arith.constant 0 : index
    %c0_17 = arith.constant 0 : index
    %24 = vector.load %arg6[%c0_16, %c0_17] : memref<8x4xf32, #tpu.memory_space<vmem>>, vector<8x4xf32>
    %cst_18 = arith.constant dense<0.000000e+00> : vector<48x4xf32>
    %25 = tpu.matmul %3, %24, %cst_18 {dimension_numbers = #tpu.dot_dimension_numbers<[1], [0], [0], [1], [0, 0, 1, 1], [], []>} : vector<48x8xf32>, vector<8x4xf32>, vector<48x4xf32> -> vector<48x4xf32>
    %c0_19 = arith.constant 0 : index
    %c0_20 = arith.constant 0 : index
    %26 = vector.load %arg8[%c0_19, %c0_20] : memref<48x4xf32, #tpu.memory_space<vmem>>, vector<48x4xf32>
    tpu.vector_store %arg8[%c0_19, %c0_20], %25 {strides = array<i32>} : memref<48x4xf32, #tpu.memory_space<vmem>>, vector<48x4xf32>,
    return
  }
}

module attributes {stable_mosaic.version = 11 : i64} {
  func.func @_gvp_fused_kernel(%arg0: memref<16x32xf32, #tpu.memory_space<vmem>>, %arg1: memref<48x4xf32, #tpu.memory_space<vmem>>, %arg2: memref<4x8xf32, #tpu.memory_space<vmem>>, %arg3: memref<32x128xf32, #tpu.memory_space<vmem>>, %arg4: memref<8x128xf32, #tpu.memory_space<vmem>>, %arg5: memref<1x128xf32, #tpu.memory_space<vmem>>, %arg6: memref<8x8xf32, #tpu.memory_space<vmem>>, %arg7: memref<16x128xf32, #tpu.memory_space<vmem>>, %arg8: memref<48x8xf32, #tpu.memory_space<vmem>>) attributes {dimension_semantics = [], scalar_prefetch = 0 : i64, scratch_operands = 0 : i64, tpu.core_type = #tpu.core_type<tc>} {
    %c0 = arith.constant 0 : index
    %c0_0 = arith.constant 0 : index
    %0 = vector.load %arg0[%c0, %c0_0] : memref<16x32xf32, #tpu.memory_space<vmem>>, vector<16x32xf32>
    %c0_1 = arith.constant 0 : index
    %c0_2 = arith.constant 0 : index
    %1 = vector.load %arg1[%c0_1, %c0_2] : memref<48x4xf32, #tpu.memory_space<vmem>>, vector<48x4xf32>
    %c0_3 = arith.constant 0 : index
    %c0_4 = arith.constant 0 : index
    %2 = vector.load %arg2[%c0_3, %c0_4] : memref<4x8xf32, #tpu.memory_space<vmem>>, vector<4x8xf32>
    %cst = arith.constant dense<0.000000e+00> : vector<48x8xf32>
    %3 = tpu.matmul %1, %2, %cst {dimension_numbers = #tpu.dot_dimension_numbers<[1], [0], [0], [1], [0, 0, 1, 1], [], []>} : vector<48x4xf32>, vector<4x8xf32>, vector<48x8xf32> -> vector<48x8xf32>
    %4 = vector.extract_strided_slice %3 {offsets = [0, 0], sizes = [16, 8], strides = [1, 1]} : vector<48x8xf32> to vector<16x8xf32>
    %5 = vector.extract_strided_slice %3 {offsets = [16, 0], sizes = [16, 8], strides = [1, 1]} : vector<48x8xf32> to vector<16x8xf32>
    %6 = vector.extract_strided_slice %3 {offsets = [32, 0], sizes = [16, 8], strides = [1, 1]} : vector<48x8xf32> to vector<16x8xf32>
    %7 = arith.mulf %4, %4 : vector<16x8xf32>
    %8 = arith.mulf %5, %5 : vector<16x8xf32>
    %9 = arith.addf %7, %8 : vector<16x8xf32>
    %10 = arith.mulf %6, %6 : vector<16x8xf32>
    %11 = arith.addf %9, %10 : vector<16x8xf32>
    %cst_5 = arith.constant 9.99999993E-9 : f32
    %12 = vector.broadcast %cst_5 : f32 to vector<16x8xf32>
    %13 = arith.maximumf %11, %12 : vector<16x8xf32>
    %14 = math.sqrt %13 : vector<16x8xf32>
    %c0_6 = arith.constant 0 : index
    %c0_7 = arith.constant 0 : index
    %15 = vector.load %arg3[%c0_6, %c0_7] : memref<32x128xf32, #tpu.memory_space<vmem>>, vector<32x128xf32>
    %cst_8 = arith.constant dense<0.000000e+00> : vector<16x128xf32>
    %16 = tpu.matmul %0, %15, %cst_8 {dimension_numbers = #tpu.dot_dimension_numbers<[1], [0], [0], [1], [0, 0, 1, 1], [], []>} : vector<16x32xf32>, vector<32x128xf32>, vector<16x128xf32> -> vector<16x128xf32>
    %c0_9 = arith.constant 0 : index
    %c0_10 = arith.constant 0 : index
    %17 = vector.load %arg4[%c0_9, %c0_10] : memref<8x128xf32, #tpu.memory_space<vmem>>, vector<8x128xf32>
    %cst_11 = arith.constant dense<0.000000e+00> : vector<16x128xf32>
    %18 = tpu.matmul %14, %17, %cst_11 {dimension_numbers = #tpu.dot_dimension_numbers<[1], [0], [0], [1], [0, 0, 1, 1], [], []>} : vector<16x8xf32>, vector<8x128xf32>, vector<16x128xf32> -> vector<16x128xf32>
    %19 = arith.addf %16, %18 : vector<16x128xf32>
    %c0_12 = arith.constant 0 : index
    %c0_13 = arith.constant 0 : index
    %20 = vector.load %arg5[%c0_12, %c0_13] : memref<1x128xf32, #tpu.memory_space<vmem>>, vector<1x128xf32>
    %21 = vector.broadcast %20 : vector<1x128xf32> to vector<16x128xf32>
    %22 = arith.addf %19, %21 : vector<16x128xf32>
    %cst_14 = arith.constant 0.000000e+00 : f32
    %23 = vector.broadcast %cst_14 : f32 to vector<16x128xf32>
    %24 = arith.maximumf %22, %23 : vector<16x128xf32>
    %c0_15 = arith.constant 0 : index
    %c0_16 = arith.constant 0 : index
    %25 = vector.load %arg7[%c0_15, %c0_16] : memref<16x128xf32, #tpu.memory_space<vmem>>, vector<16x128xf32>
    tpu.vector_store %arg7[%c0_15, %c0_16], %24 {strides = array<i32>} : memref<16x128xf32, #tpu.memory_space<vmem>>, vector<16x128xf32>,
    %c0_17 = arith.constant 0 : index
    %c0_18 = arith.constant 0 : index
    %26 = vector.load %arg6[%c0_17, %c0_18] : memref<8x8xf32, #tpu.memory_space<vmem>>, vector<8x8xf32>
    %cst_19 = arith.constant dense<0.000000e+00> : vector<48x8xf32>
    %27 = tpu.matmul %3, %26, %cst_19 {dimension_numbers = #tpu.dot_dimension_numbers<[1], [0], [0], [1], [0, 0, 1, 1], [], []>} : vector<48x8xf32>, vector<8x8xf32>, vector<48x8xf32> -> vector<48x8xf32>
    %28 = vector.extract_strided_slice %27 {offsets = [0, 0], sizes = [16, 8], strides = [1, 1]} : vector<48x8xf32> to vector<16x8xf32>
    %29 = vector.extract_strided_slice %27 {offsets = [16, 0], sizes = [16, 8], strides = [1, 1]} : vector<48x8xf32> to vector<16x8xf32>
    %30 = vector.extract_strided_slice %27 {offsets = [32, 0], sizes = [16, 8], strides = [1, 1]} : vector<48x8xf32> to vector<16x8xf32>
    %31 = arith.mulf %28, %28 : vector<16x8xf32>
    %32 = arith.mulf %29, %29 : vector<16x8xf32>
    %33 = arith.addf %31, %32 : vector<16x8xf32>
    %34 = arith.mulf %30, %30 : vector<16x8xf32>
    %35 = arith.addf %33, %34 : vector<16x8xf32>
    %cst_20 = arith.constant 9.99999993E-9 : f32
    %36 = vector.broadcast %cst_20 : f32 to vector<16x8xf32>
    %37 = arith.maximumf %35, %36 : vector<16x8xf32>
    %38 = math.sqrt %37 : vector<16x8xf32>
    %39 = arith.negf %38 : vector<16x8xf32>
    %40 = math.exp %39 : vector<16x8xf32>
    %cst_21 = arith.constant 1.000000e+00 : f32
    %41 = vector.broadcast %cst_21 : f32 to vector<16x8xf32>
    %42 = arith.addf %41, %40 : vector<16x8xf32>
    %43 = arith.divf %41, %42 : vector<16x8xf32>
    %44 = tpu.concatenate %43, %43, %43 in 0 : vector<16x8xf32>, vector<16x8xf32>, vector<16x8xf32> -> vector<48x8xf32>
    %45 = arith.mulf %27, %44 : vector<48x8xf32>
    %c0_22 = arith.constant 0 : index
    %c0_23 = arith.constant 0 : index
    %46 = vector.load %arg8[%c0_22, %c0_23] : memref<48x8xf32, #tpu.memory_space<vmem>>, vector<48x8xf32>
    tpu.vector_store %arg8[%c0_22, %c0_23], %45 {strides = array<i32>} : memref<48x8xf32, #tpu.memory_space<vmem>>, vector<48x8xf32>,
    return
  }
}

module attributes {stable_mosaic.version = 11 : i64} {
  func.func @_gvp_fused_kernel(%arg0: memref<16x32xf32, #tpu.memory_space<vmem>>, %arg1: memref<48x4xf32, #tpu.memory_space<vmem>>, %arg2: memref<1x32xf32, #tpu.memory_space<vmem>>, %arg3: memref<1x32xf32, #tpu.memory_space<vmem>>, %arg4: memref<4x4xf32, #tpu.memory_space<vmem>>, %arg5: memref<32x16xf32, #tpu.memory_space<vmem>>, %arg6: memref<4x16xf32, #tpu.memory_space<vmem>>, %arg7: memref<1x16xf32, #tpu.memory_space<vmem>>, %arg8: memref<16x16xf32, #tpu.memory_space<vmem>>) attributes {dimension_semantics = [], scalar_prefetch = 0 : i64, scratch_operands = 0 : i64, tpu.core_type = #tpu.core_type<tc>} {
    %c0 = arith.constant 0 : index
    %c0_0 = arith.constant 0 : index
    %0 = vector.load %arg0[%c0, %c0_0] : memref<16x32xf32, #tpu.memory_space<vmem>>, vector<16x32xf32>
    %c0_1 = arith.constant 0 : index
    %c0_2 = arith.constant 0 : index
    %1 = vector.load %arg1[%c0_1, %c0_2] : memref<48x4xf32, #tpu.memory_space<vmem>>, vector<48x4xf32>
    %cst = arith.constant dense<0.000000e+00> : vector<16xf32>
    %2 = vector.multi_reduction <add>, %0, %cst [1] : vector<16x32xf32> to vector<16xf32>
    %3 = vector.shape_cast %2 : vector<16xf32> to vector<16x1xf32>
    %cst_3 = arith.constant 3.200000e+01 : f32
    %4 = vector.broadcast %cst_3 : f32 to vector<16x1xf32>
    %5 = arith.divf %3, %4 : vector<16x1xf32>
    %6 = vector.broadcast %5 : vector<16x1xf32> to vector<16x32xf32>
    %7 = arith.subf %0, %6 : vector<16x32xf32>
    %8 = arith.mulf %7, %7 : vector<16x32xf32>
    %cst_4 = arith.constant dense<0.000000e+00> : vector<16xf32>
    %9 = vector.multi_reduction <add>, %8, %cst_4 [1] : vector<16x32xf32> to vector<16xf32>
    %10 = vector.shape_cast %9 : vector<16xf32> to vector<16x1xf32>
    %cst_5 = arith.constant 3.200000e+01 : f32
    %11 = vector.broadcast %cst_5 : f32 to vector<16x1xf32>
    %12 = arith.divf %10, %11 : vector<16x1xf32>
    %13 = vector.broadcast %5 : vector<16x1xf32> to vector<16x32xf32>
    %14 = arith.subf %0, %13 : vector<16x32xf32>
    %cst_6 = arith.constant 9.99999974E-6 : f32
    %15 = vector.broadcast %cst_6 : f32 to vector<16x1xf32>
    %16 = arith.addf %12, %15 : vector<16x1xf32>
    %17 = math.rsqrt %16 : vector<16x1xf32>
    %18 = vector.broadcast %17 : vector<16x1xf32> to vector<16x32xf32>
    %19 = arith.mulf %14, %18 : vector<16x32xf32>
    %c0_7 = arith.constant 0 : index
    %c0_8 = arith.constant 0 : index
    %20 = vector.load %arg2[%c0_7, %c0_8] : memref<1x32xf32, #tpu.memory_space<vmem>>, vector<1x32xf32>
    %21 = vector.broadcast %20 : vector<1x32xf32> to vector<16x32xf32>
    %22 = arith.mulf %19, %21 : vector<16x32xf32>
    %c0_9 = arith.constant 0 : index
    %c0_10 = arith.constant 0 : index
    %23 = vector.load %arg3[%c0_9, %c0_10] : memref<1x32xf32, #tpu.memory_space<vmem>>, vector<1x32xf32>
    %24 = vector.broadcast %23 : vector<1x32xf32> to vector<16x32xf32>
    %25 = arith.addf %22, %24 : vector<16x32xf32>
    %26 = vector.extract_strided_slice %1 {offsets = [0, 0], sizes = [16, 4], strides = [1, 1]} : vector<48x4xf32> to vector<16x4xf32>
    %27 = vector.extract_strided_slice %1 {offsets = [16, 0], sizes = [16, 4], strides = [1, 1]} : vector<48x4xf32> to vector<16x4xf32>
    %28 = vector.extract_strided_slice %1 {offsets = [32, 0], sizes = [16, 4], strides = [1, 1]} : vector<48x4xf32> to vector<16x4xf32>
    %29 = arith.mulf %26, %26 : vector<16x4xf32>
    %30 = arith.mulf %27, %27 : vector<16x4xf32>
    %31 = arith.addf %29, %30 : vector<16x4xf32>
    %32 = arith.mulf %28, %28 : vector<16x4xf32>
    %33 = arith.addf %31, %32 : vector<16x4xf32>
    %cst_11 = arith.constant 9.99999993E-9 : f32
    %34 = vector.broadcast %cst_11 : f32 to vector<16x4xf32>
    %35 = arith.maximumf %33, %34 : vector<16x4xf32>
    %cst_12 = arith.constant dense<0.000000e+00> : vector<16xf32>
    %36 = vector.multi_reduction <add>, %35, %cst_12 [1] : vector<16x4xf32> to vector<16xf32>
    %37 = vector.shape_cast %36 : vector<16xf32> to vector<16x1xf32>
    %cst_13 = arith.constant 4.000000e+00 : f32
    %38 = vector.broadcast %cst_13 : f32 to vector<16x1xf32>
    %39 = arith.divf %37, %38 : vector<16x1xf32>
    %40 = math.rsqrt %39 : vector<16x1xf32>
    %41 = tpu.concatenate %40, %40, %40 in 0 : vector<16x1xf32>, vector<16x1xf32>, vector<16x1xf32> -> vector<48x1xf32>
    %42 = vector.broadcast %41 : vector<48x1xf32> to vector<48x4xf32>
    %43 = arith.mulf %1, %42 : vector<48x4xf32>
    %c0_14 = arith.constant 0 : index
    %c0_15 = arith.constant 0 : index
    %44 = vector.load %arg4[%c0_14, %c0_15] : memref<4x4xf32, #tpu.memory_space<vmem>>, vector<4x4xf32>
    %cst_16 = arith.constant dense<0.000000e+00> : vector<48x4xf32>
    %45 = tpu.matmul %43, %44, %cst_16 {dimension_numbers = #tpu.dot_dimension_numbers<[1], [0], [0], [1], [0, 0, 1, 1], [], []>} : vector<48x4xf32>, vector<4x4xf32>, vector<48x4xf32> -> vector<48x4xf32>
    %46 = vector.extract_strided_slice %45 {offsets = [0, 0], sizes = [16, 4], strides = [1, 1]} : vector<48x4xf32> to vector<16x4xf32>
    %47 = vector.extract_strided_slice %45 {offsets = [16, 0], sizes = [16, 4], strides = [1, 1]} : vector<48x4xf32> to vector<16x4xf32>
    %48 = vector.extract_strided_slice %45 {offsets = [32, 0], sizes = [16, 4], strides = [1, 1]} : vector<48x4xf32> to vector<16x4xf32>
    %49 = arith.mulf %46, %46 : vector<16x4xf32>
    %50 = arith.mulf %47, %47 : vector<16x4xf32>
    %51 = arith.addf %49, %50 : vector<16x4xf32>
    %52 = arith.mulf %48, %48 : vector<16x4xf32>
    %53 = arith.addf %51, %52 : vector<16x4xf32>
    %cst_17 = arith.constant 9.99999993E-9 : f32
    %54 = vector.broadcast %cst_17 : f32 to vector<16x4xf32>
    %55 = arith.maximumf %53, %54 : vector<16x4xf32>
    %56 = math.sqrt %55 : vector<16x4xf32>
    %c0_18 = arith.constant 0 : index
    %c0_19 = arith.constant 0 : index
    %57 = vector.load %arg5[%c0_18, %c0_19] : memref<32x16xf32, #tpu.memory_space<vmem>>, vector<32x16xf32>
    %cst_20 = arith.constant dense<0.000000e+00> : vector<16x16xf32>
    %58 = tpu.matmul %25, %57, %cst_20 {dimension_numbers = #tpu.dot_dimension_numbers<[1], [0], [0], [1], [0, 0, 1, 1], [], []>} : vector<16x32xf32>, vector<32x16xf32>, vector<16x16xf32> -> vector<16x16xf32>
    %c0_21 = arith.constant 0 : index
    %c0_22 = arith.constant 0 : index
    %59 = vector.load %arg6[%c0_21, %c0_22] : memref<4x16xf32, #tpu.memory_space<vmem>>, vector<4x16xf32>
    %cst_23 = arith.constant dense<0.000000e+00> : vector<16x16xf32>
    %60 = tpu.matmul %56, %59, %cst_23 {dimension_numbers = #tpu.dot_dimension_numbers<[1], [0], [0], [1], [0, 0, 1, 1], [], []>} : vector<16x4xf32>, vector<4x16xf32>, vector<16x16xf32> -> vector<16x16xf32>
    %61 = arith.addf %58, %60 : vector<16x16xf32>
    %c0_24 = arith.constant 0 : index
    %c0_25 = arith.constant 0 : index
    %62 = vector.load %arg7[%c0_24, %c0_25] : memref<1x16xf32, #tpu.memory_space<vmem>>, vector<1x16xf32>
    %63 = vector.broadcast %62 : vector<1x16xf32> to vector<16x16xf32>
    %64 = arith.addf %61, %63 : vector<16x16xf32>
    %c0_26 = arith.constant 0 : index
    %c0_27 = arith.constant 0 : index
    %65 = vector.load %arg8[%c0_26, %c0_27] : memref<16x16xf32, #tpu.memory_space<vmem>>, vector<16x16xf32>
    tpu.vector_store %arg8[%c0_26, %c0_27], %64 {strides = array<i32>} : memref<16x16xf32, #tpu.memory_space<vmem>>, vector<16x16xf32>,
    return
  }
}

module attributes {stable_mosaic.version = 11 : i64} {
  func.func @_reward_head_kernel(%arg0: memref<2x16xf32, #tpu.memory_space<vmem>>, %arg1: memref<16x8xf32, #tpu.memory_space<vmem>>, %arg2: memref<1x8xf32, #tpu.memory_space<vmem>>, %arg3: memref<8x11xf32, #tpu.memory_space<vmem>>, %arg4: memref<1x11xf32, #tpu.memory_space<vmem>>, %arg5: memref<2x11xf32, #tpu.memory_space<vmem>>) attributes {dimension_semantics = [], scalar_prefetch = 0 : i64, scratch_operands = 0 : i64, tpu.core_type = #tpu.core_type<tc>} {
    %c0 = arith.constant 0 : index
    %c0_0 = arith.constant 0 : index
    %0 = vector.load %arg0[%c0, %c0_0] : memref<2x16xf32, #tpu.memory_space<vmem>>, vector<2x16xf32>
    %c0_1 = arith.constant 0 : index
    %c0_2 = arith.constant 0 : index
    %1 = vector.load %arg1[%c0_1, %c0_2] : memref<16x8xf32, #tpu.memory_space<vmem>>, vector<16x8xf32>
    %cst = arith.constant dense<0.000000e+00> : vector<2x8xf32>
    %2 = tpu.matmul %0, %1, %cst {dimension_numbers = #tpu.dot_dimension_numbers<[1], [0], [0], [1], [0, 0, 1, 1], [], []>} : vector<2x16xf32>, vector<16x8xf32>, vector<2x8xf32> -> vector<2x8xf32>
    %c0_3 = arith.constant 0 : index
    %c0_4 = arith.constant 0 : index
    %3 = vector.load %arg2[%c0_3, %c0_4] : memref<1x8xf32, #tpu.memory_space<vmem>>, vector<1x8xf32>
    %4 = vector.broadcast %3 : vector<1x8xf32> to vector<2x8xf32>
    %5 = arith.addf %2, %4 : vector<2x8xf32>
    %cst_5 = arith.constant 0.000000e+00 : f32
    %6 = vector.broadcast %cst_5 : f32 to vector<2x8xf32>
    %7 = arith.cmpf ogt, %5, %6 : vector<2x8xf32>
    %cst_6 = arith.constant 0.00999999977 : f32
    %8 = vector.broadcast %cst_6 : f32 to vector<2x8xf32>
    %9 = arith.mulf %8, %5 : vector<2x8xf32>
    %10 = arith.select %7, %5, %9 : vector<2x8xi1>, vector<2x8xf32>
    %c0_7 = arith.constant 0 : index
    %c0_8 = arith.constant 0 : index
    %11 = vector.load %arg3[%c0_7, %c0_8] : memref<8x11xf32, #tpu.memory_space<vmem>>, vector<8x11xf32>
    %cst_9 = arith.constant dense<0.000000e+00> : vector<2x11xf32>
    %12 = tpu.matmul %10, %11, %cst_9 {dimension_numbers = #tpu.dot_dimension_numbers<[1], [0], [0], [1], [0, 0, 1, 1], [], []>} : vector<2x8xf32>, vector<8x11xf32>, vector<2x11xf32> -> vector<2x11xf32>
    %c0_10 = arith.constant 0 : index
    %c0_11 = arith.constant 0 : index
    %13 = vector.load %arg4[%c0_10, %c0_11] : memref<1x11xf32, #tpu.memory_space<vmem>>, vector<1x11xf32>
    %14 = vector.broadcast %13 : vector<1x11xf32> to vector<2x11xf32>
    %15 = arith.addf %12, %14 : vector<2x11xf32>
    %c0_12 = arith.constant 0 : index
    %c0_13 = arith.constant 0 : index
    %16 = vector.load %arg5[%c0_12, %c0_13] : memref<2x11xf32, #tpu.memory_space<vmem>>, vector<2x11xf32>
    tpu.vector_store %arg5[%c0_12, %c0_13], %15 {strides = array<i32>} : memref<2x11xf32, #tpu.memory_space<vmem>>, vector<2x11xf32>,
    return
  }
}

module attributes {stable_mosaic.version = 11 : i64} {
  func.func @_conv_chain_kernel(%arg0: memref<16x156xf32, #tpu.memory_space<vmem>>, %arg1: memref<156x32xf32, #tpu.memory_space<vmem>>, %arg2: memref<1x32xf32, #tpu.memory_space<vmem>>, %arg3: memref<96x32xf32, #tpu.memory_space<vmem>>, %arg4: memref<1x32xf32, #tpu.memory_space<vmem>>, %arg5: memref<16x32xf32, #tpu.memory_space<vmem>>) attributes {dimension_semantics = [], scalar_prefetch = 0 : i64, scratch_operands = 0 : i64, tpu.core_type = #tpu.core_type<tc>} {
    %c0 = arith.constant 0 : index
    %c0_0 = arith.constant 0 : index
    %0 = vector.load %arg0[%c0, %c0_0] : memref<16x156xf32, #tpu.memory_space<vmem>>, vector<16x156xf32>
    %c0_1 = arith.constant 0 : index
    %c0_2 = arith.constant 0 : index
    %1 = vector.load %arg1[%c0_1, %c0_2] : memref<156x32xf32, #tpu.memory_space<vmem>>, vector<156x32xf32>
    %cst = arith.constant dense<0.000000e+00> : vector<16x32xf32>
    %2 = tpu.matmul %0, %1, %cst {dimension_numbers = #tpu.dot_dimension_numbers<[1], [0], [0], [1], [0, 0, 1, 1], [], []>} : vector<16x156xf32>, vector<156x32xf32>, vector<16x32xf32> -> vector<16x32xf32>
    %c0_3 = arith.constant 0 : index
    %c0_4 = arith.constant 0 : index
    %3 = vector.load %arg2[%c0_3, %c0_4] : memref<1x32xf32, #tpu.memory_space<vmem>>, vector<1x32xf32>
    %4 = vector.broadcast %3 : vector<1x32xf32> to vector<16x32xf32>
    %5 = arith.addf %2, %4 : vector<16x32xf32>
    %cst_5 = arith.constant 0.000000e+00 : f32
    %6 = vector.broadcast %cst_5 : f32 to vector<16x32xf32>
    %7 = arith.maximumf %5, %6 : vector<16x32xf32>
    %8 = tpu.iota {dimensions = array<i32: 0>} : vector<16x16xi32>
    %9 = tpu.iota {dimensions = array<i32: 1>} : vector<16x16xi32>
    %c1_i32 = arith.constant 1 : i32
    %10 = vector.broadcast %c1_i32 : i32 to vector<16x16xi32>
    %11 = arith.subi %8, %10 : vector<16x16xi32>
    %12 = arith.cmpi eq, %9, %11 : vector<16x16xi32>
    %c8_i32 = arith.constant 8 : i32
    %c0_i32 = arith.constant 0 : i32
    %13 = arith.cmpi eq, %c8_i32, %c0_i32 : i32
    %c1_i32_6 = arith.constant 1 : i32
    %14 = arith.select %13, %c1_i32_6, %c8_i32 : i32
    %15 = vector.broadcast %14 : i32 to vector<16x16xi32>
    %16 = arith.remsi %8, %15 : vector<16x16xi32>
    %c0_i32_7 = arith.constant 0 : i32
    %17 = vector.broadcast %c0_i32_7 : i32 to vector<16x16xi32>
    %18 = arith.cmpi ne, %16, %17 : vector<16x16xi32>
    %c0_i32_8 = arith.constant 0 : i32
    %19 = vector.broadcast %c0_i32_8 : i32 to vector<16x16xi32>
    %20 = arith.cmpi slt, %16, %19 : vector<16x16xi32>
    %c0_i32_9 = arith.constant 0 : i32
    %21 = arith.cmpi slt, %14, %c0_i32_9 : i32
    %22 = vector.broadcast %21 : i1 to vector<16x16xi1>
    %23 = vector.broadcast %22 : vector<16x16xi1> to vector<16x16xi1>
    %24 = arith.xori %20, %23 : vector<16x16xi1>
    %25 = arith.andi %24, %18 : vector<16x16xi1>
    %26 = vector.broadcast %14 : i32 to vector<16x16xi32>
    %27 = arith.addi %16, %26 : vector<16x16xi32>
    %28 = arith.select %25, %27, %16 : vector<16x16xi1>, vector<16x16xi32>
    %c0_i32_10 = arith.constant 0 : i32
    %29 = vector.broadcast %c0_i32_10 : i32 to vector<16x16xi32>
    %30 = arith.cmpi ne, %28, %29 : vector<16x16xi32>
    %31 = arith.andi %12, %30 : vector<16x16xi1>
    %cst_11 = arith.constant 1.000000e+00 : f32
    %cst_12 = arith.constant 0.000000e+00 : f32
    %32 = vector.broadcast %cst_11 : f32 to vector<16x16xf32>
    %33 = vector.broadcast %cst_12 : f32 to vector<16x16xf32>
    %34 = arith.select %31, %32, %33 : vector<16x16xi1>, vector<16x16xf32>
    %c1_i32_13 = arith.constant 1 : i32
    %35 = vector.broadcast %c1_i32_13 : i32 to vector<16x16xi32>
    %36 = arith.addi %8, %35 : vector<16x16xi32>
    %37 = arith.cmpi eq, %9, %36 : vector<16x16xi32>
    %c8_i32_14 = arith.constant 8 : i32
    %c0_i32_15 = arith.constant 0 : i32
    %38 = arith.cmpi eq, %c8_i32_14, %c0_i32_15 : i32
    %c1_i32_16 = arith.constant 1 : i32
    %39 = arith.select %38, %c1_i32_16, %c8_i32_14 : i32
    %40 = vector.broadcast %39 : i32 to vector<16x16xi32>
    %41 = arith.remsi %8, %40 : vector<16x16xi32>
    %c0_i32_17 = arith.constant 0 : i32
    %42 = vector.broadcast %c0_i32_17 : i32 to vector<16x16xi32>
    %43 = arith.cmpi ne, %41, %42 : vector<16x16xi32>
    %c0_i32_18 = arith.constant 0 : i32
    %44 = vector.broadcast %c0_i32_18 : i32 to vector<16x16xi32>
    %45 = arith.cmpi slt, %41, %44 : vector<16x16xi32>
    %c0_i32_19 = arith.constant 0 : i32
    %46 = arith.cmpi slt, %39, %c0_i32_19 : i32
    %47 = vector.broadcast %46 : i1 to vector<16x16xi1>
    %48 = vector.broadcast %47 : vector<16x16xi1> to vector<16x16xi1>
    %49 = arith.xori %45, %48 : vector<16x16xi1>
    %50 = arith.andi %49, %43 : vector<16x16xi1>
    %51 = vector.broadcast %39 : i32 to vector<16x16xi32>
    %52 = arith.addi %41, %51 : vector<16x16xi32>
    %53 = arith.select %50, %52, %41 : vector<16x16xi1>, vector<16x16xi32>
    %c7_i32 = arith.constant 7 : i32
    %54 = vector.broadcast %c7_i32 : i32 to vector<16x16xi32>
    %55 = arith.cmpi ne, %53, %54 : vector<16x16xi32>
    %56 = arith.andi %37, %55 : vector<16x16xi1>
    %cst_20 = arith.constant 1.000000e+00 : f32
    %cst_21 = arith.constant 0.000000e+00 : f32
    %57 = vector.broadcast %cst_20 : f32 to vector<16x16xf32>
    %58 = vector.broadcast %cst_21 : f32 to vector<16x16xf32>
    %59 = arith.select %56, %57, %58 : vector<16x16xi1>, vector<16x16xf32>
    %cst_22 = arith.constant dense<0.000000e+00> : vector<16x32xf32>
    %60 = tpu.matmul %34, %7, %cst_22 {dimension_numbers = #tpu.dot_dimension_numbers<[1], [0], [0], [1], [0, 0, 1, 1], [], []>} : vector<16x16xf32>, vector<16x32xf32>, vector<16x32xf32> -> vector<16x32xf32>
    %cst_23 = arith.constant dense<0.000000e+00> : vector<16x32xf32>
    %61 = tpu.matmul %59, %7, %cst_23 {dimension_numbers = #tpu.dot_dimension_numbers<[1], [0], [0], [1], [0, 0, 1, 1], [], []>} : vector<16x16xf32>, vector<16x32xf32>, vector<16x32xf32> -> vector<16x32xf32>
    %62 = tpu.concatenate %60, %7, %61 in 1 : vector<16x32xf32>, vector<16x32xf32>, vector<16x32xf32> -> vector<16x96xf32>
    %c0_24 = arith.constant 0 : index
    %c0_25 = arith.constant 0 : index
    %63 = vector.load %arg3[%c0_24, %c0_25] : memref<96x32xf32, #tpu.memory_space<vmem>>, vector<96x32xf32>
    %cst_26 = arith.constant dense<0.000000e+00> : vector<16x32xf32>
    %64 = tpu.matmul %62, %63, %cst_26 {dimension_numbers = #tpu.dot_dimension_numbers<[1], [0], [0], [1], [0, 0, 1, 1], [], []>} : vector<16x96xf32>, vector<96x32xf32>, vector<16x32xf32> -> vector<16x32xf32>
    %c0_27 = arith.constant 0 : index
    %c0_28 = arith.constant 0 : index
    %65 = vector.load %arg4[%c0_27, %c0_28] : memref<1x32xf32, #tpu.memory_space<vmem>>, vector<1x32xf32>
    %66 = vector.broadcast %65 : vector<1x32xf32> to vector<16x32xf32>
    %67 = arith.addf %64, %66 : vector<16x32xf32>
    %cst_29 = arith.constant 0.000000e+00 : f32
    %68 = vector.broadcast %cst_29 : f32 to vector<16x32xf32>
    %69 = arith.maximumf %67, %68 : vector<16x32xf32>
    %c0_30 = arith.constant 0 : index
    %c0_31 = arith.constant 0 : index
    %70 = vector.load %arg5[%c0_30, %c0_31] : memref<16x32xf32, #tpu.memory_space<vmem>>, vector<16x32xf32>
    tpu.vector_store %arg5[%c0_30, %c0_31], %69 {strides = array<i32>} : memref<16x32xf32, #tpu.memory_space<vmem>>, vector<16x32xf32>,
    return
  }
}

</mosaic_0001>

<llo_original>
// kernel: dynamics_forward.13
$region0: #{dynamics_forward.13}
  #allocation0 [shape = 'u32[]', space=smem, size = 0x4, offset = 0x4, fixed_abs, tag = 'smem constant byte address 0x4 - core index']
  #allocation1 [shape = 'u32[72,128]{1,0:T(1,128)}', space=vmem, size = 0x9000, scoped, tag = 'internal scratch']
  %s0 = inlined_call_operand.vmem [shape: f32[16,52], index: 0, kind: input, shape index: {}]
  %s1 = inlined_call_operand.vmem [shape: f32[48,3], index: 1, kind: input, shape index: {}]
  %s2 = inlined_call_operand.vmem [shape: f32[1,52], index: 2, kind: input, shape index: {}]
  %s3 = inlined_call_operand.vmem [shape: f32[1,52], index: 3, kind: input, shape index: {}]
  %s4 = inlined_call_operand.vmem [shape: f32[3,4], index: 4, kind: input, shape index: {}]
  %s5 = inlined_call_operand.vmem [shape: f32[52,32], index: 5, kind: input, shape index: {}]
  %s6 = inlined_call_operand.vmem [shape: f32[4,32], index: 6, kind: input, shape index: {}]
  %s7 = inlined_call_operand.vmem [shape: f32[1,32], index: 7, kind: input, shape index: {}]
  %s8 = inlined_call_operand.vmem [shape: f32[4,4], index: 8, kind: input, shape index: {}]
  %s9 = inlined_call_operand.vmem [shape: f32[16,32], index: 9, kind: output, shape index: {0}]
  %s10 = inlined_call_operand.vmem [shape: f32[48,4], index: 10, kind: output, shape index: {1}]
  %11 = xla_tuple %s9, %s10
  %s12 = sld [smem:[#allocation0]]
  $region54: #{dynamics_forward.13} parent=0
    _
  %s14 = ssub.s32 1, %s12
  %s15 = scalar_select 0, %s14, %s12
  // Predicated region
  $region2: #{dynamics_forward.13} parent=0 // pred_check
    _
  $region3: #{dynamics_forward.13} parent=0 // pred_check_branch
    %17 = sbr.rel (0) target = $region5
  $region4: #{dynamics_forward.13} parent=0 // pred_region
    _
  $region5: #{dynamics_forward.13} parent=0 // pred_fallthru
    _
  // Predicated region
  $region6: #{dynamics_forward.13} parent=0 // pred_check
    _
  $region7: #{dynamics_forward.13} parent=0 // pred_check_branch
    %19 = sbr.rel (0) target = $region9
  $region8: #{dynamics_forward.13} parent=0 // pred_region
    _
  $region9: #{dynamics_forward.13} parent=0 // pred_fallthru
    _
  // Predicated region
  $region10: #{dynamics_forward.13} parent=0 // pred_check
    _
  $region11: #{dynamics_forward.13} parent=0 // pred_check_branch
    %21 = sbr.rel (0) target = $region13
  $region12: #{dynamics_forward.13} parent=0 // pred_region
    _
  $region13: #{dynamics_forward.13} parent=0 // pred_fallthru
    _
  // Predicated region
  $region14: #{dynamics_forward.13} parent=0 // pred_check
    _
  $region15: #{dynamics_forward.13} parent=0 // pred_check_branch
    %23 = sbr.rel (0) target = $region17
  $region16: #{dynamics_forward.13} parent=0 // pred_region
    _
  $region17: #{dynamics_forward.13} parent=0 // pred_fallthru
    _
  // Predicated region
  $region18: #{dynamics_forward.13} parent=0 // pred_check
    _
  $region19: #{dynamics_forward.13} parent=0 // pred_check_branch
    %25 = sbr.rel (0) target = $region21
  $region20: #{dynamics_forward.13} parent=0 // pred_region
    _
  $region21: #{dynamics_forward.13} parent=0 // pred_fallthru
    _
  // Predicated region
  $region22: #{dynamics_forward.13} parent=0 // pred_check
    _
  $region23: #{dynamics_forward.13} parent=0 // pred_check_branch
    %27 = sbr.rel (0) target = $region25
  $region24: #{dynamics_forward.13} parent=0 // pred_region
    _
  $region25: #{dynamics_forward.13} parent=0 // pred_fallthru
    _
  // Predicated region
  $region26: #{dynamics_forward.13} parent=0 // pred_check
    _
  $region27: #{dynamics_forward.13} parent=0 // pred_check_branch
    %29 = sbr.rel (0) target = $region29
  $region28: #{dynamics_forward.13} parent=0 // pred_region
    _
  $region29: #{dynamics_forward.13} parent=0 // pred_fallthru
    _
  // Predicated region
  $region30: #{dynamics_forward.13} parent=0 // pred_check
    _
  $region31: #{dynamics_forward.13} parent=0 // pred_check_branch
    %31 = sbr.rel (0) target = $region33
  $region32: #{dynamics_forward.13} parent=0 // pred_region
    _
  $region33: #{dynamics_forward.13} parent=0 // pred_fallthru
    _
  // Predicated region
  $region34: #{dynamics_forward.13} parent=0 // pred_check
    _
  $region35: #{dynamics_forward.13} parent=0 // pred_check_branch
    %33 = sbr.rel (0) target = $region37
  $region36: #{dynamics_forward.13} parent=0 // pred_region
    _
  $region37: #{dynamics_forward.13} parent=0 // pred_fallthru
    _
  %v34 = vld [vmem:[%s0] sm:$0xff]
  %v35 = vld [vmem:[%s0 + $0x8] sm:$0xff]
  %v36 = vld [vmem:[%s1] sm:$0xff]
  %v37 = vld [vmem:[%s1 + $0x8] sm:$0xff]
  %v38 = vld [vmem:[%s1 + $0x10] sm:$0xff]
  %v39 = vld [vmem:[%s1 + $0x18] sm:$0xff]
  %v40 = vld [vmem:[%s1 + $0x20] sm:$0xff]
  %v41 = vld [vmem:[%s1 + $0x28] sm:$0xff]
  %vm42 = vcmask 424960
  %v43 = vsel %vm42, %v34, 0.0
  %44 = vadd.xlane.f32.xlu0 %v43
  %v45 = vpop.xlane.xlu0 %44
  %v46 = vsel %vm42, %v35, 0.0
  %47 = vadd.xlane.f32.xlu0 %v46
  %v48 = vpop.xlane.xlu0 %47
  %v49 = vrcp.pop 52.0
  %v50 = vmul.f32 52.0, %v49
  %v51 = vsub.f32 1.0, %v50
  %v52 = vmul.f32 %v49, %v51
  %v53 = vadd.f32 %v49, %v52
  %vm54 = vweird.f32 %v49
  %v55 = vsel %vm54, %v49, %v53
  %v56 = vmul.f32 %v45, %v55
  %v57 = vmul.f32 %v48, %v55
  %v58 = vsub.f32 %v34, %v56
  %v59 = vsub.f32 %v35, %v57
  %v60 = vmul.f32 %v58, %v58
  %v61 = vmul.f32 %v59, %v59
  %v62 = vsel %vm42, %v60, 0.0
  %63 = vadd.xlane.f32.xlu0 %v62
  %v64 = vpop.xlane.xlu0 %63
  %v65 = vsel %vm42, %v61, 0.0
  %66 = vadd.xlane.f32.xlu0 %v65
  %v67 = vpop.xlane.xlu0 %66
  %v68 = vmul.f32 %v64, %v55
  %v69 = vmul.f32 %v67, %v55
  %v70 = vadd.f32 %v68, 1e-05
  %v71 = vadd.f32 %v69, 1e-05
  %v72 = vrsqrt.pop %v70
  %v73 = vmul.f32 %v72, %v70
  %v74 = vmul.f32 %v73, %v72
  %v75 = vmul.f32 0.5, %v74
  %v76 = vsub.f32 1.5, %v75
  %v77 = vmul.f32 %v72, %v76
  %vm78 = vweird.f32 %v70
  %vm79 = vweird.f32 %v72
  %vm80 = vmor %vm78, %vm79
  %v81 = vsel %vm80, %v72, %v77
  %v82 = vrsqrt.pop %v71
  %v83 = vmul.f32 %v82, %v71
  %v84 = vmul.f32 %v83, %v82
  %v85 = vmul.f32 0.5, %v84
  %v86 = vsub.f32 1.5, %v85
  %v87 = vmul.f32 %v82, %v86
  %vm88 = vweird.f32 %v71
  %vm89 = vweird.f32 %v82
  %vm90 = vmor %vm88, %vm89
  %v91 = vsel %vm90, %v82, %v87
  %v92 = vmul.f32 %v58, %v81
  %v93 = vmul.f32 %v59, %v91
  %v94 = vld [vmem:[%s2] sm:$0x1]
  %v96 = vperm.slane %v94, 0
  %v98 = vmul.f32 %v92, %v96
  %v99 = vmul.f32 %v93, %v96
  %v100 = vld [vmem:[%s3] sm:$0x1]
  %v102 = vperm.slane %v100, 0
  %v104 = vadd.f32 %v98, %v102
  %v105 = vadd.f32 %v99, %v102
  %v106 = vmul.f32 %v36, %v36
  %v107 = vmul.f32 %v37, %v37
  %v108 = vmul.f32 %v38, %v38
  %v109 = vmul.f32 %v39, %v39
  %v110 = vadd.f32 %v106, %v108
  %v111 = vadd.f32 %v107, %v109
  %v112 = vmul.f32 %v40, %v40
  %v113 = vmul.f32 %v41, %v41
  %v114 = vadd.f32 %v110, %v112
  %v115 = vadd.f32 %v111, %v113
  %v116 = vmax.f32 %v114, 1e-08
  %v117 = vmax.f32 %v115, 1e-08
  %vm118 = vcmask 23552
  %v119 = vsel %vm118, %v116, 0.0
  %120 = vadd.xlane.f32.xlu0 %v119
  %v121 = vpop.xlane.xlu0 %120
  %v122 = vsel %vm118, %v117, 0.0
  %123 = vadd.xlane.f32.xlu0 %v122
  %v124 = vpop.xlane.xlu0 %123
  %v125 = vrcp.pop 3.0
  %v126 = vmul.f32 3.0, %v125
  %v127 = vsub.f32 1.0, %v126
  %v128 = vmul.f32 %v125, %v127
  %v129 = vadd.f32 %v125, %v128
  %vm130 = vweird.f32 %v125
  %v131 = vsel %vm130, %v125, %v129
  %v132 = vmul.f32 %v121, %v131
  %v133 = vmul.f32 %v124, %v131
  %v134 = vrsqrt.pop %v132
  %v135 = vmul.f32 %v134, %v132
  %v136 = vmul.f32 %v135, %v134
  %v137 = vmul.f32 0.5, %v136
  %v138 = vsub.f32 1.5, %v137
  %v139 = vmul.f32 %v134, %v138
  %vm140 = vweird.f32 %v132
  %vm141 = vweird.f32 %v134
  %vm142 = vmor %vm140, %vm141
  %v143 = vsel %vm142, %v134, %v139
  %v144 = vrsqrt.pop %v133
  %v145 = vmul.f32 %v144, %v133
  %v146 = vmul.f32 %v145, %v144
  %v147 = vmul.f32 0.5, %v146
  %v148 = vsub.f32 1.5, %v147
  %v149 = vmul.f32 %v144, %v148
  %vm150 = vweird.f32 %v133
  %vm151 = vweird.f32 %v144
  %vm152 = vmor %vm150, %vm151
  %v153 = vsel %vm152, %v144, %v149
  %155 = vset.pattern.permute.xlu0 0
  %156 = vperm.xlu0 %155, %v143
  %v157 = vpop.permute.xlu0 %156
  %160 = vset.pattern.permute.xlu0 0
  %161 = vperm.xlu0 %160, %v153
  %v162 = vpop.permute.xlu0 %161
  %v164 = vmul.f32 %v36, %v157
  %v165 = vmul.f32 %v37, %v162
  %v166 = vmul.f32 %v38, %v157
  %v167 = vmul.f32 %v39, %v162
  %v168 = vmul.f32 %v40, %v157
  %v169 = vmul.f32 %v41, %v162
  %v170 = vld [vmem:[%s4] sm:$0x7]
  %v172 = vsel %vm118, %v164, 0
  %v175 = vsel %vm118, %v165, 0
  %v178 = vsel %vm118, %v166, 0
  %v181 = vsel %vm118, %v167, 0
  %v184 = vsel %vm118, %v168, 0
  %v187 = vsel %vm118, %v169, 0
  %vm189 = vcmask 1042432
  %v191 = vsel %vm189, %v170, 0
  %193 = vmatpush.msra.mxu0 0.0
  %194 = vmatpush.msra.mxu0 0.0
  %195 = vmatpush.msra.mxu0 0.0
  %196 = vmatpush.msra.mxu0 0.0
  %197 = vmatpush.msra.mxu0 0.0
  %198 = vmatpush.msra.mxu0 0.0
  %199 = vmatpush.msra.mxu0 0.0
  %200 = vmatpush.msra.mxu0 0.0
  %201 = vmatpush.msra.mxu0 0.0
  %202 = vmatpush.msra.mxu0 0.0
  %203 = vmatpush.msra.mxu0 0.0
  %204 = vmatpush.msra.mxu0 0.0
  %205 = vmatpush.msra.mxu0 0.0
  %206 = vmatpush.msra.mxu0 0.0
  %207 = vmatpush.msra.mxu0 0.0
  %208 = vmatpush.msra.mxu0 %v191
  %209 = vmatmul.f32.gmra.mxu0 %v172
  %v210 = vpop.f32.mrf.mxu0
  %v211 = vadd.f32 0.0, %v210
  %212 = vmatmul.f32.gmra.mxu0 %v175
  %v213 = vpop.f32.mrf.mxu0
  %v214 = vadd.f32 0.0, %v213
  %215 = vmatmul.f32.gmra.mxu0 %v178
  %v216 = vpop.f32.mrf.mxu0
  %v217 = vadd.f32 0.0, %v216
  %218 = vmatmul.f32.gmra.mxu0 %v181
  %v219 = vpop.f32.mrf.mxu0
  %v220 = vadd.f32 0.0, %v219
  %221 = vmatmul.f32.gmra.mxu0 %v184
  %v222 = vpop.f32.mrf.mxu0
  %v223 = vadd.f32 0.0, %v222
  %224 = vmatmul.f32.gmra.mxu0 %v187
  %v225 = vpop.f32.mrf.mxu0
  %v226 = vadd.f32 0.0, %v225
  %227 = vdwg.mxu0
  %v228 = vmul.f32 %v211, %v211
  %v229 = vmul.f32 %v214, %v214
  %v230 = vmul.f32 %v217, %v217
  %v231 = vmul.f32 %v220, %v220
  %v232 = vadd.f32 %v228, %v230
  %v233 = vadd.f32 %v229, %v231
  %v234 = vmul.f32 %v223, %v223
  %v235 = vmul.f32 %v226, %v226
  %v236 = vadd.f32 %v232, %v234
  %v237 = vadd.f32 %v233, %v235
  %v238 = vmax.f32 %v236, 1e-08
  %v239 = vmax.f32 %v237, 1e-08
  %v240 = vrsqrt.pop %v238
  %v241 = vmul.f32 %v240, %v238
  %v242 = vmul.f32 %v241, %v240
  %v243 = vmul.f32 0.5, %v242
  %v244 = vsub.f32 1.5, %v243
  %v245 = vmul.f32 %v240, %v244
  %v246 = vmul.f32 %v238, %v245
  %vm247 = vcmp.eq.f32.partialorder %v238, inf
  %v248 = vsel %vm247, %v238, %v246
  %vm249 = vcmp.eq.f32.partialorder %v238, 0.0
  %v250 = vand.u32 %v238, 2147483648
  %v251 = vsel %vm249, %v250, %v248
  %v252 = vrsqrt.pop %v239
  %v253 = vmul.f32 %v252, %v239
  %v254 = vmul.f32 %v253, %v252
  %v255 = vmul.f32 0.5, %v254
  %v256 = vsub.f32 1.5, %v255
  %v257 = vmul.f32 %v252, %v256
  %v258 = vmul.f32 %v239, %v257
  %vm259 = vcmp.eq.f32.partialorder %v239, inf
  %v260 = vsel %vm259, %v239, %v258
  %vm261 = vcmp.eq.f32.partialorder %v239, 0.0
  %v262 = vand.u32 %v239, 2147483648
  %v263 = vsel %vm261, %v262, %v260
  %v264 = vld [vmem:[%s5] sm:$0xff]
  %v265 = vld [vmem:[%s5 + $0x8] sm:$0xff]
  %v266 = vld [vmem:[%s5 + $0x10] sm:$0xff]
  %v267 = vld [vmem:[%s5 + $0x18] sm:$0xff]
  %v268 = vld [vmem:[%s5 + $0x20] sm:$0xff]
  %v269 = vld [vmem:[%s5 + $0x28] sm:$0xff]
  %v270 = vld [vmem:[%s5 + $0x30] sm:$0xf]
  %v271 = vld [vmem:[%s6] sm:$0xf]
  %vm272 = vcmask 31744
  %v274 = vsel %vm272, %v251, 0
  %v277 = vsel %vm272, %v263, 0
  %vm279 = vcmask 1043456
  %v281 = vsel %vm279, %v271, 0
  %283 = vmatpush.msra.mxu0 0.0
  %284 = vmatpush.msra.mxu0 0.0
  %285 = vmatpush.msra.mxu0 0.0
  %286 = vmatpush.msra.mxu0 0.0
  %287 = vmatpush.msra.mxu0 0.0
  %288 = vmatpush.msra.mxu0 0.0
  %289 = vmatpush.msra.mxu0 0.0
  %290 = vmatpush.msra.mxu0 0.0
  %291 = vmatpush.msra.mxu0 0.0
  %292 = vmatpush.msra.mxu0 0.0
  %293 = vmatpush.msra.mxu0 0.0
  %294 = vmatpush.msra.mxu0 0.0
  %295 = vmatpush.msra.mxu0 0.0
  %296 = vmatpush.msra.mxu0 0.0
  %297 = vmatpush.msra.mxu0 0.0
  %298 = vmatpush.msra.mxu0 %v281
  %299 = vmatmul.f32.gmra.mxu0 %v274
  %v300 = vpop.f32.mrf.mxu0
  %v301 = vadd.f32 0.0, %v300
  %302 = vmatmul.f32.gmra.mxu0 %v277
  %v303 = vpop.f32.mrf.mxu0
  %v304 = vadd.f32 0.0, %v303
  %305 = vdwg.mxu0
  %v307 = vsel %vm42, %v104, 0
  %v310 = vsel %vm42, %v105, 0
  %v313 = vsel %vm279, %v270, 0
  %315 = vmatpush.msra.mxu0 0.0
  %316 = vmatpush.msra.mxu0 0.0
  %317 = vmatpush.msra.mxu0 0.0
  %318 = vmatpush.msra.mxu0 0.0
  %319 = vmatpush.msra.mxu0 0.0
  %320 = vmatpush.msra.mxu0 0.0
  %321 = vmatpush.msra.mxu0 0.0
  %322 = vmatpush.msra.mxu0 0.0
  %323 = vmatpush.msra.mxu0 0.0
  %324 = vmatpush.msra.mxu0 %v313
  %325 = vmatpush.msra.mxu0 %v269
  %326 = vmatpush.msra.mxu0 %v268
  %327 = vmatpush.msra.mxu0 %v267
  %328 = vmatpush.msra.mxu0 %v266
  %329 = vmatpush.msra.mxu0 %v265
  %330 = vmatpush.msra.mxu0 %v264
  %331 = vmatmul.f32.gmra.mxu0 %v307
  %v332 = vpop.f32.mrf.mxu0
  %v333 = vadd.f32 %v301, %v332
  %334 = vmatmul.f32.gmra.mxu0 %v310
  %v335 = vpop.f32.mrf.mxu0
  %v336 = vadd.f32 %v304, %v335
  %337 = vdwg.mxu0
  %v338 = vld [vmem:[%s7] sm:$0x1]
  %v340 = vperm.slane %v338, 0
  %v342 = vadd.f32 %v333, %v340
  %v343 = vadd.f32 %v336, %v340
  %vm344 = vcmask 261120
  %345 = vst.msk [vmem:[%s9] sm:$0xff] %vm344, %v342
  %346 = vst.msk [vmem:[%s9 + $0x8] sm:$0xff] %vm344, %v343
  %v347 = vld [vmem:[%s8] sm:$0xf]
  %v349 = vsel %vm272, %v211, 0
  %v352 = vsel %vm272, %v214, 0
  %v355 = vsel %vm272, %v217, 0
  %v358 = vsel %vm272, %v220, 0
  %v361 = vsel %vm272, %v223, 0
  %v364 = vsel %vm272, %v226, 0
  %v367 = vsel %vm279, %v347, 0
  %369 = vmatpush.msra.mxu0 0.0
  %370 = vmatpush.msra.mxu0 0.0
  %371 = vmatpush.msra.mxu0 0.0
  %372 = vmatpush.msra.mxu0 0.0
  %373 = vmatpush.msra.mxu0 0.0
  %374 = vmatpush.msra.mxu0 0.0
  %375 = vmatpush.msra.mxu0 0.0
  %376 = vmatpush.msra.mxu0 0.0
  %377 = vmatpush.msra.mxu0 0.0
  %378 = vmatpush.msra.mxu0 0.0
  %379 = vmatpush.msra.mxu0 0.0
  %380 = vmatpush.msra.mxu0 0.0
  %381 = vmatpush.msra.mxu0 0.0
  %382 = vmatpush.msra.mxu0 0.0
  %383 = vmatpush.msra.mxu0 0.0
  %384 = vmatpush.msra.mxu0 %v367
  %385 = vmatmul.f32.gmra.mxu0 %v349
  %v386 = vpop.f32.mrf.mxu0
  %v387 = vadd.f32 0.0, %v386
  %388 = vmatmul.f32.gmra.mxu0 %v352
  %v389 = vpop.f32.mrf.mxu0
  %v390 = vadd.f32 0.0, %v389
  %391 = vmatmul.f32.gmra.mxu0 %v355
  %v392 = vpop.f32.mrf.mxu0
  %v393 = vadd.f32 0.0, %v392
  %394 = vmatmul.f32.gmra.mxu0 %v358
  %v395 = vpop.f32.mrf.mxu0
  %v396 = vadd.f32 0.0, %v395
  %397 = vmatmul.f32.gmra.mxu0 %v361
  %v398 = vpop.f32.mrf.mxu0
  %v399 = vadd.f32 0.0, %v398
  %400 = vmatmul.f32.gmra.mxu0 %v364
  %v401 = vpop.f32.mrf.mxu0
  %v402 = vadd.f32 0.0, %v401
  %403 = vdwg.mxu0
  %404 = vst.msk [vmem:[%s10] sm:$0xff] %vm272, %v387
  %405 = vst.msk [vmem:[%s10 + $0x8] sm:$0xff] %vm272, %v390
  %406 = vst.msk [vmem:[%s10 + $0x10] sm:$0xff] %vm272, %v393
  %407 = vst.msk [vmem:[%s10 + $0x18] sm:$0xff] %vm272, %v396
  %408 = vst.msk [vmem:[%s10 + $0x20] sm:$0xff] %vm272, %v399
  %409 = vst.msk [vmem:[%s10 + $0x28] sm:$0xff] %vm272, %v402
  // Predicated region
  $region38: #{dynamics_forward.13} parent=0 // pred_check
    _
  $region39: #{dynamics_forward.13} parent=0 // pred_check_branch
    %411 = sbr.rel (0) target = $region41
  $region40: #{dynamics_forward.13} parent=0 // pred_region
    _
  $region41: #{dynamics_forward.13} parent=0 // pred_fallthru
    _
  // Predicated region
  $region42: #{dynamics_forward.13} parent=0 // pred_check
    _
  $region43: #{dynamics_forward.13} parent=0 // pred_check_branch
    %413 = sbr.rel (0) target = $region45
  $region44: #{dynamics_forward.13} parent=0 // pred_region
    _
  $region45: #{dynamics_forward.13} parent=0 // pred_fallthru
    _
  // Predicated region
  $region46: #{dynamics_forward.13} parent=0 // pred_check
    _
  $region47: #{dynamics_forward.13} parent=0 // pred_check_branch
    %415 = sbr.rel (0) target = $region49
  $region48: #{dynamics_forward.13} parent=0 // pred_region
    _
  $region49: #{dynamics_forward.13} parent=0 // pred_fallthru
    _
  // Predicated region
  $region50: #{dynamics_forward.13} parent=0 // pred_check
    _
  $region51: #{dynamics_forward.13} parent=0 // pred_check_branch
    %417 = sbr.rel (0) target = $region53
  $region52: #{dynamics_forward.13} parent=0 // pred_region
    _
  $region53: #{dynamics_forward.13} parent=0 // pred_fallthru
    _

// kernel: dynamics_forward.14
$region0: #{dynamics_forward.14}
  #allocation0 [shape = 'u32[]', space=smem, size = 0x4, offset = 0x4, fixed_abs, tag = 'smem constant byte address 0x4 - core index']
  #allocation1 [shape = 'u32[72,128]{1,0:T(1,128)}', space=vmem, size = 0x9000, scoped, tag = 'internal scratch']
  %s0 = inlined_call_operand.vmem [shape: f32[32,16], index: 0, kind: input, shape index: {}]
  %s1 = inlined_call_operand.vmem [shape: f32[96,2], index: 1, kind: input, shape index: {}]
  %s2 = inlined_call_operand.vmem [shape: f32[1,16], index: 2, kind: input, shape index: {}]
  %s3 = inlined_call_operand.vmem [shape: f32[1,16], index: 3, kind: input, shape index: {}]
  %s4 = inlined_call_operand.vmem [shape: f32[2,2], index: 4, kind: input, shape index: {}]
  %s5 = inlined_call_operand.vmem [shape: f32[16,16], index: 5, kind: input, shape index: {}]
  %s6 = inlined_call_operand.vmem [shape: f32[2,16], index: 6, kind: input, shape index: {}]
  %s7 = inlined_call_operand.vmem [shape: f32[1,16], index: 7, kind: input, shape index: {}]
  %s8 = inlined_call_operand.vmem [shape: f32[2,2], index: 8, kind: input, shape index: {}]
  %s9 = inlined_call_operand.vmem [shape: f32[32,16], index: 9, kind: output, shape index: {0}]
  %s10 = inlined_call_operand.vmem [shape: f32[96,2], index: 10, kind: output, shape index: {1}]
  %11 = xla_tuple %s9, %s10
  %s12 = sld [smem:[#allocation0]]
  $region54: #{dynamics_forward.14} parent=0
    _
  %s14 = ssub.s32 1, %s12
  %s15 = scalar_select 0, %s14, %s12
  // Predicated region
  $region2: #{dynamics_forward.14} parent=0 // pred_check
    _
  $region3: #{dynamics_forward.14} parent=0 // pred_check_branch
    %17 = sbr.rel (0) target = $region5
  $region4: #{dynamics_forward.14} parent=0 // pred_region
    _
  $region5: #{dynamics_forward.14} parent=0 // pred_fallthru
    _
  // Predicated region
  $region6: #{dynamics_forward.14} parent=0 // pred_check
    _
  $region7: #{dynamics_forward.14} parent=0 // pred_check_branch
    %19 = sbr.rel (0) target = $region9
  $region8: #{dynamics_forward.14} parent=0 // pred_region
    _
  $region9: #{dynamics_forward.14} parent=0 // pred_fallthru
    _
  // Predicated region
  $region10: #{dynamics_forward.14} parent=0 // pred_check
    _
  $region11: #{dynamics_forward.14} parent=0 // pred_check_branch
    %21 = sbr.rel (0) target = $region13
  $region12: #{dynamics_forward.14} parent=0 // pred_region
    _
  $region13: #{dynamics_forward.14} parent=0 // pred_fallthru
    _
  // Predicated region
  $region14: #{dynamics_forward.14} parent=0 // pred_check
    _
  $region15: #{dynamics_forward.14} parent=0 // pred_check_branch
    %23 = sbr.rel (0) target = $region17
  $region16: #{dynamics_forward.14} parent=0 // pred_region
    _
  $region17: #{dynamics_forward.14} parent=0 // pred_fallthru
    _
  // Predicated region
  $region18: #{dynamics_forward.14} parent=0 // pred_check
    _
  $region19: #{dynamics_forward.14} parent=0 // pred_check_branch
    %25 = sbr.rel (0) target = $region21
  $region20: #{dynamics_forward.14} parent=0 // pred_region
    _
  $region21: #{dynamics_forward.14} parent=0 // pred_fallthru
    _
  // Predicated region
  $region22: #{dynamics_forward.14} parent=0 // pred_check
    _
  $region23: #{dynamics_forward.14} parent=0 // pred_check_branch
    %27 = sbr.rel (0) target = $region25
  $region24: #{dynamics_forward.14} parent=0 // pred_region
    _
  $region25: #{dynamics_forward.14} parent=0 // pred_fallthru
    _
  // Predicated region
  $region26: #{dynamics_forward.14} parent=0 // pred_check
    _
  $region27: #{dynamics_forward.14} parent=0 // pred_check_branch
    %29 = sbr.rel (0) target = $region29
  $region28: #{dynamics_forward.14} parent=0 // pred_region
    _
  $region29: #{dynamics_forward.14} parent=0 // pred_fallthru
    _
  // Predicated region
  $region30: #{dynamics_forward.14} parent=0 // pred_check
    _
  $region31: #{dynamics_forward.14} parent=0 // pred_check_branch
    %31 = sbr.rel (0) target = $region33
  $region32: #{dynamics_forward.14} parent=0 // pred_region
    _
  $region33: #{dynamics_forward.14} parent=0 // pred_fallthru
    _
  // Predicated region
  $region34: #{dynamics_forward.14} parent=0 // pred_check
    _
  $region35: #{dynamics_forward.14} parent=0 // pred_check_branch
    %33 = sbr.rel (0) target = $region37
  $region36: #{dynamics_forward.14} parent=0 // pred_region
    _
  $region37: #{dynamics_forward.14} parent=0 // pred_fallthru
    _
  %v34 = vld [vmem:[%s0] sm:$0xff]
  %v35 = vld [vmem:[%s0 + $0x8] sm:$0xff]
  %v36 = vld [vmem:[%s0 + $0x10] sm:$0xff]
  %v37 = vld [vmem:[%s0 + $0x18] sm:$0xff]
  %v38 = vld [vmem:[%s1] sm:$0xff]
  %v39 = vld [vmem:[%s1 + $0x8] sm:$0xff]
  %v40 = vld [vmem:[%s1 + $0x10] sm:$0xff]
  %v41 = vld [vmem:[%s1 + $0x18] sm:$0xff]
  %v42 = vld [vmem:[%s1 + $0x20] sm:$0xff]
  %v43 = vld [vmem:[%s1 + $0x28] sm:$0xff]
  %v44 = vld [vmem:[%s1 + $0x30] sm:$0xff]
  %v45 = vld [vmem:[%s1 + $0x38] sm:$0xff]
  %v46 = vld [vmem:[%s1 + $0x40] sm:$0xff]
  %v47 = vld [vmem:[%s1 + $0x48] sm:$0xff]
  %v48 = vld [vmem:[%s1 + $0x50] sm:$0xff]
  %v49 = vld [vmem:[%s1 + $0x58] sm:$0xff]
  %vm50 = vcmask 130048
  %v51 = vsel %vm50, %v34, 0.0
  %52 = vadd.xlane.f32.xlu0 %v51
  %v53 = vpop.xlane.xlu0 %52
  %v54 = vsel %vm50, %v35, 0.0
  %55 = vadd.xlane.f32.xlu0 %v54
  %v56 = vpop.xlane.xlu0 %55
  %v57 = vsel %vm50, %v36, 0.0
  %58 = vadd.xlane.f32.xlu0 %v57
  %v59 = vpop.xlane.xlu0 %58
  %v60 = vsel %vm50, %v37, 0.0
  %61 = vadd.xlane.f32.xlu0 %v60
  %v62 = vpop.xlane.xlu0 %61
  %v63 = vrcp.pop 16.0
  %v64 = vmul.f32 16.0, %v63
  %v65 = vsub.f32 1.0, %v64
  %v66 = vmul.f32 %v63, %v65
  %v67 = vadd.f32 %v63, %v66
  %vm68 = vweird.f32 %v63
  %v69 = vsel %vm68, %v63, %v67
  %v70 = vmul.f32 %v53, %v69
  %v71 = vmul.f32 %v56, %v69
  %v72 = vmul.f32 %v59, %v69
  %v73 = vmul.f32 %v62, %v69
  %v74 = vsub.f32 %v34, %v70
  %v75 = vsub.f32 %v35, %v71
  %v76 = vsub.f32 %v36, %v72
  %v77 = vsub.f32 %v37, %v73
  %v78 = vmul.f32 %v74, %v74
  %v79 = vmul.f32 %v75, %v75
  %v80 = vmul.f32 %v76, %v76
  %v81 = vmul.f32 %v77, %v77
  %v82 = vsel %vm50, %v78, 0.0
  %83 = vadd.xlane.f32.xlu0 %v82
  %v84 = vpop.xlane.xlu0 %83
  %v85 = vsel %vm50, %v79, 0.0
  %86 = vadd.xlane.f32.xlu0 %v85
  %v87 = vpop.xlane.xlu0 %86
  %v88 = vsel %vm50, %v80, 0.0
  %89 = vadd.xlane.f32.xlu0 %v88
  %v90 = vpop.xlane.xlu0 %89
  %v91 = vsel %vm50, %v81, 0.0
  %92 = vadd.xlane.f32.xlu0 %v91
  %v93 = vpop.xlane.xlu0 %92
  %v94 = vmul.f32 %v84, %v69
  %v95 = vmul.f32 %v87, %v69
  %v96 = vmul.f32 %v90, %v69
  %v97 = vmul.f32 %v93, %v69
  %v98 = vadd.f32 %v94, 1e-05
  %v99 = vadd.f32 %v95, 1e-05
  %v100 = vadd.f32 %v96, 1e-05
  %v101 = vadd.f32 %v97, 1e-05
  %v102 = vrsqrt.pop %v98
  %v103 = vmul.f32 %v102, %v98
  %v104 = vmul.f32 %v103, %v102
  %v105 = vmul.f32 0.5, %v104
  %v106 = vsub.f32 1.5, %v105
  %v107 = vmul.f32 %v102, %v106
  %vm108 = vweird.f32 %v98
  %vm109 = vweird.f32 %v102
  %vm110 = vmor %vm108, %vm109
  %v111 = vsel %vm110, %v102, %v107
  %v112 = vrsqrt.pop %v99
  %v113 = vmul.f32 %v112, %v99
  %v114 = vmul.f32 %v113, %v112
  %v115 = vmul.f32 0.5, %v114
  %v116 = vsub.f32 1.5, %v115
  %v117 = vmul.f32 %v112, %v116
  %vm118 = vweird.f32 %v99
  %vm119 = vweird.f32 %v112
  %vm120 = vmor %vm118, %vm119
  %v121 = vsel %vm120, %v112, %v117
  %v122 = vrsqrt.pop %v100
  %v123 = vmul.f32 %v122, %v100
  %v124 = vmul.f32 %v123, %v122
  %v125 = vmul.f32 0.5, %v124
  %v126 = vsub.f32 1.5, %v125
  %v127 = vmul.f32 %v122, %v126
  %vm128 = vweird.f32 %v100
  %vm129 = vweird.f32 %v122
  %vm130 = vmor %vm128, %vm129
  %v131 = vsel %vm130, %v122, %v127
  %v132 = vrsqrt.pop %v101
  %v133 = vmul.f32 %v132, %v101
  %v134 = vmul.f32 %v133, %v132
  %v135 = vmul.f32 0.5, %v134
  %v136 = vsub.f32 1.5, %v135
  %v137 = vmul.f32 %v132, %v136
  %vm138 = vweird.f32 %v101
  %vm139 = vweird.f32 %v132
  %vm140 = vmor %vm138, %vm139
  %v141 = vsel %vm140, %v132, %v137
  %v142 = vmul.f32 %v74, %v111
  %v143 = vmul.f32 %v75, %v121
  %v144 = vmul.f32 %v76, %v131
  %v145 = vmul.f32 %v77, %v141
  %v146 = vld [vmem:[%s2] sm:$0x1]
  %v148 = vperm.slane %v146, 0
  %v150 = vmul.f32 %v142, %v148
  %v151 = vmul.f32 %v143, %v148
  %v152 = vmul.f32 %v144, %v148
  %v153 = vmul.f32 %v145, %v148
  %v154 = vld [vmem:[%s3] sm:$0x1]
  %v156 = vperm.slane %v154, 0
  %v158 = vadd.f32 %v150, %v156
  %v159 = vadd.f32 %v151, %v156
  %v160 = vadd.f32 %v152, %v156
  %v161 = vadd.f32 %v153, %v156
  %v162 = vmul.f32 %v38, %v38
  %v163 = vmul.f32 %v39, %v39
  %v164 = vmul.f32 %v40, %v40
  %v165 = vmul.f32 %v41, %v41
  %v166 = vmul.f32 %v42, %v42
  %v167 = vmul.f32 %v43, %v43
  %v168 = vmul.f32 %v44, %v44
  %v169 = vmul.f32 %v45, %v45
  %v170 = vadd.f32 %v162, %v166
  %v171 = vadd.f32 %v163, %v167
  %v172 = vadd.f32 %v164, %v168
  %v173 = vadd.f32 %v165, %v169
  %v174 = vmul.f32 %v46, %v46
  %v175 = vmul.f32 %v47, %v47
  %v176 = vmul.f32 %v48, %v48
  %v177 = vmul.f32 %v49, %v49
  %v178 = vadd.f32 %v170, %v174
  %v179 = vadd.f32 %v171, %v175
  %v180 = vadd.f32 %v172, %v176
  %v181 = vadd.f32 %v173, %v177
  %v182 = vmax.f32 %v178, 1e-08
  %v183 = vmax.f32 %v179, 1e-08
  %v184 = vmax.f32 %v180, 1e-08
  %v185 = vmax.f32 %v181, 1e-08
  %vm186 = vcmask 15360
  %v187 = vsel %vm186, %v182, 0.0
  %188 = vadd.xlane.f32.xlu0 %v187
  %v189 = vpop.xlane.xlu0 %188
  %v190 = vsel %vm186, %v183, 0.0
  %191 = vadd.xlane.f32.xlu0 %v190
  %v192 = vpop.xlane.xlu0 %191
  %v193 = vsel %vm186, %v184, 0.0
  %194 = vadd.xlane.f32.xlu0 %v193
  %v195 = vpop.xlane.xlu0 %194
  %v196 = vsel %vm186, %v185, 0.0
  %197 = vadd.xlane.f32.xlu0 %v196
  %v198 = vpop.xlane.xlu0 %197
  %v199 = vrcp.pop 2.0
  %v200 = vmul.f32 2.0, %v199
  %v201 = vsub.f32 1.0, %v200
  %v202 = vmul.f32 %v199, %v201
  %v203 = vadd.f32 %v199, %v202
  %vm204 = vweird.f32 %v199
  %v205 = vsel %vm204, %v199, %v203
  %v206 = vmul.f32 %v189, %v205
  %v207 = vmul.f32 %v192, %v205
  %v208 = vmul.f32 %v195, %v205
  %v209 = vmul.f32 %v198, %v205
  %v210 = vrsqrt.pop %v206
  %v211 = vmul.f32 %v210, %v206
  %v212 = vmul.f32 %v211, %v210
  %v213 = vmul.f32 0.5, %v212
  %v214 = vsub.f32 1.5, %v213
  %v215 = vmul.f32 %v210, %v214
  %vm216 = vweird.f32 %v206
  %vm217 = vweird.f32 %v210
  %vm218 = vmor %vm216, %vm217
  %v219 = vsel %vm218, %v210, %v215
  %v220 = vrsqrt.pop %v207
  %v221 = vmul.f32 %v220, %v207
  %v222 = vmul.f32 %v221, %v220
  %v223 = vmul.f32 0.5, %v222
  %v224 = vsub.f32 1.5, %v223
  %v225 = vmul.f32 %v220, %v224
  %vm226 = vweird.f32 %v207
  %vm227 = vweird.f32 %v220
  %vm228 = vmor %vm226, %vm227
  %v229 = vsel %vm228, %v220, %v225
  %v230 = vrsqrt.pop %v208
  %v231 = vmul.f32 %v230, %v208
  %v232 = vmul.f32 %v231, %v230
  %v233 = vmul.f32 0.5, %v232
  %v234 = vsub.f32 1.5, %v233
  %v235 = vmul.f32 %v230, %v234
  %vm236 = vweird.f32 %v208
  %vm237 = vweird.f32 %v230
  %vm238 = vmor %vm236, %vm237
  %v239 = vsel %vm238, %v230, %v235
  %v240 = vrsqrt.pop %v209
  %v241 = vmul.f32 %v240, %v209
  %v242 = vmul.f32 %v241, %v240
  %v243 = vmul.f32 0.5, %v242
  %v244 = vsub.f32 1.5, %v243
  %v245 = vmul.f32 %v240, %v244
  %vm246 = vweird.f32 %v209
  %vm247 = vweird.f32 %v240
  %vm248 = vmor %vm246, %vm247
  %v249 = vsel %vm248, %v240, %v245
  %251 = vset.pattern.permute.xlu0 0
  %252 = vperm.xlu0 %251, %v219
  %v253 = vpop.permute.xlu0 %252
  %256 = vset.pattern.permute.xlu0 0
  %257 = vperm.xlu0 %256, %v229
  %v258 = vpop.permute.xlu0 %257
  %261 = vset.pattern.permute.xlu0 0
  %262 = vperm.xlu0 %261, %v239
  %v263 = vpop.permute.xlu0 %262
  %266 = vset.pattern.permute.xlu0 0
  %267 = vperm.xlu0 %266, %v249
  %v268 = vpop.permute.xlu0 %267
  %v270 = vmul.f32 %v38, %v253
  %v271 = vmul.f32 %v39, %v258
  %v272 = vmul.f32 %v40, %v263
  %v273 = vmul.f32 %v41, %v268
  %v274 = vmul.f32 %v42, %v253
  %v275 = vmul.f32 %v43, %v258
  %v276 = vmul.f32 %v44, %v263
  %v277 = vmul.f32 %v45, %v268
  %v278 = vmul.f32 %v46, %v253
  %v279 = vmul.f32 %v47, %v258
  %v280 = vmul.f32 %v48, %v263
  %v281 = vmul.f32 %v49, %v268
  %v282 = vld [vmem:[%s4] sm:$0x3]
  %v284 = vsel %vm186, %v270, 0
  %v287 = vsel %vm186, %v271, 0
  %v290 = vsel %vm186, %v272, 0
  %v293 = vsel %vm186, %v273, 0
  %v296 = vsel %vm186, %v274, 0
  %v299 = vsel %vm186, %v275, 0
  %v302 = vsel %vm186, %v276, 0
  %v305 = vsel %vm186, %v277, 0
  %v308 = vsel %vm186, %v278, 0
  %v311 = vsel %vm186, %v279, 0
  %v314 = vsel %vm186, %v280, 0
  %v317 = vsel %vm186, %v281, 0
  %vm319 = vcmask 1041408
  %v321 = vsel %vm319, %v282, 0
  %323 = vmatpush.msra.mxu0 0.0
  %324 = vmatpush.msra.mxu0 0.0
  %325 = vmatpush.msra.mxu0 0.0
  %326 = vmatpush.msra.mxu0 0.0
  %327 = vmatpush.msra.mxu0 0.0
  %328 = vmatpush.msra.mxu0 0.0
  %329 = vmatpush.msra.mxu0 0.0
  %330 = vmatpush.msra.mxu0 0.0
  %331 = vmatpush.msra.mxu0 0.0
  %332 = vmatpush.msra.mxu0 0.0
  %333 = vmatpush.msra.mxu0 0.0
  %334 = vmatpush.msra.mxu0 0.0
  %335 = vmatpush.msra.mxu0 0.0
  %336 = vmatpush.msra.mxu0 0.0
  %337 = vmatpush.msra.mxu0 0.0
  %338 = vmatpush.msra.mxu0 %v321
  %339 = vmatmul.f32.gmra.mxu0 %v284
  %v340 = vpop.f32.mrf.mxu0
  %v341 = vadd.f32 0.0, %v340
  %342 = vmatmul.f32.gmra.mxu0 %v287
  %v343 = vpop.f32.mrf.mxu0
  %v344 = vadd.f32 0.0, %v343
  %345 = vmatmul.f32.gmra.mxu0 %v290
  %v346 = vpop.f32.mrf.mxu0
  %v347 = vadd.f32 0.0, %v346
  %348 = vmatmul.f32.gmra.mxu0 %v293
  %v349 = vpop.f32.mrf.mxu0
  %v350 = vadd.f32 0.0, %v349
  %351 = vmatmul.f32.gmra.mxu0 %v296
  %v352 = vpop.f32.mrf.mxu0
  %v353 = vadd.f32 0.0, %v352
  %354 = vmatmul.f32.gmra.mxu0 %v299
  %v355 = vpop.f32.mrf.mxu0
  %v356 = vadd.f32 0.0, %v355
  %357 = vmatmul.f32.gmra.mxu0 %v302
  %v358 = vpop.f32.mrf.mxu0
  %v359 = vadd.f32 0.0, %v358
  %360 = vmatmul.f32.gmra.mxu0 %v305
  %v361 = vpop.f32.mrf.mxu0
  %v362 = vadd.f32 0.0, %v361
  %363 = vmatmul.f32.gmra.mxu0 %v308
  %v364 = vpop.f32.mrf.mxu0
  %v365 = vadd.f32 0.0, %v364
  %366 = vmatmul.f32.gmra.mxu0 %v311
  %v367 = vpop.f32.mrf.mxu0
  %v368 = vadd.f32 0.0, %v367
  %369 = vmatmul.f32.gmra.mxu0 %v314
  %v370 = vpop.f32.mrf.mxu0
  %v371 = vadd.f32 0.0, %v370
  %372 = vmatmul.f32.gmra.mxu0 %v317
  %v373 = vpop.f32.mrf.mxu0
  %v374 = vadd.f32 0.0, %v373
  %375 = vdwg.mxu0
  %v376 = vmul.f32 %v341, %v341
  %v377 = vmul.f32 %v344, %v344
  %v378 = vmul.f32 %v347, %v347
  %v379 = vmul.f32 %v350, %v350
  %v380 = vmul.f32 %v353, %v353
  %v381 = vmul.f32 %v356, %v356
  %v382 = vmul.f32 %v359, %v359
  %v383 = vmul.f32 %v362, %v362
  %v384 = vadd.f32 %v376, %v380
  %v385 = vadd.f32 %v377, %v381
  %v386 = vadd.f32 %v378, %v382
  %v387 = vadd.f32 %v379, %v383
  %v388 = vmul.f32 %v365, %v365
  %v389 = vmul.f32 %v368, %v368
  %v390 = vmul.f32 %v371, %v371
  %v391 = vmul.f32 %v374, %v374
  %v392 = vadd.f32 %v384, %v388
  %v393 = vadd.f32 %v385, %v389
  %v394 = vadd.f32 %v386, %v390
  %v395 = vadd.f32 %v387, %v391
  %v396 = vmax.f32 %v392, 1e-08
  %v397 = vmax.f32 %v393, 1e-08
  %v398 = vmax.f32 %v394, 1e-08
  %v399 = vmax.f32 %v395, 1e-08
  %v400 = vrsqrt.pop %v396
  %v401 = vmul.f32 %v400, %v396
  %v402 = vmul.f32 %v401, %v400
  %v403 = vmul.f32 0.5, %v402
  %v404 = vsub.f32 1.5, %v403
  %v405 = vmul.f32 %v400, %v404
  %v406 = vmul.f32 %v396, %v405
  %vm407 = vcmp.eq.f32.partialorder %v396, inf
  %v408 = vsel %vm407, %v396, %v406
  %vm409 = vcmp.eq.f32.partialorder %v396, 0.0
  %v410 = vand.u32 %v396, 2147483648
  %v411 = vsel %vm409, %v410, %v408
  %v412 = vrsqrt.pop %v397
  %v413 = vmul.f32 %v412, %v397
  %v414 = vmul.f32 %v413, %v412
  %v415 = vmul.f32 0.5, %v414
  %v416 = vsub.f32 1.5, %v415
  %v417 = vmul.f32 %v412, %v416
  %v418 = vmul.f32 %v397, %v417
  %vm419 = vcmp.eq.f32.partialorder %v397, inf
  %v420 = vsel %vm419, %v397, %v418
  %vm421 = vcmp.eq.f32.partialorder %v397, 0.0
  %v422 = vand.u32 %v397, 2147483648
  %v423 = vsel %vm421, %v422, %v420
  %v424 = vrsqrt.pop %v398
  %v425 = vmul.f32 %v424, %v398
  %v426 = vmul.f32 %v425, %v424
  %v427 = vmul.f32 0.5, %v426
  %v428 = vsub.f32 1.5, %v427
  %v429 = vmul.f32 %v424, %v428
  %v430 = vmul.f32 %v398, %v429
  %vm431 = vcmp.eq.f32.partialorder %v398, inf
  %v432 = vsel %vm431, %v398, %v430
  %vm433 = vcmp.eq.f32.partialorder %v398, 0.0
  %v434 = vand.u32 %v398, 2147483648
  %v435 = vsel %vm433, %v434, %v432
  %v436 = vrsqrt.pop %v399
  %v437 = vmul.f32 %v436, %v399
  %v438 = vmul.f32 %v437, %v436
  %v439 = vmul.f32 0.5, %v438
  %v440 = vsub.f32 1.5, %v439
  %v441 = vmul.f32 %v436, %v440
  %v442 = vmul.f32 %v399, %v441
  %vm443 = vcmp.eq.f32.partialorder %v399, inf
  %v444 = vsel %vm443, %v399, %v442
  %vm445 = vcmp.eq.f32.partialorder %v399, 0.0
  %v446 = vand.u32 %v399, 2147483648
  %v447 = vsel %vm445, %v446, %v444
  %v448 = vld [vmem:[%s5] sm:$0xff]
  %v449 = vld [vmem:[%s5 + $0x8] sm:$0xff]
  %v450 = vld [vmem:[%s6] sm:$0x3]
  %v452 = vsel %vm186, %v411, 0
  %v455 = vsel %vm186, %v423, 0
  %v458 = vsel %vm186, %v435, 0
  %v461 = vsel %vm186, %v447, 0
  %v464 = vsel %vm319, %v450, 0
  %466 = vmatpush.msra.mxu0 0.0
  %467 = vmatpush.msra.mxu0 0.0
  %468 = vmatpush.msra.mxu0 0.0
  %469 = vmatpush.msra.mxu0 0.0
  %470 = vmatpush.msra.mxu0 0.0
  %471 = vmatpush.msra.mxu0 0.0
  %472 = vmatpush.msra.mxu0 0.0
  %473 = vmatpush.msra.mxu0 0.0
  %474 = vmatpush.msra.mxu0 0.0
  %475 = vmatpush.msra.mxu0 0.0
  %476 = vmatpush.msra.mxu0 0.0
  %477 = vmatpush.msra.mxu0 0.0
  %478 = vmatpush.msra.mxu0 0.0
  %479 = vmatpush.msra.mxu0 0.0
  %480 = vmatpush.msra.mxu0 0.0
  %481 = vmatpush.msra.mxu0 %v464
  %482 = vmatmul.f32.gmra.mxu0 %v452
  %v483 = vpop.f32.mrf.mxu0
  %v484 = vadd.f32 0.0, %v483
  %485 = vmatmul.f32.gmra.mxu0 %v455
  %v486 = vpop.f32.mrf.mxu0
  %v487 = vadd.f32 0.0, %v486
  %488 = vmatmul.f32.gmra.mxu0 %v458
  %v489 = vpop.f32.mrf.mxu0
  %v490 = vadd.f32 0.0, %v489
  %491 = vmatmul.f32.gmra.mxu0 %v461
  %v492 = vpop.f32.mrf.mxu0
  %v493 = vadd.f32 0.0, %v492
  %494 = vdwg.mxu0
  %v496 = vsel %vm50, %v158, 0
  %v499 = vsel %vm50, %v159, 0
  %v502 = vsel %vm50, %v160, 0
  %v505 = vsel %vm50, %v161, 0
  %507 = vmatpush.msra.mxu0 0.0
  %508 = vmatpush.msra.mxu0 0.0
  %509 = vmatpush.msra.mxu0 0.0
  %510 = vmatpush.msra.mxu0 0.0
  %511 = vmatpush.msra.mxu0 0.0
  %512 = vmatpush.msra.mxu0 0.0
  %513 = vmatpush.msra.mxu0 0.0
  %514 = vmatpush.msra.mxu0 0.0
  %515 = vmatpush.msra.mxu0 0.0
  %516 = vmatpush.msra.mxu0 0.0
  %517 = vmatpush.msra.mxu0 0.0
  %518 = vmatpush.msra.mxu0 0.0
  %519 = vmatpush.msra.mxu0 0.0
  %520 = vmatpush.msra.mxu0 0.0
  %521 = vmatpush.msra.mxu0 %v449
  %522 = vmatpush.msra.mxu0 %v448
  %523 = vmatmul.f32.gmra.mxu0 %v496
  %v524 = vpop.f32.mrf.mxu0
  %v525 = vadd.f32 %v484, %v524
  %526 = vmatmul.f32.gmra.mxu0 %v499
  %v527 = vpop.f32.mrf.mxu0
  %v528 = vadd.f32 %v487, %v527
  %529 = vmatmul.f32.gmra.mxu0 %v502
  %v530 = vpop.f32.mrf.mxu0
  %v531 = vadd.f32 %v490, %v530
  %532 = vmatmul.f32.gmra.mxu0 %v505
  %v533 = vpop.f32.mrf.mxu0
  %v534 = vadd.f32 %v493, %v533
  %535 = vdwg.mxu0
  %v536 = vld [vmem:[%s7] sm:$0x1]
  %v538 = vperm.slane %v536, 0
  %v540 = vadd.f32 %v525, %v538
  %v541 = vadd.f32 %v528, %v538
  %v542 = vadd.f32 %v531, %v538
  %v543 = vadd.f32 %v534, %v538
  %544 = vst.msk [vmem:[%s9] sm:$0xff] %vm50, %v540
  %545 = vst.msk [vmem:[%s9 + $0x8] sm:$0xff] %vm50, %v541
  %546 = vst.msk [vmem:[%s9 + $0x10] sm:$0xff] %vm50, %v542
  %547 = vst.msk [vmem:[%s9 + $0x18] sm:$0xff] %vm50, %v543
  %v548 = vld [vmem:[%s8] sm:$0x3]
  %v550 = vsel %vm186, %v341, 0
  %v553 = vsel %vm186, %v344, 0
  %v556 = vsel %vm186, %v347, 0
  %v559 = vsel %vm186, %v350, 0
  %v562 = vsel %vm186, %v353, 0
  %v565 = vsel %vm186, %v356, 0
  %v568 = vsel %vm186, %v359, 0
  %v571 = vsel %vm186, %v362, 0
  %v574 = vsel %vm186, %v365, 0
  %v577 = vsel %vm186, %v368, 0
  %v580 = vsel %vm186, %v371, 0
  %v583 = vsel %vm186, %v374, 0
  %v586 = vsel %vm319, %v548, 0
  %588 = vmatpush.msra.mxu0 0.0
  %589 = vmatpush.msra.mxu0 0.0
  %590 = vmatpush.msra.mxu0 0.0
  %591 = vmatpush.msra.mxu0 0.0
  %592 = vmatpush.msra.mxu0 0.0
  %593 = vmatpush.msra.mxu0 0.0
  %594 = vmatpush.msra.mxu0 0.0
  %595 = vmatpush.msra.mxu0 0.0
  %596 = vmatpush.msra.mxu0 0.0
  %597 = vmatpush.msra.mxu0 0.0
  %598 = vmatpush.msra.mxu0 0.0
  %599 = vmatpush.msra.mxu0 0.0
  %600 = vmatpush.msra.mxu0 0.0
  %601 = vmatpush.msra.mxu0 0.0
  %602 = vmatpush.msra.mxu0 0.0
  %603 = vmatpush.msra.mxu0 %v586
  %604 = vmatmul.f32.gmra.mxu0 %v550
  %v605 = vpop.f32.mrf.mxu0
  %v606 = vadd.f32 0.0, %v605
  %607 = vmatmul.f32.gmra.mxu0 %v553
  %v608 = vpop.f32.mrf.mxu0
  %v609 = vadd.f32 0.0, %v608
  %610 = vmatmul.f32.gmra.mxu0 %v556
  %v611 = vpop.f32.mrf.mxu0
  %v612 = vadd.f32 0.0, %v611
  %613 = vmatmul.f32.gmra.mxu0 %v559
  %v614 = vpop.f32.mrf.mxu0
  %v615 = vadd.f32 0.0, %v614
  %616 = vmatmul.f32.gmra.mxu0 %v562
  %v617 = vpop.f32.mrf.mxu0
  %v618 = vadd.f32 0.0, %v617
  %619 = vmatmul.f32.gmra.mxu0 %v565
  %v620 = vpop.f32.mrf.mxu0
  %v621 = vadd.f32 0.0, %v620
  %622 = vmatmul.f32.gmra.mxu0 %v568
  %v623 = vpop.f32.mrf.mxu0
  %v624 = vadd.f32 0.0, %v623
  %625 = vmatmul.f32.gmra.mxu0 %v571
  %v626 = vpop.f32.mrf.mxu0
  %v627 = vadd.f32 0.0, %v626
  %628 = vmatmul.f32.gmra.mxu0 %v574
  %v629 = vpop.f32.mrf.mxu0
  %v630 = vadd.f32 0.0, %v629
  %631 = vmatmul.f32.gmra.mxu0 %v577
  %v632 = vpop.f32.mrf.mxu0
  %v633 = vadd.f32 0.0, %v632
  %634 = vmatmul.f32.gmra.mxu0 %v580
  %v635 = vpop.f32.mrf.mxu0
  %v636 = vadd.f32 0.0, %v635
  %637 = vmatmul.f32.gmra.mxu0 %v583
  %v638 = vpop.f32.mrf.mxu0
  %v639 = vadd.f32 0.0, %v638
  %640 = vdwg.mxu0
  %641 = vst.msk [vmem:[%s10] sm:$0xff] %vm186, %v606
  %642 = vst.msk [vmem:[%s10 + $0x8] sm:$0xff] %vm186, %v609
  %643 = vst.msk [vmem:[%s10 + $0x10] sm:$0xff] %vm186, %v612
  %644 = vst.msk [vmem:[%s10 + $0x18] sm:$0xff] %vm186, %v615
  %645 = vst.msk [vmem:[%s10 + $0x20] sm:$0xff] %vm186, %v618
  %646 = vst.msk [vmem:[%s10 + $0x28] sm:$0xff] %vm186, %v621
  %647 = vst.msk [vmem:[%s10 + $0x30] sm:$0xff] %vm186, %v624
  %648 = vst.msk [vmem:[%s10 + $0x38] sm:$0xff] %vm186, %v627
  %649 = vst.msk [vmem:[%s10 + $0x40] sm:$0xff] %vm186, %v630
  %650 = vst.msk [vmem:[%s10 + $0x48] sm:$0xff] %vm186, %v633
  %651 = vst.msk [vmem:[%s10 + $0x50] sm:$0xff] %vm186, %v636
  %652 = vst.msk [vmem:[%s10 + $0x58] sm:$0xff] %vm186, %v639
  // Predicated region
  $region38: #{dynamics_forward.14} parent=0 // pred_check
    _
  $region39: #{dynamics_forward.14} parent=0 // pred_check_branch
    %654 = sbr.rel (0) target = $region41
  $region40: #{dynamics_forward.14} parent=0 // pred_region
    _
  $region41: #{dynamics_forward.14} parent=0 // pred_fallthru
    _
  // Predicated region
  $region42: #{dynamics_forward.14} parent=0 // pred_check
    _
  $region43: #{dynamics_forward.14} parent=0 // pred_check_branch
    %656 = sbr.rel (0) target = $region45
  $region44: #{dynamics_forward.14} parent=0 // pred_region
    _
  $region45: #{dynamics_forward.14} parent=0 // pred_fallthru
    _
  // Predicated region
  $region46: #{dynamics_forward.14} parent=0 // pred_check
    _
  $region47: #{dynamics_forward.14} parent=0 // pred_check_branch
    %658 = sbr.rel (0) target = $region49
  $region48: #{dynamics_forward.14} parent=0 // pred_region
    _
  $region49: #{dynamics_forward.14} parent=0 // pred_fallthru
    _
  // Predicated region
  $region50: #{dynamics_forward.14} parent=0 // pred_check
    _
  $region51: #{dynamics_forward.14} parent=0 // pred_check_branch
    %660 = sbr.rel (0) target = $region53
  $region52: #{dynamics_forward.14} parent=0 // pred_region
    _
  $region53: #{dynamics_forward.14} parent=0 // pred_fallthru
    _

// kernel: dynamics_forward.15
$region0: #{dynamics_forward.15}
  #allocation0 [shape = 'u32[]', space=smem, size = 0x4, offset = 0x4, fixed_abs, tag = 'smem constant byte address 0x4 - core index']
  #allocation1 [shape = 'u32[72,128]{1,0:T(1,128)}', space=vmem, size = 0x9000, scoped, tag = 'internal scratch']
  %s0 = inlined_call_operand.vmem [shape: f32[32,80], index: 0, kind: input, shape index: {}]
  %s1 = inlined_call_operand.vmem [shape: f32[96,10], index: 1, kind: input, shape index: {}]
  %s2 = inlined_call_operand.vmem [shape: f32[10,10], index: 2, kind: input, shape index: {}]
  %s3 = inlined_call_operand.vmem [shape: f32[80,32], index: 3, kind: input, shape index: {}]
  %s4 = inlined_call_operand.vmem [shape: f32[10,32], index: 4, kind: input, shape index: {}]
  %s5 = inlined_call_operand.vmem [shape: f32[1,32], index: 5, kind: input, shape index: {}]
  %s6 = inlined_call_operand.vmem [shape: f32[10,4], index: 6, kind: input, shape index: {}]
  %s7 = inlined_call_operand.vmem [shape: f32[32,32], index: 7, kind: output, shape index: {0}]
  %s8 = inlined_call_operand.vmem [shape: f32[96,4], index: 8, kind: output, shape index: {1}]
  %9 = xla_tuple %s7, %s8
  %s10 = sld [smem:[#allocation0]]
  $region46: #{dynamics_forward.15} parent=0
    _
  %s12 = ssub.s32 1, %s10
  %s13 = scalar_select 0, %s12, %s10
  // Predicated region
  $region2: #{dynamics_forward.15} parent=0 // pred_check
    _
  $region3: #{dynamics_forward.15} parent=0 // pred_check_branch
    %15 = sbr.rel (0) target = $region5
  $region4: #{dynamics_forward.15} parent=0 // pred_region
    _
  $region5: #{dynamics_forward.15} parent=0 // pred_fallthru
    _
  // Predicated region
  $region6: #{dynamics_forward.15} parent=0 // pred_check
    _
  $region7: #{dynamics_forward.15} parent=0 // pred_check_branch
    %17 = sbr.rel (0) target = $region9
  $region8: #{dynamics_forward.15} parent=0 // pred_region
    _
  $region9: #{dynamics_forward.15} parent=0 // pred_fallthru
    _
  // Predicated region
  $region10: #{dynamics_forward.15} parent=0 // pred_check
    _
  $region11: #{dynamics_forward.15} parent=0 // pred_check_branch
    %19 = sbr.rel (0) target = $region13
  $region12: #{dynamics_forward.15} parent=0 // pred_region
    _
  $region13: #{dynamics_forward.15} parent=0 // pred_fallthru
    _
  // Predicated region
  $region14: #{dynamics_forward.15} parent=0 // pred_check
    _
  $region15: #{dynamics_forward.15} parent=0 // pred_check_branch
    %21 = sbr.rel (0) target = $region17
  $region16: #{dynamics_forward.15} parent=0 // pred_region
    _
  $region17: #{dynamics_forward.15} parent=0 // pred_fallthru
    _
  // Predicated region
  $region18: #{dynamics_forward.15} parent=0 // pred_check
    _
  $region19: #{dynamics_forward.15} parent=0 // pred_check_branch
    %23 = sbr.rel (0) target = $region21
  $region20: #{dynamics_forward.15} parent=0 // pred_region
    _
  $region21: #{dynamics_forward.15} parent=0 // pred_fallthru
    _
  // Predicated region
  $region22: #{dynamics_forward.15} parent=0 // pred_check
    _
  $region23: #{dynamics_forward.15} parent=0 // pred_check_branch
    %25 = sbr.rel (0) target = $region25
  $region24: #{dynamics_forward.15} parent=0 // pred_region
    _
  $region25: #{dynamics_forward.15} parent=0 // pred_fallthru
    _
  // Predicated region
  $region26: #{dynamics_forward.15} parent=0 // pred_check
    _
  $region27: #{dynamics_forward.15} parent=0 // pred_check_branch
    %27 = sbr.rel (0) target = $region29
  $region28: #{dynamics_forward.15} parent=0 // pred_region
    _
  $region29: #{dynamics_forward.15} parent=0 // pred_fallthru
    _
  %v28 = vld [vmem:[%s0] sm:$0xff]
  %v29 = vld [vmem:[%s0 + $0x8] sm:$0xff]
  %v30 = vld [vmem:[%s0 + $0x10] sm:$0xff]
  %v31 = vld [vmem:[%s0 + $0x18] sm:$0xff]
  %v32 = vld [vmem:[%s1] sm:$0xff]
  %v33 = vld [vmem:[%s1 + $0x8] sm:$0xff]
  %v34 = vld [vmem:[%s1 + $0x10] sm:$0xff]
  %v35 = vld [vmem:[%s1 + $0x18] sm:$0xff]
  %v36 = vld [vmem:[%s1 + $0x20] sm:$0xff]
  %v37 = vld [vmem:[%s1 + $0x28] sm:$0xff]
  %v38 = vld [vmem:[%s1 + $0x30] sm:$0xff]
  %v39 = vld [vmem:[%s1 + $0x38] sm:$0xff]
  %v40 = vld [vmem:[%s1 + $0x40] sm:$0xff]
  %v41 = vld [vmem:[%s1 + $0x48] sm:$0xff]
  %v42 = vld [vmem:[%s1 + $0x50] sm:$0xff]
  %v43 = vld [vmem:[%s1 + $0x58] sm:$0xff]
  %v44 = vld [vmem:[%s2] sm:$0xff]
  %v45 = vld [vmem:[%s2 + $0x8] sm:$0x3]
  %vm46 = vcmask 80896
  %v48 = vsel %vm46, %v32, 0
  %v51 = vsel %vm46, %v33, 0
  %v54 = vsel %vm46, %v34, 0
  %v57 = vsel %vm46, %v35, 0
  %v60 = vsel %vm46, %v36, 0
  %v63 = vsel %vm46, %v37, 0
  %v66 = vsel %vm46, %v38, 0
  %v69 = vsel %vm46, %v39, 0
  %v72 = vsel %vm46, %v40, 0
  %v75 = vsel %vm46, %v41, 0
  %v78 = vsel %vm46, %v42, 0
  %v81 = vsel %vm46, %v43, 0
  %vm83 = vcmask 1041408
  %v85 = vsel %vm83, %v45, 0
  %87 = vmatpush.msra.mxu0 0.0
  %88 = vmatpush.msra.mxu0 0.0
  %89 = vmatpush.msra.mxu0 0.0
  %90 = vmatpush.msra.mxu0 0.0
  %91 = vmatpush.msra.mxu0 0.0
  %92 = vmatpush.msra.mxu0 0.0
  %93 = vmatpush.msra.mxu0 0.0
  %94 = vmatpush.msra.mxu0 0.0
  %95 = vmatpush.msra.mxu0 0.0
  %96 = vmatpush.msra.mxu0 0.0
  %97 = vmatpush.msra.mxu0 0.0
  %98 = vmatpush.msra.mxu0 0.0
  %99 = vmatpush.msra.mxu0 0.0
  %100 = vmatpush.msra.mxu0 0.0
  %101 = vmatpush.msra.mxu0 %v85
  %102 = vmatpush.msra.mxu0 %v44
  %103 = vmatmul.f32.gmra.mxu0 %v48
  %v104 = vpop.f32.mrf.mxu0
  %v105 = vadd.f32 0.0, %v104
  %106 = vmatmul.f32.gmra.mxu0 %v51
  %v107 = vpop.f32.mrf.mxu0
  %v108 = vadd.f32 0.0, %v107
  %109 = vmatmul.f32.gmra.mxu0 %v54
  %v110 = vpop.f32.mrf.mxu0
  %v111 = vadd.f32 0.0, %v110
  %112 = vmatmul.f32.gmra.mxu0 %v57
  %v113 = vpop.f32.mrf.mxu0
  %v114 = vadd.f32 0.0, %v113
  %115 = vmatmul.f32.gmra.mxu0 %v60
  %v116 = vpop.f32.mrf.mxu0
  %v117 = vadd.f32 0.0, %v116
  %118 = vmatmul.f32.gmra.mxu0 %v63
  %v119 = vpop.f32.mrf.mxu0
  %v120 = vadd.f32 0.0, %v119
  %121 = vmatmul.f32.gmra.mxu0 %v66
  %v122 = vpop.f32.mrf.mxu0
  %v123 = vadd.f32 0.0, %v122
  %124 = vmatmul.f32.gmra.mxu0 %v69
  %v125 = vpop.f32.mrf.mxu0
  %v126 = vadd.f32 0.0, %v125
  %127 = vmatmul.f32.gmra.mxu0 %v72
  %v128 = vpop.f32.mrf.mxu0
  %v129 = vadd.f32 0.0, %v128
  %130 = vmatmul.f32.gmra.mxu0 %v75
  %v131 = vpop.f32.mrf.mxu0
  %v132 = vadd.f32 0.0, %v131
  %133 = vmatmul.f32.gmra.mxu0 %v78
  %v134 = vpop.f32.mrf.mxu0
  %v135 = vadd.f32 0.0, %v134
  %136 = vmatmul.f32.gmra.mxu0 %v81
  %v137 = vpop.f32.mrf.mxu0
  %v138 = vadd.f32 0.0, %v137
  %139 = vdwg.mxu0
  %v140 = vmul.f32 %v105, %v105
  %v141 = vmul.f32 %v108, %v108
  %v142 = vmul.f32 %v111, %v111
  %v143 = vmul.f32 %v114, %v114
  %v144 = vmul.f32 %v117, %v117
  %v145 = vmul.f32 %v120, %v120
  %v146 = vmul.f32 %v123, %v123
  %v147 = vmul.f32 %v126, %v126
  %v148 = vadd.f32 %v140, %v144
  %v149 = vadd.f32 %v141, %v145
  %v150 = vadd.f32 %v142, %v146
  %v151 = vadd.f32 %v143, %v147
  %v152 = vmul.f32 %v129, %v129
  %v153 = vmul.f32 %v132, %v132
  %v154 = vmul.f32 %v135, %v135
  %v155 = vmul.f32 %v138, %v138
  %v156 = vadd.f32 %v148, %v152
  %v157 = vadd.f32 %v149, %v153
  %v158 = vadd.f32 %v150, %v154
  %v159 = vadd.f32 %v151, %v155
  %v160 = vmax.f32 %v156, 1e-08
  %v161 = vmax.f32 %v157, 1e-08
  %v162 = vmax.f32 %v158, 1e-08
  %v163 = vmax.f32 %v159, 1e-08
  %v164 = vrsqrt.pop %v160
  %v165 = vmul.f32 %v164, %v160
  %v166 = vmul.f32 %v165, %v164
  %v167 = vmul.f32 0.5, %v166
  %v168 = vsub.f32 1.5, %v167
  %v169 = vmul.f32 %v164, %v168
  %v170 = vmul.f32 %v160, %v169
  %vm171 = vcmp.eq.f32.partialorder %v160, inf
  %v172 = vsel %vm171, %v160, %v170
  %vm173 = vcmp.eq.f32.partialorder %v160, 0.0
  %v174 = vand.u32 %v160, 2147483648
  %v175 = vsel %vm173, %v174, %v172
  %v176 = vrsqrt.pop %v161
  %v177 = vmul.f32 %v176, %v161
  %v178 = vmul.f32 %v177, %v176
  %v179 = vmul.f32 0.5, %v178
  %v180 = vsub.f32 1.5, %v179
  %v181 = vmul.f32 %v176, %v180
  %v182 = vmul.f32 %v161, %v181
  %vm183 = vcmp.eq.f32.partialorder %v161, inf
  %v184 = vsel %vm183, %v161, %v182
  %vm185 = vcmp.eq.f32.partialorder %v161, 0.0
  %v186 = vand.u32 %v161, 2147483648
  %v187 = vsel %vm185, %v186, %v184
  %v188 = vrsqrt.pop %v162
  %v189 = vmul.f32 %v188, %v162
  %v190 = vmul.f32 %v189, %v188
  %v191 = vmul.f32 0.5, %v190
  %v192 = vsub.f32 1.5, %v191
  %v193 = vmul.f32 %v188, %v192
  %v194 = vmul.f32 %v162, %v193
  %vm195 = vcmp.eq.f32.partialorder %v162, inf
  %v196 = vsel %vm195, %v162, %v194
  %vm197 = vcmp.eq.f32.partialorder %v162, 0.0
  %v198 = vand.u32 %v162, 2147483648
  %v199 = vsel %vm197, %v198, %v196
  %v200 = vrsqrt.pop %v163
  %v201 = vmul.f32 %v200, %v163
  %v202 = vmul.f32 %v201, %v200
  %v203 = vmul.f32 0.5, %v202
  %v204 = vsub.f32 1.5, %v203
  %v205 = vmul.f32 %v200, %v204
  %v206 = vmul.f32 %v163, %v205
  %vm207 = vcmp.eq.f32.partialorder %v163, inf
  %v208 = vsel %vm207, %v163, %v206
  %vm209 = vcmp.eq.f32.partialorder %v163, 0.0
  %v210 = vand.u32 %v163, 2147483648
  %v211 = vsel %vm209, %v210, %v208
  %v212 = vld [vmem:[%s3] sm:$0xff]
  %v213 = vld [vmem:[%s3 + $0x8] sm:$0xff]
  %v214 = vld [vmem:[%s3 + $0x10] sm:$0xff]
  %v215 = vld [vmem:[%s3 + $0x18] sm:$0xff]
  %v216 = vld [vmem:[%s3 + $0x20] sm:$0xff]
  %v217 = vld [vmem:[%s3 + $0x28] sm:$0xff]
  %v218 = vld [vmem:[%s3 + $0x30] sm:$0xff]
  %v219 = vld [vmem:[%s3 + $0x38] sm:$0xff]
  %v220 = vld [vmem:[%s3 + $0x40] sm:$0xff]
  %v221 = vld [vmem:[%s3 + $0x48] sm:$0xff]
  %v222 = vld [vmem:[%s4] sm:$0xff]
  %v223 = vld [vmem:[%s4 + $0x8] sm:$0x3]
  %v225 = vsel %vm46, %v175, 0
  %v228 = vsel %vm46, %v187, 0
  %v231 = vsel %vm46, %v199, 0
  %v234 = vsel %vm46, %v211, 0
  %v237 = vsel %vm83, %v223, 0
  %239 = vmatpush.msra.mxu0 0.0
  %240 = vmatpush.msra.mxu0 0.0
  %241 = vmatpush.msra.mxu0 0.0
  %242 = vmatpush.msra.mxu0 0.0
  %243 = vmatpush.msra.mxu0 0.0
  %244 = vmatpush.msra.mxu0 0.0
  %245 = vmatpush.msra.mxu0 0.0
  %246 = vmatpush.msra.mxu0 0.0
  %247 = vmatpush.msra.mxu0 0.0
  %248 = vmatpush.msra.mxu0 0.0
  %249 = vmatpush.msra.mxu0 0.0
  %250 = vmatpush.msra.mxu0 0.0
  %251 = vmatpush.msra.mxu0 0.0
  %252 = vmatpush.msra.mxu0 0.0
  %253 = vmatpush.msra.mxu0 %v237
  %254 = vmatpush.msra.mxu0 %v222
  %255 = vmatmul.f32.gmra.mxu0 %v225
  %v256 = vpop.f32.mrf.mxu0
  %v257 = vadd.f32 0.0, %v256
  %258 = vmatmul.f32.gmra.mxu0 %v228
  %v259 = vpop.f32.mrf.mxu0
  %v260 = vadd.f32 0.0, %v259
  %261 = vmatmul.f32.gmra.mxu0 %v231
  %v262 = vpop.f32.mrf.mxu0
  %v263 = vadd.f32 0.0, %v262
  %264 = vmatmul.f32.gmra.mxu0 %v234
  %v265 = vpop.f32.mrf.mxu0
  %v266 = vadd.f32 0.0, %v265
  %267 = vdwg.mxu0
  %vm268 = vcmask 654336
  %v270 = vsel %vm268, %v28, 0
  %v273 = vsel %vm268, %v29, 0
  %v276 = vsel %vm268, %v30, 0
  %v279 = vsel %vm268, %v31, 0
  %281 = vmatpush.msra.mxu0 0.0
  %282 = vmatpush.msra.mxu0 0.0
  %283 = vmatpush.msra.mxu0 0.0
  %284 = vmatpush.msra.mxu0 0.0
  %285 = vmatpush.msra.mxu0 0.0
  %286 = vmatpush.msra.mxu0 0.0
  %287 = vmatpush.msra.mxu0 %v221
  %288 = vmatpush.msra.mxu0 %v220
  %289 = vmatpush.msra.mxu0 %v219
  %290 = vmatpush.msra.mxu0 %v218
  %291 = vmatpush.msra.mxu0 %v217
  %292 = vmatpush.msra.mxu0 %v216
  %293 = vmatpush.msra.mxu0 %v215
  %294 = vmatpush.msra.mxu0 %v214
  %295 = vmatpush.msra.mxu0 %v213
  %296 = vmatpush.msra.mxu0 %v212
  %297 = vmatmul.f32.gmra.mxu0 %v270
  %v298 = vpop.f32.mrf.mxu0
  %v299 = vadd.f32 %v257, %v298
  %300 = vmatmul.f32.gmra.mxu0 %v273
  %v301 = vpop.f32.mrf.mxu0
  %v302 = vadd.f32 %v260, %v301
  %303 = vmatmul.f32.gmra.mxu0 %v276
  %v304 = vpop.f32.mrf.mxu0
  %v305 = vadd.f32 %v263, %v304
  %306 = vmatmul.f32.gmra.mxu0 %v279
  %v307 = vpop.f32.mrf.mxu0
  %v308 = vadd.f32 %v266, %v307
  %309 = vdwg.mxu0
  %v310 = vld [vmem:[%s5] sm:$0x1]
  %v312 = vperm.slane %v310, 0
  %v314 = vadd.f32 %v299, %v312
  %v315 = vadd.f32 %v302, %v312
  %v316 = vadd.f32 %v305, %v312
  %v317 = vadd.f32 %v308, %v312
  %v318 = vmax.f32 %v314, 0.0
  %v319 = vmax.f32 %v315, 0.0
  %v320 = vmax.f32 %v316, 0.0
  %v321 = vmax.f32 %v317, 0.0
  %vm322 = vcmask 261120
  %323 = vst.msk [vmem:[%s7] sm:$0xff] %vm322, %v318
  %324 = vst.msk [vmem:[%s7 + $0x8] sm:$0xff] %vm322, %v319
  %325 = vst.msk [vmem:[%s7 + $0x10] sm:$0xff] %vm322, %v320
  %326 = vst.msk [vmem:[%s7 + $0x18] sm:$0xff] %vm322, %v321
  %v327 = vld [vmem:[%s6] sm:$0xff]
  %v328 = vld [vmem:[%s6 + $0x8] sm:$0x3]
  %v330 = vsel %vm46, %v105, 0
  %v333 = vsel %vm46, %v108, 0
  %v336 = vsel %vm46, %v111, 0
  %v339 = vsel %vm46, %v114, 0
  %v342 = vsel %vm46, %v117, 0
  %v345 = vsel %vm46, %v120, 0
  %v348 = vsel %vm46, %v123, 0
  %v351 = vsel %vm46, %v126, 0
  %v354 = vsel %vm46, %v129, 0
  %v357 = vsel %vm46, %v132, 0
  %v360 = vsel %vm46, %v135, 0
  %v363 = vsel %vm46, %v138, 0
  %v366 = vsel %vm83, %v328, 0
  %368 = vmatpush.msra.mxu0 0.0
  %369 = vmatpush.msra.mxu0 0.0
  %370 = vmatpush.msra.mxu0 0.0
  %371 = vmatpush.msra.mxu0 0.0
  %372 = vmatpush.msra.mxu0 0.0
  %373 = vmatpush.msra.mxu0 0.0
  %374 = vmatpush.msra.mxu0 0.0
  %375 = vmatpush.msra.mxu0 0.0
  %376 = vmatpush.msra.mxu0 0.0
  %377 = vmatpush.msra.mxu0 0.0
  %378 = vmatpush.msra.mxu0 0.0
  %379 = vmatpush.msra.mxu0 0.0
  %380 = vmatpush.msra.mxu0 0.0
  %381 = vmatpush.msra.mxu0 0.0
  %382 = vmatpush.msra.mxu0 %v366
  %383 = vmatpush.msra.mxu0 %v327
  %384 = vmatmul.f32.gmra.mxu0 %v330
  %v385 = vpop.f32.mrf.mxu0
  %v386 = vadd.f32 0.0, %v385
  %387 = vmatmul.f32.gmra.mxu0 %v333
  %v388 = vpop.f32.mrf.mxu0
  %v389 = vadd.f32 0.0, %v388
  %390 = vmatmul.f32.gmra.mxu0 %v336
  %v391 = vpop.f32.mrf.mxu0
  %v392 = vadd.f32 0.0, %v391
  %393 = vmatmul.f32.gmra.mxu0 %v339
  %v394 = vpop.f32.mrf.mxu0
  %v395 = vadd.f32 0.0, %v394
  %396 = vmatmul.f32.gmra.mxu0 %v342
  %v397 = vpop.f32.mrf.mxu0
  %v398 = vadd.f32 0.0, %v397
  %399 = vmatmul.f32.gmra.mxu0 %v345
  %v400 = vpop.f32.mrf.mxu0
  %v401 = vadd.f32 0.0, %v400
  %402 = vmatmul.f32.gmra.mxu0 %v348
  %v403 = vpop.f32.mrf.mxu0
  %v404 = vadd.f32 0.0, %v403
  %405 = vmatmul.f32.gmra.mxu0 %v351
  %v406 = vpop.f32.mrf.mxu0
  %v407 = vadd.f32 0.0, %v406
  %408 = vmatmul.f32.gmra.mxu0 %v354
  %v409 = vpop.f32.mrf.mxu0
  %v410 = vadd.f32 0.0, %v409
  %411 = vmatmul.f32.gmra.mxu0 %v357
  %v412 = vpop.f32.mrf.mxu0
  %v413 = vadd.f32 0.0, %v412
  %414 = vmatmul.f32.gmra.mxu0 %v360
  %v415 = vpop.f32.mrf.mxu0
  %v416 = vadd.f32 0.0, %v415
  %417 = vmatmul.f32.gmra.mxu0 %v363
  %v418 = vpop.f32.mrf.mxu0
  %v419 = vadd.f32 0.0, %v418
  %420 = vdwg.mxu0
  %v421 = vmul.f32 %v386, %v386
  %v422 = vmul.f32 %v389, %v389
  %v423 = vmul.f32 %v392, %v392
  %v424 = vmul.f32 %v395, %v395
  %v425 = vmul.f32 %v398, %v398
  %v426 = vmul.f32 %v401, %v401
  %v427 = vmul.f32 %v404, %v404
  %v428 = vmul.f32 %v407, %v407
  %v429 = vadd.f32 %v421, %v425
  %v430 = vadd.f32 %v422, %v426
  %v431 = vadd.f32 %v423, %v427
  %v432 = vadd.f32 %v424, %v428
  %v433 = vmul.f32 %v410, %v410
  %v434 = vmul.f32 %v413, %v413
  %v435 = vmul.f32 %v416, %v416
  %v436 = vmul.f32 %v419, %v419
  %v437 = vadd.f32 %v429, %v433
  %v438 = vadd.f32 %v430, %v434
  %v439 = vadd.f32 %v431, %v435
  %v440 = vadd.f32 %v432, %v436
  %v441 = vmax.f32 %v437, 1e-08
  %v442 = vmax.f32 %v438, 1e-08
  %v443 = vmax.f32 %v439, 1e-08
  %v444 = vmax.f32 %v440, 1e-08
  %v445 = vrsqrt.pop %v441
  %v446 = vmul.f32 %v445, %v441
  %v447 = vmul.f32 %v446, %v445
  %v448 = vmul.f32 0.5, %v447
  %v449 = vsub.f32 1.5, %v448
  %v450 = vmul.f32 %v445, %v449
  %v451 = vmul.f32 %v441, %v450
  %vm452 = vcmp.eq.f32.partialorder %v441, inf
  %v453 = vsel %vm452, %v441, %v451
  %vm454 = vcmp.eq.f32.partialorder %v441, 0.0
  %v455 = vand.u32 %v441, 2147483648
  %v456 = vsel %vm454, %v455, %v453
  %v457 = vrsqrt.pop %v442
  %v458 = vmul.f32 %v457, %v442
  %v459 = vmul.f32 %v458, %v457
  %v460 = vmul.f32 0.5, %v459
  %v461 = vsub.f32 1.5, %v460
  %v462 = vmul.f32 %v457, %v461
  %v463 = vmul.f32 %v442, %v462
  %vm464 = vcmp.eq.f32.partialorder %v442, inf
  %v465 = vsel %vm464, %v442, %v463
  %vm466 = vcmp.eq.f32.partialorder %v442, 0.0
  %v467 = vand.u32 %v442, 2147483648
  %v468 = vsel %vm466, %v467, %v465
  %v469 = vrsqrt.pop %v443
  %v470 = vmul.f32 %v469, %v443
  %v471 = vmul.f32 %v470, %v469
  %v472 = vmul.f32 0.5, %v471
  %v473 = vsub.f32 1.5, %v472
  %v474 = vmul.f32 %v469, %v473
  %v475 = vmul.f32 %v443, %v474
  %vm476 = vcmp.eq.f32.partialorder %v443, inf
  %v477 = vsel %vm476, %v443, %v475
  %vm478 = vcmp.eq.f32.partialorder %v443, 0.0
  %v479 = vand.u32 %v443, 2147483648
  %v480 = vsel %vm478, %v479, %v477
  %v481 = vrsqrt.pop %v444
  %v482 = vmul.f32 %v481, %v444
  %v483 = vmul.f32 %v482, %v481
  %v484 = vmul.f32 0.5, %v483
  %v485 = vsub.f32 1.5, %v484
  %v486 = vmul.f32 %v481, %v485
  %v487 = vmul.f32 %v444, %v486
  %vm488 = vcmp.eq.f32.partialorder %v444, inf
  %v489 = vsel %vm488, %v444, %v487
  %vm490 = vcmp.eq.f32.partialorder %v444, 0.0
  %v491 = vand.u32 %v444, 2147483648
  %v492 = vsel %vm490, %v491, %v489
  %v493 = vxor.u32 %v456, 2147483648
  %v494 = vxor.u32 %v468, 2147483648
  %v495 = vxor.u32 %v480, 2147483648
  %v496 = vxor.u32 %v492, 2147483648
  %v497 = vmul.f32 %v493, 1.442695
  %v498 = vpow.pop %v497
  %v499 = vmul.f32 %v494, 1.442695
  %v500 = vpow.pop %v499
  %v501 = vmul.f32 %v495, 1.442695
  %v502 = vpow.pop %v501
  %v503 = vmul.f32 %v496, 1.442695
  %v504 = vpow.pop %v503
  %v505 = vadd.f32 %v498, 1.0
  %v506 = vadd.f32 %v500, 1.0
  %v507 = vadd.f32 %v502, 1.0
  %v508 = vadd.f32 %v504, 1.0
  %v509 = vrcp.pop %v505
  %v510 = vmul.f32 %v505, %v509
  %v511 = vsub.f32 1.0, %v510
  %v512 = vmul.f32 %v509, %v511
  %v513 = vadd.f32 %v509, %v512
  %vm514 = vweird.f32 %v505
  %vm515 = vweird.f32 %v509
  %vm516 = vmor %vm514, %vm515
  %v517 = vsel %vm516, %v509, %v513
  %v518 = vand.u32 2147483647, %v505
  %vm519 = vcmp.eq.f32.partialorder %v518, 8.507059e+37
  %v520 = vand.u32 %v505, 2147483648
  %v521 = vor.u32 1.1754944e-38, %v520
  %v522 = vsel %vm519, %v521, %v517
  %v523 = vmul.f32 1.0, %v522
  %v524 = vrcp.pop %v506
  %v525 = vmul.f32 %v506, %v524
  %v526 = vsub.f32 1.0, %v525
  %v527 = vmul.f32 %v524, %v526
  %v528 = vadd.f32 %v524, %v527
  %vm529 = vweird.f32 %v506
  %vm530 = vweird.f32 %v524
  %vm531 = vmor %vm529, %vm530
  %v532 = vsel %vm531, %v524, %v528
  %v533 = vand.u32 2147483647, %v506
  %vm534 = vcmp.eq.f32.partialorder %v533, 8.507059e+37
  %v535 = vand.u32 %v506, 2147483648
  %v536 = vor.u32 1.1754944e-38, %v535
  %v537 = vsel %vm534, %v536, %v532
  %v538 = vmul.f32 1.0, %v537
  %v539 = vrcp.pop %v507
  %v540 = vmul.f32 %v507, %v539
  %v541 = vsub.f32 1.0, %v540
  %v542 = vmul.f32 %v539, %v541
  %v543 = vadd.f32 %v539, %v542
  %vm544 = vweird.f32 %v507
  %vm545 = vweird.f32 %v539
  %vm546 = vmor %vm544, %vm545
  %v547 = vsel %vm546, %v539, %v543
  %v548 = vand.u32 2147483647, %v507
  %vm549 = vcmp.eq.f32.partialorder %v548, 8.507059e+37
  %v550 = vand.u32 %v507, 2147483648
  %v551 = vor.u32 1.1754944e-38, %v550
  %v552 = vsel %vm549, %v551, %v547
  %v553 = vmul.f32 1.0, %v552
  %v554 = vrcp.pop %v508
  %v555 = vmul.f32 %v508, %v554
  %v556 = vsub.f32 1.0, %v555
  %v557 = vmul.f32 %v554, %v556
  %v558 = vadd.f32 %v554, %v557
  %vm559 = vweird.f32 %v508
  %vm560 = vweird.f32 %v554
  %vm561 = vmor %vm559, %vm560
  %v562 = vsel %vm561, %v554, %v558
  %v563 = vand.u32 2147483647, %v508
  %vm564 = vcmp.eq.f32.partialorder %v563, 8.507059e+37
  %v565 = vand.u32 %v508, 2147483648
  %v566 = vor.u32 1.1754944e-38, %v565
  %v567 = vsel %vm564, %v566, %v562
  %v568 = vmul.f32 1.0, %v567
  %v569 = vmul.f32 %v386, %v523
  %v570 = vmul.f32 %v389, %v538
  %v571 = vmul.f32 %v392, %v553
  %v572 = vmul.f32 %v395, %v568
  %v573 = vmul.f32 %v398, %v523
  %v574 = vmul.f32 %v401, %v538
  %v575 = vmul.f32 %v404, %v553
  %v576 = vmul.f32 %v407, %v568
  %v577 = vmul.f32 %v410, %v523
  %v578 = vmul.f32 %v413, %v538
  %v579 = vmul.f32 %v416, %v553
  %v580 = vmul.f32 %v419, %v568
  %vm581 = vcmask 31744
  %582 = vst.msk [vmem:[%s8] sm:$0xff] %vm581, %v569
  %583 = vst.msk [vmem:[%s8 + $0x8] sm:$0xff] %vm581, %v570
  %584 = vst.msk [vmem:[%s8 + $0x10] sm:$0xff] %vm581, %v571
  %585 = vst.msk [vmem:[%s8 + $0x18] sm:$0xff] %vm581, %v572
  %586 = vst.msk [vmem:[%s8 + $0x20] sm:$0xff] %vm581, %v573
  %587 = vst.msk [vmem:[%s8 + $0x28] sm:$0xff] %vm581, %v574
  %588 = vst.msk [vmem:[%s8 + $0x30] sm:$0xff] %vm581, %v575
  %589 = vst.msk [vmem:[%s8 + $0x38] sm:$0xff] %vm581, %v576
  %590 = vst.msk [vmem:[%s8 + $0x40] sm:$0xff] %vm581, %v577
  %591 = vst.msk [vmem:[%s8 + $0x48] sm:$0xff] %vm581, %v578
  %592 = vst.msk [vmem:[%s8 + $0x50] sm:$0xff] %vm581, %v579
  %593 = vst.msk [vmem:[%s8 + $0x58] sm:$0xff] %vm581, %v580
  // Predicated region
  $region30: #{dynamics_forward.15} parent=0 // pred_check
    _
  $region31: #{dynamics_forward.15} parent=0 // pred_check_branch
    %595 = sbr.rel (0) target = $region33
  $region32: #{dynamics_forward.15} parent=0 // pred_region
    _
  $region33: #{dynamics_forward.15} parent=0 // pred_fallthru
    _
  // Predicated region
  $region34: #{dynamics_forward.15} parent=0 // pred_check
    _
  $region35: #{dynamics_forward.15} parent=0 // pred_check_branch
    %597 = sbr.rel (0) target = $region37
  $region36: #{dynamics_forward.15} parent=0 // pred_region
    _
  $region37: #{dynamics_forward.15} parent=0 // pred_fallthru
    _
  // Predicated region
  $region38: #{dynamics_forward.15} parent=0 // pred_check
    _
  $region39: #{dynamics_forward.15} parent=0 // pred_check_branch
    %599 = sbr.rel (0) target = $region41
  $region40: #{dynamics_forward.15} parent=0 // pred_region
    _
  $region41: #{dynamics_forward.15} parent=0 // pred_fallthru
    _
  // Predicated region
  $region42: #{dynamics_forward.15} parent=0 // pred_check
    _
  $region43: #{dynamics_forward.15} parent=0 // pred_check_branch
    %601 = sbr.rel (0) target = $region45
  $region44: #{dynamics_forward.15} parent=0 // pred_region
    _
  $region45: #{dynamics_forward.15} parent=0 // pred_fallthru
    _

// kernel: dynamics_forward.16
$region0: #{dynamics_forward.16}
  #allocation0 [shape = 'u32[]', space=smem, size = 0x4, offset = 0x4, fixed_abs, tag = 'smem constant byte address 0x4 - core index']
  #allocation1 [shape = 'u32[72,128]{1,0:T(1,128)}', space=vmem, size = 0x9000, scoped, tag = 'internal scratch']
  %s0 = inlined_call_operand.vmem [shape: f32[32,32], index: 0, kind: input, shape index: {}]
  %s1 = inlined_call_operand.vmem [shape: f32[96,4], index: 1, kind: input, shape index: {}]
  %s2 = inlined_call_operand.vmem [shape: f32[4,4], index: 2, kind: input, shape index: {}]
  %s3 = inlined_call_operand.vmem [shape: f32[32,32], index: 3, kind: input, shape index: {}]
  %s4 = inlined_call_operand.vmem [shape: f32[4,32], index: 4, kind: input, shape index: {}]
  %s5 = inlined_call_operand.vmem [shape: f32[1,32], index: 5, kind: input, shape index: {}]
  %s6 = inlined_call_operand.vmem [shape: f32[4,4], index: 6, kind: input, shape index: {}]
  %s7 = inlined_call_operand.vmem [shape: f32[32,32], index: 7, kind: output, shape index: {0}]
  %s8 = inlined_call_operand.vmem [shape: f32[96,4], index: 8, kind: output, shape index: {1}]
  %9 = xla_tuple %s7, %s8
  %s10 = sld [smem:[#allocation0]]
  $region46: #{dynamics_forward.16} parent=0
    _
  %s12 = ssub.s32 1, %s10
  %s13 = scalar_select 0, %s12, %s10
  // Predicated region
  $region2: #{dynamics_forward.16} parent=0 // pred_check
    _
  $region3: #{dynamics_forward.16} parent=0 // pred_check_branch
    %15 = sbr.rel (0) target = $region5
  $region4: #{dynamics_forward.16} parent=0 // pred_region
    _
  $region5: #{dynamics_forward.16} parent=0 // pred_fallthru
    _
  // Predicated region
  $region6: #{dynamics_forward.16} parent=0 // pred_check
    _
  $region7: #{dynamics_forward.16} parent=0 // pred_check_branch
    %17 = sbr.rel (0) target = $region9
  $region8: #{dynamics_forward.16} parent=0 // pred_region
    _
  $region9: #{dynamics_forward.16} parent=0 // pred_fallthru
    _
  // Predicated region
  $region10: #{dynamics_forward.16} parent=0 // pred_check
    _
  $region11: #{dynamics_forward.16} parent=0 // pred_check_branch
    %19 = sbr.rel (0) target = $region13
  $region12: #{dynamics_forward.16} parent=0 // pred_region
    _
  $region13: #{dynamics_forward.16} parent=0 // pred_fallthru
    _
  // Predicated region
  $region14: #{dynamics_forward.16} parent=0 // pred_check
    _
  $region15: #{dynamics_forward.16} parent=0 // pred_check_branch
    %21 = sbr.rel (0) target = $region17
  $region16: #{dynamics_forward.16} parent=0 // pred_region
    _
  $region17: #{dynamics_forward.16} parent=0 // pred_fallthru
    _
  // Predicated region
  $region18: #{dynamics_forward.16} parent=0 // pred_check
    _
  $region19: #{dynamics_forward.16} parent=0 // pred_check_branch
    %23 = sbr.rel (0) target = $region21
  $region20: #{dynamics_forward.16} parent=0 // pred_region
    _
  $region21: #{dynamics_forward.16} parent=0 // pred_fallthru
    _
  // Predicated region
  $region22: #{dynamics_forward.16} parent=0 // pred_check
    _
  $region23: #{dynamics_forward.16} parent=0 // pred_check_branch
    %25 = sbr.rel (0) target = $region25
  $region24: #{dynamics_forward.16} parent=0 // pred_region
    _
  $region25: #{dynamics_forward.16} parent=0 // pred_fallthru
    _
  // Predicated region
  $region26: #{dynamics_forward.16} parent=0 // pred_check
    _
  $region27: #{dynamics_forward.16} parent=0 // pred_check_branch
    %27 = sbr.rel (0) target = $region29
  $region28: #{dynamics_forward.16} parent=0 // pred_region
    _
  $region29: #{dynamics_forward.16} parent=0 // pred_fallthru
    _
  %v28 = vld [vmem:[%s0] sm:$0xff]
  %v29 = vld [vmem:[%s0 + $0x8] sm:$0xff]
  %v30 = vld [vmem:[%s0 + $0x10] sm:$0xff]
  %v31 = vld [vmem:[%s0 + $0x18] sm:$0xff]
  %v32 = vld [vmem:[%s1] sm:$0xff]
  %v33 = vld [vmem:[%s1 + $0x8] sm:$0xff]
  %v34 = vld [vmem:[%s1 + $0x10] sm:$0xff]
  %v35 = vld [vmem:[%s1 + $0x18] sm:$0xff]
  %v36 = vld [vmem:[%s1 + $0x20] sm:$0xff]
  %v37 = vld [vmem:[%s1 + $0x28] sm:$0xff]
  %v38 = vld [vmem:[%s1 + $0x30] sm:$0xff]
  %v39 = vld [vmem:[%s1 + $0x38] sm:$0xff]
  %v40 = vld [vmem:[%s1 + $0x40] sm:$0xff]
  %v41 = vld [vmem:[%s1 + $0x48] sm:$0xff]
  %v42 = vld [vmem:[%s1 + $0x50] sm:$0xff]
  %v43 = vld [vmem:[%s1 + $0x58] sm:$0xff]
  %v44 = vld [vmem:[%s2] sm:$0xf]
  %vm45 = vcmask 31744
  %v47 = vsel %vm45, %v32, 0
  %v50 = vsel %vm45, %v33, 0
  %v53 = vsel %vm45, %v34, 0
  %v56 = vsel %vm45, %v35, 0
  %v59 = vsel %vm45, %v36, 0
  %v62 = vsel %vm45, %v37, 0
  %v65 = vsel %vm45, %v38, 0
  %v68 = vsel %vm45, %v39, 0
  %v71 = vsel %vm45, %v40, 0
  %v74 = vsel %vm45, %v41, 0
  %v77 = vsel %vm45, %v42, 0
  %v80 = vsel %vm45, %v43, 0
  %vm82 = vcmask 1043456
  %v84 = vsel %vm82, %v44, 0
  %86 = vmatpush.msra.mxu0 0.0
  %87 = vmatpush.msra.mxu0 0.0
  %88 = vmatpush.msra.mxu0 0.0
  %89 = vmatpush.msra.mxu0 0.0
  %90 = vmatpush.msra.mxu0 0.0
  %91 = vmatpush.msra.mxu0 0.0
  %92 = vmatpush.msra.mxu0 0.0
  %93 = vmatpush.msra.mxu0 0.0
  %94 = vmatpush.msra.mxu0 0.0
  %95 = vmatpush.msra.mxu0 0.0
  %96 = vmatpush.msra.mxu0 0.0
  %97 = vmatpush.msra.mxu0 0.0
  %98 = vmatpush.msra.mxu0 0.0
  %99 = vmatpush.msra.mxu0 0.0
  %100 = vmatpush.msra.mxu0 0.0
  %101 = vmatpush.msra.mxu0 %v84
  %102 = vmatmul.f32.gmra.mxu0 %v47
  %v103 = vpop.f32.mrf.mxu0
  %v104 = vadd.f32 0.0, %v103
  %105 = vmatmul.f32.gmra.mxu0 %v50
  %v106 = vpop.f32.mrf.mxu0
  %v107 = vadd.f32 0.0, %v106
  %108 = vmatmul.f32.gmra.mxu0 %v53
  %v109 = vpop.f32.mrf.mxu0
  %v110 = vadd.f32 0.0, %v109
  %111 = vmatmul.f32.gmra.mxu0 %v56
  %v112 = vpop.f32.mrf.mxu0
  %v113 = vadd.f32 0.0, %v112
  %114 = vmatmul.f32.gmra.mxu0 %v59
  %v115 = vpop.f32.mrf.mxu0
  %v116 = vadd.f32 0.0, %v115
  %117 = vmatmul.f32.gmra.mxu0 %v62
  %v118 = vpop.f32.mrf.mxu0
  %v119 = vadd.f32 0.0, %v118
  %120 = vmatmul.f32.gmra.mxu0 %v65
  %v121 = vpop.f32.mrf.mxu0
  %v122 = vadd.f32 0.0, %v121
  %123 = vmatmul.f32.gmra.mxu0 %v68
  %v124 = vpop.f32.mrf.mxu0
  %v125 = vadd.f32 0.0, %v124
  %126 = vmatmul.f32.gmra.mxu0 %v71
  %v127 = vpop.f32.mrf.mxu0
  %v128 = vadd.f32 0.0, %v127
  %129 = vmatmul.f32.gmra.mxu0 %v74
  %v130 = vpop.f32.mrf.mxu0
  %v131 = vadd.f32 0.0, %v130
  %132 = vmatmul.f32.gmra.mxu0 %v77
  %v133 = vpop.f32.mrf.mxu0
  %v134 = vadd.f32 0.0, %v133
  %135 = vmatmul.f32.gmra.mxu0 %v80
  %v136 = vpop.f32.mrf.mxu0
  %v137 = vadd.f32 0.0, %v136
  %138 = vdwg.mxu0
  %v139 = vmul.f32 %v104, %v104
  %v140 = vmul.f32 %v107, %v107
  %v141 = vmul.f32 %v110, %v110
  %v142 = vmul.f32 %v113, %v113
  %v143 = vmul.f32 %v116, %v116
  %v144 = vmul.f32 %v119, %v119
  %v145 = vmul.f32 %v122, %v122
  %v146 = vmul.f32 %v125, %v125
  %v147 = vadd.f32 %v139, %v143
  %v148 = vadd.f32 %v140, %v144
  %v149 = vadd.f32 %v141, %v145
  %v150 = vadd.f32 %v142, %v146
  %v151 = vmul.f32 %v128, %v128
  %v152 = vmul.f32 %v131, %v131
  %v153 = vmul.f32 %v134, %v134
  %v154 = vmul.f32 %v137, %v137
  %v155 = vadd.f32 %v147, %v151
  %v156 = vadd.f32 %v148, %v152
  %v157 = vadd.f32 %v149, %v153
  %v158 = vadd.f32 %v150, %v154
  %v159 = vmax.f32 %v155, 1e-08
  %v160 = vmax.f32 %v156, 1e-08
  %v161 = vmax.f32 %v157, 1e-08
  %v162 = vmax.f32 %v158, 1e-08
  %v163 = vrsqrt.pop %v159
  %v164 = vmul.f32 %v163, %v159
  %v165 = vmul.f32 %v164, %v163
  %v166 = vmul.f32 0.5, %v165
  %v167 = vsub.f32 1.5, %v166
  %v168 = vmul.f32 %v163, %v167
  %v169 = vmul.f32 %v159, %v168
  %vm170 = vcmp.eq.f32.partialorder %v159, inf
  %v171 = vsel %vm170, %v159, %v169
  %vm172 = vcmp.eq.f32.partialorder %v159, 0.0
  %v173 = vand.u32 %v159, 2147483648
  %v174 = vsel %vm172, %v173, %v171
  %v175 = vrsqrt.pop %v160
  %v176 = vmul.f32 %v175, %v160
  %v177 = vmul.f32 %v176, %v175
  %v178 = vmul.f32 0.5, %v177
  %v179 = vsub.f32 1.5, %v178
  %v180 = vmul.f32 %v175, %v179
  %v181 = vmul.f32 %v160, %v180
  %vm182 = vcmp.eq.f32.partialorder %v160, inf
  %v183 = vsel %vm182, %v160, %v181
  %vm184 = vcmp.eq.f32.partialorder %v160, 0.0
  %v185 = vand.u32 %v160, 2147483648
  %v186 = vsel %vm184, %v185, %v183
  %v187 = vrsqrt.pop %v161
  %v188 = vmul.f32 %v187, %v161
  %v189 = vmul.f32 %v188, %v187
  %v190 = vmul.f32 0.5, %v189
  %v191 = vsub.f32 1.5, %v190
  %v192 = vmul.f32 %v187, %v191
  %v193 = vmul.f32 %v161, %v192
  %vm194 = vcmp.eq.f32.partialorder %v161, inf
  %v195 = vsel %vm194, %v161, %v193
  %vm196 = vcmp.eq.f32.partialorder %v161, 0.0
  %v197 = vand.u32 %v161, 2147483648
  %v198 = vsel %vm196, %v197, %v195
  %v199 = vrsqrt.pop %v162
  %v200 = vmul.f32 %v199, %v162
  %v201 = vmul.f32 %v200, %v199
  %v202 = vmul.f32 0.5, %v201
  %v203 = vsub.f32 1.5, %v202
  %v204 = vmul.f32 %v199, %v203
  %v205 = vmul.f32 %v162, %v204
  %vm206 = vcmp.eq.f32.partialorder %v162, inf
  %v207 = vsel %vm206, %v162, %v205
  %vm208 = vcmp.eq.f32.partialorder %v162, 0.0
  %v209 = vand.u32 %v162, 2147483648
  %v210 = vsel %vm208, %v209, %v207
  %v211 = vld [vmem:[%s3] sm:$0xff]
  %v212 = vld [vmem:[%s3 + $0x8] sm:$0xff]
  %v213 = vld [vmem:[%s3 + $0x10] sm:$0xff]
  %v214 = vld [vmem:[%s3 + $0x18] sm:$0xff]
  %v215 = vld [vmem:[%s4] sm:$0xf]
  %v217 = vsel %vm45, %v174, 0
  %v220 = vsel %vm45, %v186, 0
  %v223 = vsel %vm45, %v198, 0
  %v226 = vsel %vm45, %v210, 0
  %v229 = vsel %vm82, %v215, 0
  %231 = vmatpush.msra.mxu0 0.0
  %232 = vmatpush.msra.mxu0 0.0
  %233 = vmatpush.msra.mxu0 0.0
  %234 = vmatpush.msra.mxu0 0.0
  %235 = vmatpush.msra.mxu0 0.0
  %236 = vmatpush.msra.mxu0 0.0
  %237 = vmatpush.msra.mxu0 0.0
  %238 = vmatpush.msra.mxu0 0.0
  %239 = vmatpush.msra.mxu0 0.0
  %240 = vmatpush.msra.mxu0 0.0
  %241 = vmatpush.msra.mxu0 0.0
  %242 = vmatpush.msra.mxu0 0.0
  %243 = vmatpush.msra.mxu0 0.0
  %244 = vmatpush.msra.mxu0 0.0
  %245 = vmatpush.msra.mxu0 0.0
  %246 = vmatpush.msra.mxu0 %v229
  %247 = vmatmul.f32.gmra.mxu0 %v217
  %v248 = vpop.f32.mrf.mxu0
  %v249 = vadd.f32 0.0, %v248
  %250 = vmatmul.f32.gmra.mxu0 %v220
  %v251 = vpop.f32.mrf.mxu0
  %v252 = vadd.f32 0.0, %v251
  %253 = vmatmul.f32.gmra.mxu0 %v223
  %v254 = vpop.f32.mrf.mxu0
  %v255 = vadd.f32 0.0, %v254
  %256 = vmatmul.f32.gmra.mxu0 %v226
  %v257 = vpop.f32.mrf.mxu0
  %v258 = vadd.f32 0.0, %v257
  %259 = vdwg.mxu0
  %vm260 = vcmask 261120
  %v262 = vsel %vm260, %v28, 0
  %v265 = vsel %vm260, %v29, 0
  %v268 = vsel %vm260, %v30, 0
  %v271 = vsel %vm260, %v31, 0
  %273 = vmatpush.msra.mxu0 0.0
  %274 = vmatpush.msra.mxu0 0.0
  %275 = vmatpush.msra.mxu0 0.0
  %276 = vmatpush.msra.mxu0 0.0
  %277 = vmatpush.msra.mxu0 0.0
  %278 = vmatpush.msra.mxu0 0.0
  %279 = vmatpush.msra.mxu0 0.0
  %280 = vmatpush.msra.mxu0 0.0
  %281 = vmatpush.msra.mxu0 0.0
  %282 = vmatpush.msra.mxu0 0.0
  %283 = vmatpush.msra.mxu0 0.0
  %284 = vmatpush.msra.mxu0 0.0
  %285 = vmatpush.msra.mxu0 %v214
  %286 = vmatpush.msra.mxu0 %v213
  %287 = vmatpush.msra.mxu0 %v212
  %288 = vmatpush.msra.mxu0 %v211
  %289 = vmatmul.f32.gmra.mxu0 %v262
  %v290 = vpop.f32.mrf.mxu0
  %v291 = vadd.f32 %v249, %v290
  %292 = vmatmul.f32.gmra.mxu0 %v265
  %v293 = vpop.f32.mrf.mxu0
  %v294 = vadd.f32 %v252, %v293
  %295 = vmatmul.f32.gmra.mxu0 %v268
  %v296 = vpop.f32.mrf.mxu0
  %v297 = vadd.f32 %v255, %v296
  %298 = vmatmul.f32.gmra.mxu0 %v271
  %v299 = vpop.f32.mrf.mxu0
  %v300 = vadd.f32 %v258, %v299
  %301 = vdwg.mxu0
  %v302 = vld [vmem:[%s5] sm:$0x1]
  %v304 = vperm.slane %v302, 0
  %v306 = vadd.f32 %v291, %v304
  %v307 = vadd.f32 %v294, %v304
  %v308 = vadd.f32 %v297, %v304
  %v309 = vadd.f32 %v300, %v304
  %v310 = vmax.f32 %v306, 0.0
  %v311 = vmax.f32 %v307, 0.0
  %v312 = vmax.f32 %v308, 0.0
  %v313 = vmax.f32 %v309, 0.0
  %314 = vst.msk [vmem:[%s7] sm:$0xff] %vm260, %v310
  %315 = vst.msk [vmem:[%s7 + $0x8] sm:$0xff] %vm260, %v311
  %316 = vst.msk [vmem:[%s7 + $0x10] sm:$0xff] %vm260, %v312
  %317 = vst.msk [vmem:[%s7 + $0x18] sm:$0xff] %vm260, %v313
  %v318 = vld [vmem:[%s6] sm:$0xf]
  %v320 = vsel %vm45, %v104, 0
  %v323 = vsel %vm45, %v107, 0
  %v326 = vsel %vm45, %v110, 0
  %v329 = vsel %vm45, %v113, 0
  %v332 = vsel %vm45, %v116, 0
  %v335 = vsel %vm45, %v119, 0
  %v338 = vsel %vm45, %v122, 0
  %v341 = vsel %vm45, %v125, 0
  %v344 = vsel %vm45, %v128, 0
  %v347 = vsel %vm45, %v131, 0
  %v350 = vsel %vm45, %v134, 0
  %v353 = vsel %vm45, %v137, 0
  %v356 = vsel %vm82, %v318, 0
  %358 = vmatpush.msra.mxu0 0.0
  %359 = vmatpush.msra.mxu0 0.0
  %360 = vmatpush.msra.mxu0 0.0
  %361 = vmatpush.msra.mxu0 0.0
  %362 = vmatpush.msra.mxu0 0.0
  %363 = vmatpush.msra.mxu0 0.0
  %364 = vmatpush.msra.mxu0 0.0
  %365 = vmatpush.msra.mxu0 0.0
  %366 = vmatpush.msra.mxu0 0.0
  %367 = vmatpush.msra.mxu0 0.0
  %368 = vmatpush.msra.mxu0 0.0
  %369 = vmatpush.msra.mxu0 0.0
  %370 = vmatpush.msra.mxu0 0.0
  %371 = vmatpush.msra.mxu0 0.0
  %372 = vmatpush.msra.mxu0 0.0
  %373 = vmatpush.msra.mxu0 %v356
  %374 = vmatmul.f32.gmra.mxu0 %v320
  %v375 = vpop.f32.mrf.mxu0
  %v376 = vadd.f32 0.0, %v375
  %377 = vmatmul.f32.gmra.mxu0 %v323
  %v378 = vpop.f32.mrf.mxu0
  %v379 = vadd.f32 0.0, %v378
  %380 = vmatmul.f32.gmra.mxu0 %v326
  %v381 = vpop.f32.mrf.mxu0
  %v382 = vadd.f32 0.0, %v381
  %383 = vmatmul.f32.gmra.mxu0 %v329
  %v384 = vpop.f32.mrf.mxu0
  %v385 = vadd.f32 0.0, %v384
  %386 = vmatmul.f32.gmra.mxu0 %v332
  %v387 = vpop.f32.mrf.mxu0
  %v388 = vadd.f32 0.0, %v387
  %389 = vmatmul.f32.gmra.mxu0 %v335
  %v390 = vpop.f32.mrf.mxu0
  %v391 = vadd.f32 0.0, %v390
  %392 = vmatmul.f32.gmra.mxu0 %v338
  %v393 = vpop.f32.mrf.mxu0
  %v394 = vadd.f32 0.0, %v393
  %395 = vmatmul.f32.gmra.mxu0 %v341
  %v396 = vpop.f32.mrf.mxu0
  %v397 = vadd.f32 0.0, %v396
  %398 = vmatmul.f32.gmra.mxu0 %v344
  %v399 = vpop.f32.mrf.mxu0
  %v400 = vadd.f32 0.0, %v399
  %401 = vmatmul.f32.gmra.mxu0 %v347
  %v402 = vpop.f32.mrf.mxu0
  %v403 = vadd.f32 0.0, %v402
  %404 = vmatmul.f32.gmra.mxu0 %v350
  %v405 = vpop.f32.mrf.mxu0
  %v406 = vadd.f32 0.0, %v405
  %407 = vmatmul.f32.gmra.mxu0 %v353
  %v408 = vpop.f32.mrf.mxu0
  %v409 = vadd.f32 0.0, %v408
  %410 = vdwg.mxu0
  %v411 = vmul.f32 %v376, %v376
  %v412 = vmul.f32 %v379, %v379
  %v413 = vmul.f32 %v382, %v382
  %v414 = vmul.f32 %v385, %v385
  %v415 = vmul.f32 %v388, %v388
  %v416 = vmul.f32 %v391, %v391
  %v417 = vmul.f32 %v394, %v394
  %v418 = vmul.f32 %v397, %v397
  %v419 = vadd.f32 %v411, %v415
  %v420 = vadd.f32 %v412, %v416
  %v421 = vadd.f32 %v413, %v417
  %v422 = vadd.f32 %v414, %v418
  %v423 = vmul.f32 %v400, %v400
  %v424 = vmul.f32 %v403, %v403
  %v425 = vmul.f32 %v406, %v406
  %v426 = vmul.f32 %v409, %v409
  %v427 = vadd.f32 %v419, %v423
  %v428 = vadd.f32 %v420, %v424
  %v429 = vadd.f32 %v421, %v425
  %v430 = vadd.f32 %v422, %v426
  %v431 = vmax.f32 %v427, 1e-08
  %v432 = vmax.f32 %v428, 1e-08
  %v433 = vmax.f32 %v429, 1e-08
  %v434 = vmax.f32 %v430, 1e-08
  %v435 = vrsqrt.pop %v431
  %v436 = vmul.f32 %v435, %v431
  %v437 = vmul.f32 %v436, %v435
  %v438 = vmul.f32 0.5, %v437
  %v439 = vsub.f32 1.5, %v438
  %v440 = vmul.f32 %v435, %v439
  %v441 = vmul.f32 %v431, %v440
  %vm442 = vcmp.eq.f32.partialorder %v431, inf
  %v443 = vsel %vm442, %v431, %v441
  %vm444 = vcmp.eq.f32.partialorder %v431, 0.0
  %v445 = vand.u32 %v431, 2147483648
  %v446 = vsel %vm444, %v445, %v443
  %v447 = vrsqrt.pop %v432
  %v448 = vmul.f32 %v447, %v432
  %v449 = vmul.f32 %v448, %v447
  %v450 = vmul.f32 0.5, %v449
  %v451 = vsub.f32 1.5, %v450
  %v452 = vmul.f32 %v447, %v451
  %v453 = vmul.f32 %v432, %v452
  %vm454 = vcmp.eq.f32.partialorder %v432, inf
  %v455 = vsel %vm454, %v432, %v453
  %vm456 = vcmp.eq.f32.partialorder %v432, 0.0
  %v457 = vand.u32 %v432, 2147483648
  %v458 = vsel %vm456, %v457, %v455
  %v459 = vrsqrt.pop %v433
  %v460 = vmul.f32 %v459, %v433
  %v461 = vmul.f32 %v460, %v459
  %v462 = vmul.f32 0.5, %v461
  %v463 = vsub.f32 1.5, %v462
  %v464 = vmul.f32 %v459, %v463
  %v465 = vmul.f32 %v433, %v464
  %vm466 = vcmp.eq.f32.partialorder %v433, inf
  %v467 = vsel %vm466, %v433, %v465
  %vm468 = vcmp.eq.f32.partialorder %v433, 0.0
  %v469 = vand.u32 %v433, 2147483648
  %v470 = vsel %vm468, %v469, %v467
  %v471 = vrsqrt.pop %v434
  %v472 = vmul.f32 %v471, %v434
  %v473 = vmul.f32 %v472, %v471
  %v474 = vmul.f32 0.5, %v473
  %v475 = vsub.f32 1.5, %v474
  %v476 = vmul.f32 %v471, %v475
  %v477 = vmul.f32 %v434, %v476
  %vm478 = vcmp.eq.f32.partialorder %v434, inf
  %v479 = vsel %vm478, %v434, %v477
  %vm480 = vcmp.eq.f32.partialorder %v434, 0.0
  %v481 = vand.u32 %v434, 2147483648
  %v482 = vsel %vm480, %v481, %v479
  %v483 = vxor.u32 %v446, 2147483648
  %v484 = vxor.u32 %v458, 2147483648
  %v485 = vxor.u32 %v470, 2147483648
  %v486 = vxor.u32 %v482, 2147483648
  %v487 = vmul.f32 %v483, 1.442695
  %v488 = vpow.pop %v487
  %v489 = vmul.f32 %v484, 1.442695
  %v490 = vpow.pop %v489
  %v491 = vmul.f32 %v485, 1.442695
  %v492 = vpow.pop %v491
  %v493 = vmul.f32 %v486, 1.442695
  %v494 = vpow.pop %v493
  %v495 = vadd.f32 %v488, 1.0
  %v496 = vadd.f32 %v490, 1.0
  %v497 = vadd.f32 %v492, 1.0
  %v498 = vadd.f32 %v494, 1.0
  %v499 = vrcp.pop %v495
  %v500 = vmul.f32 %v495, %v499
  %v501 = vsub.f32 1.0, %v500
  %v502 = vmul.f32 %v499, %v501
  %v503 = vadd.f32 %v499, %v502
  %vm504 = vweird.f32 %v495
  %vm505 = vweird.f32 %v499
  %vm506 = vmor %vm504, %vm505
  %v507 = vsel %vm506, %v499, %v503
  %v508 = vand.u32 2147483647, %v495
  %vm509 = vcmp.eq.f32.partialorder %v508, 8.507059e+37
  %v510 = vand.u32 %v495, 2147483648
  %v511 = vor.u32 1.1754944e-38, %v510
  %v512 = vsel %vm509, %v511, %v507
  %v513 = vmul.f32 1.0, %v512
  %v514 = vrcp.pop %v496
  %v515 = vmul.f32 %v496, %v514
  %v516 = vsub.f32 1.0, %v515
  %v517 = vmul.f32 %v514, %v516
  %v518 = vadd.f32 %v514, %v517
  %vm519 = vweird.f32 %v496
  %vm520 = vweird.f32 %v514
  %vm521 = vmor %vm519, %vm520
  %v522 = vsel %vm521, %v514, %v518
  %v523 = vand.u32 2147483647, %v496
  %vm524 = vcmp.eq.f32.partialorder %v523, 8.507059e+37
  %v525 = vand.u32 %v496, 2147483648
  %v526 = vor.u32 1.1754944e-38, %v525
  %v527 = vsel %vm524, %v526, %v522
  %v528 = vmul.f32 1.0, %v527
  %v529 = vrcp.pop %v497
  %v530 = vmul.f32 %v497, %v529
  %v531 = vsub.f32 1.0, %v530
  %v532 = vmul.f32 %v529, %v531
  %v533 = vadd.f32 %v529, %v532
  %vm534 = vweird.f32 %v497
  %vm535 = vweird.f32 %v529
  %vm536 = vmor %vm534, %vm535
  %v537 = vsel %vm536, %v529, %v533
  %v538 = vand.u32 2147483647, %v497
  %vm539 = vcmp.eq.f32.partialorder %v538, 8.507059e+37
  %v540 = vand.u32 %v497, 2147483648
  %v541 = vor.u32 1.1754944e-38, %v540
  %v542 = vsel %vm539, %v541, %v537
  %v543 = vmul.f32 1.0, %v542
  %v544 = vrcp.pop %v498
  %v545 = vmul.f32 %v498, %v544
  %v546 = vsub.f32 1.0, %v545
  %v547 = vmul.f32 %v544, %v546
  %v548 = vadd.f32 %v544, %v547
  %vm549 = vweird.f32 %v498
  %vm550 = vweird.f32 %v544
  %vm551 = vmor %vm549, %vm550
  %v552 = vsel %vm551, %v544, %v548
  %v553 = vand.u32 2147483647, %v498
  %vm554 = vcmp.eq.f32.partialorder %v553, 8.507059e+37
  %v555 = vand.u32 %v498, 2147483648
  %v556 = vor.u32 1.1754944e-38, %v555
  %v557 = vsel %vm554, %v556, %v552
  %v558 = vmul.f32 1.0, %v557
  %v559 = vmul.f32 %v376, %v513
  %v560 = vmul.f32 %v379, %v528
  %v561 = vmul.f32 %v382, %v543
  %v562 = vmul.f32 %v385, %v558
  %v563 = vmul.f32 %v388, %v513
  %v564 = vmul.f32 %v391, %v528
  %v565 = vmul.f32 %v394, %v543
  %v566 = vmul.f32 %v397, %v558
  %v567 = vmul.f32 %v400, %v513
  %v568 = vmul.f32 %v403, %v528
  %v569 = vmul.f32 %v406, %v543
  %v570 = vmul.f32 %v409, %v558
  %571 = vst.msk [vmem:[%s8] sm:$0xff] %vm45, %v559
  %572 = vst.msk [vmem:[%s8 + $0x8] sm:$0xff] %vm45, %v560
  %573 = vst.msk [vmem:[%s8 + $0x10] sm:$0xff] %vm45, %v561
  %574 = vst.msk [vmem:[%s8 + $0x18] sm:$0xff] %vm45, %v562
  %575 = vst.msk [vmem:[%s8 + $0x20] sm:$0xff] %vm45, %v563
  %576 = vst.msk [vmem:[%s8 + $0x28] sm:$0xff] %vm45, %v564
  %577 = vst.msk [vmem:[%s8 + $0x30] sm:$0xff] %vm45, %v565
  %578 = vst.msk [vmem:[%s8 + $0x38] sm:$0xff] %vm45, %v566
  %579 = vst.msk [vmem:[%s8 + $0x40] sm:$0xff] %vm45, %v567
  %580 = vst.msk [vmem:[%s8 + $0x48] sm:$0xff] %vm45, %v568
  %581 = vst.msk [vmem:[%s8 + $0x50] sm:$0xff] %vm45, %v569
  %582 = vst.msk [vmem:[%s8 + $0x58] sm:$0xff] %vm45, %v570
  // Predicated region
  $region30: #{dynamics_forward.16} parent=0 // pred_check
    _
  $region31: #{dynamics_forward.16} parent=0 // pred_check_branch
    %584 = sbr.rel (0) target = $region33
  $region32: #{dynamics_forward.16} parent=0 // pred_region
    _
  $region33: #{dynamics_forward.16} parent=0 // pred_fallthru
    _
  // Predicated region
  $region34: #{dynamics_forward.16} parent=0 // pred_check
    _
  $region35: #{dynamics_forward.16} parent=0 // pred_check_branch
    %586 = sbr.rel (0) target = $region37
  $region36: #{dynamics_forward.16} parent=0 // pred_region
    _
  $region37: #{dynamics_forward.16} parent=0 // pred_fallthru
    _
  // Predicated region
  $region38: #{dynamics_forward.16} parent=0 // pred_check
    _
  $region39: #{dynamics_forward.16} parent=0 // pred_check_branch
    %588 = sbr.rel (0) target = $region41
  $region40: #{dynamics_forward.16} parent=0 // pred_region
    _
  $region41: #{dynamics_forward.16} parent=0 // pred_fallthru
    _
  // Predicated region
  $region42: #{dynamics_forward.16} parent=0 // pred_check
    _
  $region43: #{dynamics_forward.16} parent=0 // pred_check_branch
    %590 = sbr.rel (0) target = $region45
  $region44: #{dynamics_forward.16} parent=0 // pred_region
    _
  $region45: #{dynamics_forward.16} parent=0 // pred_fallthru
    _

// kernel: dynamics_forward.17
$region0: #{dynamics_forward.17}
  #allocation0 [shape = 'u32[]', space=smem, size = 0x4, offset = 0x4, fixed_abs, tag = 'smem constant byte address 0x4 - core index']
  #allocation1 [shape = 'u32[72,128]{1,0:T(1,128)}', space=vmem, size = 0x9000, scoped, tag = 'internal scratch']
  %s0 = inlined_call_operand.vmem [shape: f32[32,32], index: 0, kind: input, shape index: {}]
  %s1 = inlined_call_operand.vmem [shape: f32[96,4], index: 1, kind: input, shape index: {}]
  %s2 = inlined_call_operand.vmem [shape: f32[4,4], index: 2, kind: input, shape index: {}]
  %s3 = inlined_call_operand.vmem [shape: f32[32,32], index: 3, kind: input, shape index: {}]
  %s4 = inlined_call_operand.vmem [shape: f32[4,32], index: 4, kind: input, shape index: {}]
  %s5 = inlined_call_operand.vmem [shape: f32[1,32], index: 5, kind: input, shape index: {}]
  %s6 = inlined_call_operand.vmem [shape: f32[4,4], index: 6, kind: input, shape index: {}]
  %s7 = inlined_call_operand.vmem [shape: f32[32,32], index: 7, kind: output, shape index: {0}]
  %s8 = inlined_call_operand.vmem [shape: f32[96,4], index: 8, kind: output, shape index: {1}]
  %9 = xla_tuple %s7, %s8
  %s10 = sld [smem:[#allocation0]]
  $region46: #{dynamics_forward.17} parent=0
    _
  %s12 = ssub.s32 1, %s10
  %s13 = scalar_select 0, %s12, %s10
  // Predicated region
  $region2: #{dynamics_forward.17} parent=0 // pred_check
    _
  $region3: #{dynamics_forward.17} parent=0 // pred_check_branch
    %15 = sbr.rel (0) target = $region5
  $region4: #{dynamics_forward.17} parent=0 // pred_region
    _
  $region5: #{dynamics_forward.17} parent=0 // pred_fallthru
    _
  // Predicated region
  $region6: #{dynamics_forward.17} parent=0 // pred_check
    _
  $region7: #{dynamics_forward.17} parent=0 // pred_check_branch
    %17 = sbr.rel (0) target = $region9
  $region8: #{dynamics_forward.17} parent=0 // pred_region
    _
  $region9: #{dynamics_forward.17} parent=0 // pred_fallthru
    _
  // Predicated region
  $region10: #{dynamics_forward.17} parent=0 // pred_check
    _
  $region11: #{dynamics_forward.17} parent=0 // pred_check_branch
    %19 = sbr.rel (0) target = $region13
  $region12: #{dynamics_forward.17} parent=0 // pred_region
    _
  $region13: #{dynamics_forward.17} parent=0 // pred_fallthru
    _
  // Predicated region
  $region14: #{dynamics_forward.17} parent=0 // pred_check
    _
  $region15: #{dynamics_forward.17} parent=0 // pred_check_branch
    %21 = sbr.rel (0) target = $region17
  $region16: #{dynamics_forward.17} parent=0 // pred_region
    _
  $region17: #{dynamics_forward.17} parent=0 // pred_fallthru
    _
  // Predicated region
  $region18: #{dynamics_forward.17} parent=0 // pred_check
    _
  $region19: #{dynamics_forward.17} parent=0 // pred_check_branch
    %23 = sbr.rel (0) target = $region21
  $region20: #{dynamics_forward.17} parent=0 // pred_region
    _
  $region21: #{dynamics_forward.17} parent=0 // pred_fallthru
    _
  // Predicated region
  $region22: #{dynamics_forward.17} parent=0 // pred_check
    _
  $region23: #{dynamics_forward.17} parent=0 // pred_check_branch
    %25 = sbr.rel (0) target = $region25
  $region24: #{dynamics_forward.17} parent=0 // pred_region
    _
  $region25: #{dynamics_forward.17} parent=0 // pred_fallthru
    _
  // Predicated region
  $region26: #{dynamics_forward.17} parent=0 // pred_check
    _
  $region27: #{dynamics_forward.17} parent=0 // pred_check_branch
    %27 = sbr.rel (0) target = $region29
  $region28: #{dynamics_forward.17} parent=0 // pred_region
    _
  $region29: #{dynamics_forward.17} parent=0 // pred_fallthru
    _
  %v28 = vld [vmem:[%s0] sm:$0xff]
  %v29 = vld [vmem:[%s0 + $0x8] sm:$0xff]
  %v30 = vld [vmem:[%s0 + $0x10] sm:$0xff]
  %v31 = vld [vmem:[%s0 + $0x18] sm:$0xff]
  %v32 = vld [vmem:[%s1] sm:$0xff]
  %v33 = vld [vmem:[%s1 + $0x8] sm:$0xff]
  %v34 = vld [vmem:[%s1 + $0x10] sm:$0xff]
  %v35 = vld [vmem:[%s1 + $0x18] sm:$0xff]
  %v36 = vld [vmem:[%s1 + $0x20] sm:$0xff]
  %v37 = vld [vmem:[%s1 + $0x28] sm:$0xff]
  %v38 = vld [vmem:[%s1 + $0x30] sm:$0xff]
  %v39 = vld [vmem:[%s1 + $0x38] sm:$0xff]
  %v40 = vld [vmem:[%s1 + $0x40] sm:$0xff]
  %v41 = vld [vmem:[%s1 + $0x48] sm:$0xff]
  %v42 = vld [vmem:[%s1 + $0x50] sm:$0xff]
  %v43 = vld [vmem:[%s1 + $0x58] sm:$0xff]
  %v44 = vld [vmem:[%s2] sm:$0xf]
  %vm45 = vcmask 31744
  %v47 = vsel %vm45, %v32, 0
  %v50 = vsel %vm45, %v33, 0
  %v53 = vsel %vm45, %v34, 0
  %v56 = vsel %vm45, %v35, 0
  %v59 = vsel %vm45, %v36, 0
  %v62 = vsel %vm45, %v37, 0
  %v65 = vsel %vm45, %v38, 0
  %v68 = vsel %vm45, %v39, 0
  %v71 = vsel %vm45, %v40, 0
  %v74 = vsel %vm45, %v41, 0
  %v77 = vsel %vm45, %v42, 0
  %v80 = vsel %vm45, %v43, 0
  %vm82 = vcmask 1043456
  %v84 = vsel %vm82, %v44, 0
  %86 = vmatpush.msra.mxu0 0.0
  %87 = vmatpush.msra.mxu0 0.0
  %88 = vmatpush.msra.mxu0 0.0
  %89 = vmatpush.msra.mxu0 0.0
  %90 = vmatpush.msra.mxu0 0.0
  %91 = vmatpush.msra.mxu0 0.0
  %92 = vmatpush.msra.mxu0 0.0
  %93 = vmatpush.msra.mxu0 0.0
  %94 = vmatpush.msra.mxu0 0.0
  %95 = vmatpush.msra.mxu0 0.0
  %96 = vmatpush.msra.mxu0 0.0
  %97 = vmatpush.msra.mxu0 0.0
  %98 = vmatpush.msra.mxu0 0.0
  %99 = vmatpush.msra.mxu0 0.0
  %100 = vmatpush.msra.mxu0 0.0
  %101 = vmatpush.msra.mxu0 %v84
  %102 = vmatmul.f32.gmra.mxu0 %v47
  %v103 = vpop.f32.mrf.mxu0
  %v104 = vadd.f32 0.0, %v103
  %105 = vmatmul.f32.gmra.mxu0 %v50
  %v106 = vpop.f32.mrf.mxu0
  %v107 = vadd.f32 0.0, %v106
  %108 = vmatmul.f32.gmra.mxu0 %v53
  %v109 = vpop.f32.mrf.mxu0
  %v110 = vadd.f32 0.0, %v109
  %111 = vmatmul.f32.gmra.mxu0 %v56
  %v112 = vpop.f32.mrf.mxu0
  %v113 = vadd.f32 0.0, %v112
  %114 = vmatmul.f32.gmra.mxu0 %v59
  %v115 = vpop.f32.mrf.mxu0
  %v116 = vadd.f32 0.0, %v115
  %117 = vmatmul.f32.gmra.mxu0 %v62
  %v118 = vpop.f32.mrf.mxu0
  %v119 = vadd.f32 0.0, %v118
  %120 = vmatmul.f32.gmra.mxu0 %v65
  %v121 = vpop.f32.mrf.mxu0
  %v122 = vadd.f32 0.0, %v121
  %123 = vmatmul.f32.gmra.mxu0 %v68
  %v124 = vpop.f32.mrf.mxu0
  %v125 = vadd.f32 0.0, %v124
  %126 = vmatmul.f32.gmra.mxu0 %v71
  %v127 = vpop.f32.mrf.mxu0
  %v128 = vadd.f32 0.0, %v127
  %129 = vmatmul.f32.gmra.mxu0 %v74
  %v130 = vpop.f32.mrf.mxu0
  %v131 = vadd.f32 0.0, %v130
  %132 = vmatmul.f32.gmra.mxu0 %v77
  %v133 = vpop.f32.mrf.mxu0
  %v134 = vadd.f32 0.0, %v133
  %135 = vmatmul.f32.gmra.mxu0 %v80
  %v136 = vpop.f32.mrf.mxu0
  %v137 = vadd.f32 0.0, %v136
  %138 = vdwg.mxu0
  %v139 = vmul.f32 %v104, %v104
  %v140 = vmul.f32 %v107, %v107
  %v141 = vmul.f32 %v110, %v110
  %v142 = vmul.f32 %v113, %v113
  %v143 = vmul.f32 %v116, %v116
  %v144 = vmul.f32 %v119, %v119
  %v145 = vmul.f32 %v122, %v122
  %v146 = vmul.f32 %v125, %v125
  %v147 = vadd.f32 %v139, %v143
  %v148 = vadd.f32 %v140, %v144
  %v149 = vadd.f32 %v141, %v145
  %v150 = vadd.f32 %v142, %v146
  %v151 = vmul.f32 %v128, %v128
  %v152 = vmul.f32 %v131, %v131
  %v153 = vmul.f32 %v134, %v134
  %v154 = vmul.f32 %v137, %v137
  %v155 = vadd.f32 %v147, %v151
  %v156 = vadd.f32 %v148, %v152
  %v157 = vadd.f32 %v149, %v153
  %v158 = vadd.f32 %v150, %v154
  %v159 = vmax.f32 %v155, 1e-08
  %v160 = vmax.f32 %v156, 1e-08
  %v161 = vmax.f32 %v157, 1e-08
  %v162 = vmax.f32 %v158, 1e-08
  %v163 = vrsqrt.pop %v159
  %v164 = vmul.f32 %v163, %v159
  %v165 = vmul.f32 %v164, %v163
  %v166 = vmul.f32 0.5, %v165
  %v167 = vsub.f32 1.5, %v166
  %v168 = vmul.f32 %v163, %v167
  %v169 = vmul.f32 %v159, %v168
  %vm170 = vcmp.eq.f32.partialorder %v159, inf
  %v171 = vsel %vm170, %v159, %v169
  %vm172 = vcmp.eq.f32.partialorder %v159, 0.0
  %v173 = vand.u32 %v159, 2147483648
  %v174 = vsel %vm172, %v173, %v171
  %v175 = vrsqrt.pop %v160
  %v176 = vmul.f32 %v175, %v160
  %v177 = vmul.f32 %v176, %v175
  %v178 = vmul.f32 0.5, %v177
  %v179 = vsub.f32 1.5, %v178
  %v180 = vmul.f32 %v175, %v179
  %v181 = vmul.f32 %v160, %v180
  %vm182 = vcmp.eq.f32.partialorder %v160, inf
  %v183 = vsel %vm182, %v160, %v181
  %vm184 = vcmp.eq.f32.partialorder %v160, 0.0
  %v185 = vand.u32 %v160, 2147483648
  %v186 = vsel %vm184, %v185, %v183
  %v187 = vrsqrt.pop %v161
  %v188 = vmul.f32 %v187, %v161
  %v189 = vmul.f32 %v188, %v187
  %v190 = vmul.f32 0.5, %v189
  %v191 = vsub.f32 1.5, %v190
  %v192 = vmul.f32 %v187, %v191
  %v193 = vmul.f32 %v161, %v192
  %vm194 = vcmp.eq.f32.partialorder %v161, inf
  %v195 = vsel %vm194, %v161, %v193
  %vm196 = vcmp.eq.f32.partialorder %v161, 0.0
  %v197 = vand.u32 %v161, 2147483648
  %v198 = vsel %vm196, %v197, %v195
  %v199 = vrsqrt.pop %v162
  %v200 = vmul.f32 %v199, %v162
  %v201 = vmul.f32 %v200, %v199
  %v202 = vmul.f32 0.5, %v201
  %v203 = vsub.f32 1.5, %v202
  %v204 = vmul.f32 %v199, %v203
  %v205 = vmul.f32 %v162, %v204
  %vm206 = vcmp.eq.f32.partialorder %v162, inf
  %v207 = vsel %vm206, %v162, %v205
  %vm208 = vcmp.eq.f32.partialorder %v162, 0.0
  %v209 = vand.u32 %v162, 2147483648
  %v210 = vsel %vm208, %v209, %v207
  %v211 = vld [vmem:[%s3] sm:$0xff]
  %v212 = vld [vmem:[%s3 + $0x8] sm:$0xff]
  %v213 = vld [vmem:[%s3 + $0x10] sm:$0xff]
  %v214 = vld [vmem:[%s3 + $0x18] sm:$0xff]
  %v215 = vld [vmem:[%s4] sm:$0xf]
  %v217 = vsel %vm45, %v174, 0
  %v220 = vsel %vm45, %v186, 0
  %v223 = vsel %vm45, %v198, 0
  %v226 = vsel %vm45, %v210, 0
  %v229 = vsel %vm82, %v215, 0
  %231 = vmatpush.msra.mxu0 0.0
  %232 = vmatpush.msra.mxu0 0.0
  %233 = vmatpush.msra.mxu0 0.0
  %234 = vmatpush.msra.mxu0 0.0
  %235 = vmatpush.msra.mxu0 0.0
  %236 = vmatpush.msra.mxu0 0.0
  %237 = vmatpush.msra.mxu0 0.0
  %238 = vmatpush.msra.mxu0 0.0
  %239 = vmatpush.msra.mxu0 0.0
  %240 = vmatpush.msra.mxu0 0.0
  %241 = vmatpush.msra.mxu0 0.0
  %242 = vmatpush.msra.mxu0 0.0
  %243 = vmatpush.msra.mxu0 0.0
  %244 = vmatpush.msra.mxu0 0.0
  %245 = vmatpush.msra.mxu0 0.0
  %246 = vmatpush.msra.mxu0 %v229
  %247 = vmatmul.f32.gmra.mxu0 %v217
  %v248 = vpop.f32.mrf.mxu0
  %v249 = vadd.f32 0.0, %v248
  %250 = vmatmul.f32.gmra.mxu0 %v220
  %v251 = vpop.f32.mrf.mxu0
  %v252 = vadd.f32 0.0, %v251
  %253 = vmatmul.f32.gmra.mxu0 %v223
  %v254 = vpop.f32.mrf.mxu0
  %v255 = vadd.f32 0.0, %v254
  %256 = vmatmul.f32.gmra.mxu0 %v226
  %v257 = vpop.f32.mrf.mxu0
  %v258 = vadd.f32 0.0, %v257
  %259 = vdwg.mxu0
  %vm260 = vcmask 261120
  %v262 = vsel %vm260, %v28, 0
  %v265 = vsel %vm260, %v29, 0
  %v268 = vsel %vm260, %v30, 0
  %v271 = vsel %vm260, %v31, 0
  %273 = vmatpush.msra.mxu0 0.0
  %274 = vmatpush.msra.mxu0 0.0
  %275 = vmatpush.msra.mxu0 0.0
  %276 = vmatpush.msra.mxu0 0.0
  %277 = vmatpush.msra.mxu0 0.0
  %278 = vmatpush.msra.mxu0 0.0
  %279 = vmatpush.msra.mxu0 0.0
  %280 = vmatpush.msra.mxu0 0.0
  %281 = vmatpush.msra.mxu0 0.0
  %282 = vmatpush.msra.mxu0 0.0
  %283 = vmatpush.msra.mxu0 0.0
  %284 = vmatpush.msra.mxu0 0.0
  %285 = vmatpush.msra.mxu0 %v214
  %286 = vmatpush.msra.mxu0 %v213
  %287 = vmatpush.msra.mxu0 %v212
  %288 = vmatpush.msra.mxu0 %v211
  %289 = vmatmul.f32.gmra.mxu0 %v262
  %v290 = vpop.f32.mrf.mxu0
  %v291 = vadd.f32 %v249, %v290
  %292 = vmatmul.f32.gmra.mxu0 %v265
  %v293 = vpop.f32.mrf.mxu0
  %v294 = vadd.f32 %v252, %v293
  %295 = vmatmul.f32.gmra.mxu0 %v268
  %v296 = vpop.f32.mrf.mxu0
  %v297 = vadd.f32 %v255, %v296
  %298 = vmatmul.f32.gmra.mxu0 %v271
  %v299 = vpop.f32.mrf.mxu0
  %v300 = vadd.f32 %v258, %v299
  %301 = vdwg.mxu0
  %v302 = vld [vmem:[%s5] sm:$0x1]
  %v304 = vperm.slane %v302, 0
  %v306 = vadd.f32 %v291, %v304
  %v307 = vadd.f32 %v294, %v304
  %v308 = vadd.f32 %v297, %v304
  %v309 = vadd.f32 %v300, %v304
  %310 = vst.msk [vmem:[%s7] sm:$0xff] %vm260, %v306
  %311 = vst.msk [vmem:[%s7 + $0x8] sm:$0xff] %vm260, %v307
  %312 = vst.msk [vmem:[%s7 + $0x10] sm:$0xff] %vm260, %v308
  %313 = vst.msk [vmem:[%s7 + $0x18] sm:$0xff] %vm260, %v309
  %v314 = vld [vmem:[%s6] sm:$0xf]
  %v316 = vsel %vm45, %v104, 0
  %v319 = vsel %vm45, %v107, 0
  %v322 = vsel %vm45, %v110, 0
  %v325 = vsel %vm45, %v113, 0
  %v328 = vsel %vm45, %v116, 0
  %v331 = vsel %vm45, %v119, 0
  %v334 = vsel %vm45, %v122, 0
  %v337 = vsel %vm45, %v125, 0
  %v340 = vsel %vm45, %v128, 0
  %v343 = vsel %vm45, %v131, 0
  %v346 = vsel %vm45, %v134, 0
  %v349 = vsel %vm45, %v137, 0
  %v352 = vsel %vm82, %v314, 0
  %354 = vmatpush.msra.mxu0 0.0
  %355 = vmatpush.msra.mxu0 0.0
  %356 = vmatpush.msra.mxu0 0.0
  %357 = vmatpush.msra.mxu0 0.0
  %358 = vmatpush.msra.mxu0 0.0
  %359 = vmatpush.msra.mxu0 0.0
  %360 = vmatpush.msra.mxu0 0.0
  %361 = vmatpush.msra.mxu0 0.0
  %362 = vmatpush.msra.mxu0 0.0
  %363 = vmatpush.msra.mxu0 0.0
  %364 = vmatpush.msra.mxu0 0.0
  %365 = vmatpush.msra.mxu0 0.0
  %366 = vmatpush.msra.mxu0 0.0
  %367 = vmatpush.msra.mxu0 0.0
  %368 = vmatpush.msra.mxu0 0.0
  %369 = vmatpush.msra.mxu0 %v352
  %370 = vmatmul.f32.gmra.mxu0 %v316
  %v371 = vpop.f32.mrf.mxu0
  %v372 = vadd.f32 0.0, %v371
  %373 = vmatmul.f32.gmra.mxu0 %v319
  %v374 = vpop.f32.mrf.mxu0
  %v375 = vadd.f32 0.0, %v374
  %376 = vmatmul.f32.gmra.mxu0 %v322
  %v377 = vpop.f32.mrf.mxu0
  %v378 = vadd.f32 0.0, %v377
  %379 = vmatmul.f32.gmra.mxu0 %v325
  %v380 = vpop.f32.mrf.mxu0
  %v381 = vadd.f32 0.0, %v380
  %382 = vmatmul.f32.gmra.mxu0 %v328
  %v383 = vpop.f32.mrf.mxu0
  %v384 = vadd.f32 0.0, %v383
  %385 = vmatmul.f32.gmra.mxu0 %v331
  %v386 = vpop.f32.mrf.mxu0
  %v387 = vadd.f32 0.0, %v386
  %388 = vmatmul.f32.gmra.mxu0 %v334
  %v389 = vpop.f32.mrf.mxu0
  %v390 = vadd.f32 0.0, %v389
  %391 = vmatmul.f32.gmra.mxu0 %v337
  %v392 = vpop.f32.mrf.mxu0
  %v393 = vadd.f32 0.0, %v392
  %394 = vmatmul.f32.gmra.mxu0 %v340
  %v395 = vpop.f32.mrf.mxu0
  %v396 = vadd.f32 0.0, %v395
  %397 = vmatmul.f32.gmra.mxu0 %v343
  %v398 = vpop.f32.mrf.mxu0
  %v399 = vadd.f32 0.0, %v398
  %400 = vmatmul.f32.gmra.mxu0 %v346
  %v401 = vpop.f32.mrf.mxu0
  %v402 = vadd.f32 0.0, %v401
  %403 = vmatmul.f32.gmra.mxu0 %v349
  %v404 = vpop.f32.mrf.mxu0
  %v405 = vadd.f32 0.0, %v404
  %406 = vdwg.mxu0
  %407 = vst.msk [vmem:[%s8] sm:$0xff] %vm45, %v372
  %408 = vst.msk [vmem:[%s8 + $0x8] sm:$0xff] %vm45, %v375
  %409 = vst.msk [vmem:[%s8 + $0x10] sm:$0xff] %vm45, %v378
  %410 = vst.msk [vmem:[%s8 + $0x18] sm:$0xff] %vm45, %v381
  %411 = vst.msk [vmem:[%s8 + $0x20] sm:$0xff] %vm45, %v384
  %412 = vst.msk [vmem:[%s8 + $0x28] sm:$0xff] %vm45, %v387
  %413 = vst.msk [vmem:[%s8 + $0x30] sm:$0xff] %vm45, %v390
  %414 = vst.msk [vmem:[%s8 + $0x38] sm:$0xff] %vm45, %v393
  %415 = vst.msk [vmem:[%s8 + $0x40] sm:$0xff] %vm45, %v396
  %416 = vst.msk [vmem:[%s8 + $0x48] sm:$0xff] %vm45, %v399
  %417 = vst.msk [vmem:[%s8 + $0x50] sm:$0xff] %vm45, %v402
  %418 = vst.msk [vmem:[%s8 + $0x58] sm:$0xff] %vm45, %v405
  // Predicated region
  $region30: #{dynamics_forward.17} parent=0 // pred_check
    _
  $region31: #{dynamics_forward.17} parent=0 // pred_check_branch
    %420 = sbr.rel (0) target = $region33
  $region32: #{dynamics_forward.17} parent=0 // pred_region
    _
  $region33: #{dynamics_forward.17} parent=0 // pred_fallthru
    _
  // Predicated region
  $region34: #{dynamics_forward.17} parent=0 // pred_check
    _
  $region35: #{dynamics_forward.17} parent=0 // pred_check_branch
    %422 = sbr.rel (0) target = $region37
  $region36: #{dynamics_forward.17} parent=0 // pred_region
    _
  $region37: #{dynamics_forward.17} parent=0 // pred_fallthru
    _
  // Predicated region
  $region38: #{dynamics_forward.17} parent=0 // pred_check
    _
  $region39: #{dynamics_forward.17} parent=0 // pred_check_branch
    %424 = sbr.rel (0) target = $region41
  $region40: #{dynamics_forward.17} parent=0 // pred_region
    _
  $region41: #{dynamics_forward.17} parent=0 // pred_fallthru
    _
  // Predicated region
  $region42: #{dynamics_forward.17} parent=0 // pred_check
    _
  $region43: #{dynamics_forward.17} parent=0 // pred_check_branch
    %426 = sbr.rel (0) target = $region45
  $region44: #{dynamics_forward.17} parent=0 // pred_region
    _
  $region45: #{dynamics_forward.17} parent=0 // pred_fallthru
    _

// kernel: dynamics_forward.18
$region0: #{dynamics_forward.18}
  #allocation0 [shape = 'u32[]', space=smem, size = 0x4, offset = 0x4, fixed_abs, tag = 'smem constant byte address 0x4 - core index']
  #allocation1 [shape = 'u32[72,128]{1,0:T(1,128)}', space=vmem, size = 0x9000, scoped, tag = 'internal scratch']
  %s0 = inlined_call_operand.vmem [shape: f32[16,32], index: 0, kind: input, shape index: {}]
  %s1 = inlined_call_operand.vmem [shape: f32[48,4], index: 1, kind: input, shape index: {}]
  %s2 = inlined_call_operand.vmem [shape: f32[1,32], index: 2, kind: input, shape index: {}]
  %s3 = inlined_call_operand.vmem [shape: f32[1,32], index: 3, kind: input, shape index: {}]
  %s4 = inlined_call_operand.vmem [shape: f32[16,32], index: 4, kind: output, shape index: {0}]
  %s5 = inlined_call_operand.vmem [shape: f32[48,4], index: 5, kind: output, shape index: {1}]
  %6 = xla_tuple %s4, %s5
  %s7 = sld [smem:[#allocation0]]
  $region34: #{dynamics_forward.18} parent=0
    _
  %s9 = ssub.s32 1, %s7
  %s10 = scalar_select 0, %s9, %s7
  // Predicated region
  $region2: #{dynamics_forward.18} parent=0 // pred_check
    _
  $region3: #{dynamics_forward.18} parent=0 // pred_check_branch
    %12 = sbr.rel (0) target = $region5
  $region4: #{dynamics_forward.18} parent=0 // pred_region
    _
  $region5: #{dynamics_forward.18} parent=0 // pred_fallthru
    _
  // Predicated region
  $region6: #{dynamics_forward.18} parent=0 // pred_check
    _
  $region7: #{dynamics_forward.18} parent=0 // pred_check_branch
    %14 = sbr.rel (0) target = $region9
  $region8: #{dynamics_forward.18} parent=0 // pred_region
    _
  $region9: #{dynamics_forward.18} parent=0 // pred_fallthru
    _
  // Predicated region
  $region10: #{dynamics_forward.18} parent=0 // pred_check
    _
  $region11: #{dynamics_forward.18} parent=0 // pred_check_branch
    %16 = sbr.rel (0) target = $region13
  $region12: #{dynamics_forward.18} parent=0 // pred_region
    _
  $region13: #{dynamics_forward.18} parent=0 // pred_fallthru
    _
  // Predicated region
  $region14: #{dynamics_forward.18} parent=0 // pred_check
    _
  $region15: #{dynamics_forward.18} parent=0 // pred_check_branch
    %18 = sbr.rel (0) target = $region17
  $region16: #{dynamics_forward.18} parent=0 // pred_region
    _
  $region17: #{dynamics_forward.18} parent=0 // pred_fallthru
    _
  %v19 = vld [vmem:[%s0] sm:$0xff]
  %v20 = vld [vmem:[%s0 + $0x8] sm:$0xff]
  %vm21 = vcmask 261120
  %v22 = vsel %vm21, %v19, 0.0
  %23 = vadd.xlane.f32.xlu0 %v22
  %v24 = vpop.xlane.xlu0 %23
  %v25 = vsel %vm21, %v20, 0.0
  %26 = vadd.xlane.f32.xlu0 %v25
  %v27 = vpop.xlane.xlu0 %26
  %v28 = vrcp.pop 32.0
  %v29 = vmul.f32 32.0, %v28
  %v30 = vsub.f32 1.0, %v29
  %v31 = vmul.f32 %v28, %v30
  %v32 = vadd.f32 %v28, %v31
  %vm33 = vweird.f32 %v28
  %v34 = vsel %vm33, %v28, %v32
  %v35 = vmul.f32 %v24, %v34
  %v36 = vmul.f32 %v27, %v34
  %v37 = vsub.f32 %v19, %v35
  %v38 = vsub.f32 %v20, %v36
  %v39 = vmul.f32 %v37, %v37
  %v40 = vmul.f32 %v38, %v38
  %v41 = vsel %vm21, %v39, 0.0
  %42 = vadd.xlane.f32.xlu0 %v41
  %v43 = vpop.xlane.xlu0 %42
  %v44 = vsel %vm21, %v40, 0.0
  %45 = vadd.xlane.f32.xlu0 %v44
  %v46 = vpop.xlane.xlu0 %45
  %v47 = vmul.f32 %v43, %v34
  %v48 = vmul.f32 %v46, %v34
  %v49 = vadd.f32 %v47, 1e-05
  %v50 = vadd.f32 %v48, 1e-05
  %v51 = vrsqrt.pop %v49
  %v52 = vmul.f32 %v51, %v49
  %v53 = vmul.f32 %v52, %v51
  %v54 = vmul.f32 0.5, %v53
  %v55 = vsub.f32 1.5, %v54
  %v56 = vmul.f32 %v51, %v55
  %vm57 = vweird.f32 %v49
  %vm58 = vweird.f32 %v51
  %vm59 = vmor %vm57, %vm58
  %v60 = vsel %vm59, %v51, %v56
  %v61 = vrsqrt.pop %v50
  %v62 = vmul.f32 %v61, %v50
  %v63 = vmul.f32 %v62, %v61
  %v64 = vmul.f32 0.5, %v63
  %v65 = vsub.f32 1.5, %v64
  %v66 = vmul.f32 %v61, %v65
  %vm67 = vweird.f32 %v50
  %vm68 = vweird.f32 %v61
  %vm69 = vmor %vm67, %vm68
  %v70 = vsel %vm69, %v61, %v66
  %v71 = vmul.f32 %v37, %v60
  %v72 = vmul.f32 %v38, %v70
  %v73 = vld [vmem:[%s2] sm:$0x1]
  %v75 = vperm.slane %v73, 0
  %v77 = vmul.f32 %v71, %v75
  %v78 = vmul.f32 %v72, %v75
  %v79 = vld [vmem:[%s3] sm:$0x1]
  %v81 = vperm.slane %v79, 0
  %v83 = vadd.f32 %v77, %v81
  %v84 = vadd.f32 %v78, %v81
  %85 = vst.msk [vmem:[%s4] sm:$0xff] %vm21, %v83
  %86 = vst.msk [vmem:[%s4 + $0x8] sm:$0xff] %vm21, %v84
  %v87 = vld [vmem:[%s1] sm:$0xff]
  %v88 = vld [vmem:[%s1 + $0x8] sm:$0xff]
  %v89 = vld [vmem:[%s1 + $0x10] sm:$0xff]
  %v90 = vld [vmem:[%s1 + $0x18] sm:$0xff]
  %v91 = vld [vmem:[%s1 + $0x20] sm:$0xff]
  %v92 = vld [vmem:[%s1 + $0x28] sm:$0xff]
  %v93 = vmul.f32 %v87, %v87
  %v94 = vmul.f32 %v88, %v88
  %v95 = vmul.f32 %v89, %v89
  %v96 = vmul.f32 %v90, %v90
  %v97 = vadd.f32 %v93, %v95
  %v98 = vadd.f32 %v94, %v96
  %v99 = vmul.f32 %v91, %v91
  %v100 = vmul.f32 %v92, %v92
  %v101 = vadd.f32 %v97, %v99
  %v102 = vadd.f32 %v98, %v100
  %v103 = vmax.f32 %v101, 1e-08
  %v104 = vmax.f32 %v102, 1e-08
  %vm105 = vcmask 31744
  %v106 = vsel %vm105, %v103, 0.0
  %107 = vadd.xlane.f32.xlu0 %v106
  %v108 = vpop.xlane.xlu0 %107
  %v109 = vsel %vm105, %v104, 0.0
  %110 = vadd.xlane.f32.xlu0 %v109
  %v111 = vpop.xlane.xlu0 %110
  %v112 = vrcp.pop 4.0
  %v113 = vmul.f32 4.0, %v112
  %v114 = vsub.f32 1.0, %v113
  %v115 = vmul.f32 %v112, %v114
  %v116 = vadd.f32 %v112, %v115
  %vm117 = vweird.f32 %v112
  %v118 = vsel %vm117, %v112, %v116
  %v119 = vmul.f32 %v108, %v118
  %v120 = vmul.f32 %v111, %v118
  %v121 = vrsqrt.pop %v119
  %v122 = vmul.f32 %v121, %v119
  %v123 = vmul.f32 %v122, %v121
  %v124 = vmul.f32 0.5, %v123
  %v125 = vsub.f32 1.5, %v124
  %v126 = vmul.f32 %v121, %v125
  %vm127 = vweird.f32 %v119
  %vm128 = vweird.f32 %v121
  %vm129 = vmor %vm127, %vm128
  %v130 = vsel %vm129, %v121, %v126
  %v131 = vrsqrt.pop %v120
  %v132 = vmul.f32 %v131, %v120
  %v133 = vmul.f32 %v132, %v131
  %v134 = vmul.f32 0.5, %v133
  %v135 = vsub.f32 1.5, %v134
  %v136 = vmul.f32 %v131, %v135
  %vm137 = vweird.f32 %v120
  %vm138 = vweird.f32 %v131
  %vm139 = vmor %vm137, %vm138
  %v140 = vsel %vm139, %v131, %v136
  %142 = vset.pattern.permute.xlu0 0
  %143 = vperm.xlu0 %142, %v130
  %v144 = vpop.permute.xlu0 %143
  %147 = vset.pattern.permute.xlu0 0
  %148 = vperm.xlu0 %147, %v140
  %v149 = vpop.permute.xlu0 %148
  %v151 = vmul.f32 %v87, %v144
  %v152 = vmul.f32 %v88, %v149
  %v153 = vmul.f32 %v89, %v144
  %v154 = vmul.f32 %v90, %v149
  %v155 = vmul.f32 %v91, %v144
  %v156 = vmul.f32 %v92, %v149
  %157 = vst.msk [vmem:[%s5] sm:$0xff] %vm105, %v151
  %158 = vst.msk [vmem:[%s5 + $0x8] sm:$0xff] %vm105, %v152
  %159 = vst.msk [vmem:[%s5 + $0x10] sm:$0xff] %vm105, %v153
  %160 = vst.msk [vmem:[%s5 + $0x18] sm:$0xff] %vm105, %v154
  %161 = vst.msk [vmem:[%s5 + $0x20] sm:$0xff] %vm105, %v155
  %162 = vst.msk [vmem:[%s5 + $0x28] sm:$0xff] %vm105, %v156
  // Predicated region
  $region18: #{dynamics_forward.18} parent=0 // pred_check
    _
  $region19: #{dynamics_forward.18} parent=0 // pred_check_branch
    %164 = sbr.rel (0) target = $region21
  $region20: #{dynamics_forward.18} parent=0 // pred_region
    _
  $region21: #{dynamics_forward.18} parent=0 // pred_fallthru
    _
  // Predicated region
  $region22: #{dynamics_forward.18} parent=0 // pred_check
    _
  $region23: #{dynamics_forward.18} parent=0 // pred_check_branch
    %166 = sbr.rel (0) target = $region25
  $region24: #{dynamics_forward.18} parent=0 // pred_region
    _
  $region25: #{dynamics_forward.18} parent=0 // pred_fallthru
    _
  // Predicated region
  $region26: #{dynamics_forward.18} parent=0 // pred_check
    _
  $region27: #{dynamics_forward.18} parent=0 // pred_check_branch
    %168 = sbr.rel (0) target = $region29
  $region28: #{dynamics_forward.18} parent=0 // pred_region
    _
  $region29: #{dynamics_forward.18} parent=0 // pred_fallthru
    _
  // Predicated region
  $region30: #{dynamics_forward.18} parent=0 // pred_check
    _
  $region31: #{dynamics_forward.18} parent=0 // pred_check_branch
    %170 = sbr.rel (0) target = $region33
  $region32: #{dynamics_forward.18} parent=0 // pred_region
    _
  $region33: #{dynamics_forward.18} parent=0 // pred_fallthru
    _

// kernel: dynamics_forward.20
$region0: #{dynamics_forward.20}
  #allocation0 [shape = 'u32[]', space=smem, size = 0x4, offset = 0x4, fixed_abs, tag = 'smem constant byte address 0x4 - core index']
  #allocation1 [shape = 'u32[72,128]{1,0:T(1,128)}', space=vmem, size = 0x9000, scoped, tag = 'internal scratch']
  %s0 = inlined_call_operand.vmem [shape: f32[16,128], index: 0, kind: input, shape index: {}]
  %s1 = inlined_call_operand.vmem [shape: f32[48,8], index: 1, kind: input, shape index: {}]
  %s2 = inlined_call_operand.vmem [shape: f32[8,8], index: 2, kind: input, shape index: {}]
  %s3 = inlined_call_operand.vmem [shape: f32[128,32], index: 3, kind: input, shape index: {}]
  %s4 = inlined_call_operand.vmem [shape: f32[8,32], index: 4, kind: input, shape index: {}]
  %s5 = inlined_call_operand.vmem [shape: f32[1,32], index: 5, kind: input, shape index: {}]
  %s6 = inlined_call_operand.vmem [shape: f32[8,4], index: 6, kind: input, shape index: {}]
  %s7 = inlined_call_operand.vmem [shape: f32[16,32], index: 7, kind: output, shape index: {0}]
  %s8 = inlined_call_operand.vmem [shape: f32[48,4], index: 8, kind: output, shape index: {1}]
  %9 = xla_tuple %s7, %s8
  %s10 = sld [smem:[#allocation0]]
  $region46: #{dynamics_forward.20} parent=0
    _
  %s12 = ssub.s32 1, %s10
  %s13 = scalar_select 0, %s12, %s10
  // Predicated region
  $region2: #{dynamics_forward.20} parent=0 // pred_check
    _
  $region3: #{dynamics_forward.20} parent=0 // pred_check_branch
    %15 = sbr.rel (0) target = $region5
  $region4: #{dynamics_forward.20} parent=0 // pred_region
    _
  $region5: #{dynamics_forward.20} parent=0 // pred_fallthru
    _
  // Predicated region
  $region6: #{dynamics_forward.20} parent=0 // pred_check
    _
  $region7: #{dynamics_forward.20} parent=0 // pred_check_branch
    %17 = sbr.rel (0) target = $region9
  $region8: #{dynamics_forward.20} parent=0 // pred_region
    _
  $region9: #{dynamics_forward.20} parent=0 // pred_fallthru
    _
  // Predicated region
  $region10: #{dynamics_forward.20} parent=0 // pred_check
    _
  $region11: #{dynamics_forward.20} parent=0 // pred_check_branch
    %19 = sbr.rel (0) target = $region13
  $region12: #{dynamics_forward.20} parent=0 // pred_region
    _
  $region13: #{dynamics_forward.20} parent=0 // pred_fallthru
    _
  // Predicated region
  $region14: #{dynamics_forward.20} parent=0 // pred_check
    _
  $region15: #{dynamics_forward.20} parent=0 // pred_check_branch
    %21 = sbr.rel (0) target = $region17
  $region16: #{dynamics_forward.20} parent=0 // pred_region
    _
  $region17: #{dynamics_forward.20} parent=0 // pred_fallthru
    _
  // Predicated region
  $region18: #{dynamics_forward.20} parent=0 // pred_check
    _
  $region19: #{dynamics_forward.20} parent=0 // pred_check_branch
    %23 = sbr.rel (0) target = $region21
  $region20: #{dynamics_forward.20} parent=0 // pred_region
    _
  $region21: #{dynamics_forward.20} parent=0 // pred_fallthru
    _
  // Predicated region
  $region22: #{dynamics_forward.20} parent=0 // pred_check
    _
  $region23: #{dynamics_forward.20} parent=0 // pred_check_branch
    %25 = sbr.rel (0) target = $region25
  $region24: #{dynamics_forward.20} parent=0 // pred_region
    _
  $region25: #{dynamics_forward.20} parent=0 // pred_fallthru
    _
  // Predicated region
  $region26: #{dynamics_forward.20} parent=0 // pred_check
    _
  $region27: #{dynamics_forward.20} parent=0 // pred_check_branch
    %27 = sbr.rel (0) target = $region29
  $region28: #{dynamics_forward.20} parent=0 // pred_region
    _
  $region29: #{dynamics_forward.20} parent=0 // pred_fallthru
    _
  %v28 = vld [vmem:[%s0] sm:$0xff]
  %v29 = vld [vmem:[%s0 + $0x8] sm:$0xff]
  %v30 = vld [vmem:[%s1] sm:$0xff]
  %v31 = vld [vmem:[%s1 + $0x8] sm:$0xff]
  %v32 = vld [vmem:[%s1 + $0x10] sm:$0xff]
  %v33 = vld [vmem:[%s1 + $0x18] sm:$0xff]
  %v34 = vld [vmem:[%s1 + $0x20] sm:$0xff]
  %v35 = vld [vmem:[%s1 + $0x28] sm:$0xff]
  %v36 = vld [vmem:[%s2] sm:$0xff]
  %vm37 = vcmask 64512
  %v39 = vsel %vm37, %v30, 0
  %v42 = vsel %vm37, %v31, 0
  %v45 = vsel %vm37, %v32, 0
  %v48 = vsel %vm37, %v33, 0
  %v51 = vsel %vm37, %v34, 0
  %v54 = vsel %vm37, %v35, 0
  %56 = vmatpush.msra.mxu0 0.0
  %57 = vmatpush.msra.mxu0 0.0
  %58 = vmatpush.msra.mxu0 0.0
  %59 = vmatpush.msra.mxu0 0.0
  %60 = vmatpush.msra.mxu0 0.0
  %61 = vmatpush.msra.mxu0 0.0
  %62 = vmatpush.msra.mxu0 0.0
  %63 = vmatpush.msra.mxu0 0.0
  %64 = vmatpush.msra.mxu0 0.0
  %65 = vmatpush.msra.mxu0 0.0
  %66 = vmatpush.msra.mxu0 0.0
  %67 = vmatpush.msra.mxu0 0.0
  %68 = vmatpush.msra.mxu0 0.0
  %69 = vmatpush.msra.mxu0 0.0
  %70 = vmatpush.msra.mxu0 0.0
  %71 = vmatpush.msra.mxu0 %v36
  %72 = vmatmul.f32.gmra.mxu0 %v39
  %v73 = vpop.f32.mrf.mxu0
  %v74 = vadd.f32 0.0, %v73
  %75 = vmatmul.f32.gmra.mxu0 %v42
  %v76 = vpop.f32.mrf.mxu0
  %v77 = vadd.f32 0.0, %v76
  %78 = vmatmul.f32.gmra.mxu0 %v45
  %v79 = vpop.f32.mrf.mxu0
  %v80 = vadd.f32 0.0, %v79
  %81 = vmatmul.f32.gmra.mxu0 %v48
  %v82 = vpop.f32.mrf.mxu0
  %v83 = vadd.f32 0.0, %v82
  %84 = vmatmul.f32.gmra.mxu0 %v51
  %v85 = vpop.f32.mrf.mxu0
  %v86 = vadd.f32 0.0, %v85
  %87 = vmatmul.f32.gmra.mxu0 %v54
  %v88 = vpop.f32.mrf.mxu0
  %v89 = vadd.f32 0.0, %v88
  %90 = vdwg.mxu0
  %v91 = vmul.f32 %v74, %v74
  %v92 = vmul.f32 %v77, %v77
  %v93 = vmul.f32 %v80, %v80
  %v94 = vmul.f32 %v83, %v83
  %v95 = vadd.f32 %v91, %v93
  %v96 = vadd.f32 %v92, %v94
  %v97 = vmul.f32 %v86, %v86
  %v98 = vmul.f32 %v89, %v89
  %v99 = vadd.f32 %v95, %v97
  %v100 = vadd.f32 %v96, %v98
  %v101 = vmax.f32 %v99, 1e-08
  %v102 = vmax.f32 %v100, 1e-08
  %v103 = vrsqrt.pop %v101
  %v104 = vmul.f32 %v103, %v101
  %v105 = vmul.f32 %v104, %v103
  %v106 = vmul.f32 0.5, %v105
  %v107 = vsub.f32 1.5, %v106
  %v108 = vmul.f32 %v103, %v107
  %v109 = vmul.f32 %v101, %v108
  %vm110 = vcmp.eq.f32.partialorder %v101, inf
  %v111 = vsel %vm110, %v101, %v109
  %vm112 = vcmp.eq.f32.partialorder %v101, 0.0
  %v113 = vand.u32 %v101, 2147483648
  %v114 = vsel %vm112, %v113, %v111
  %v115 = vrsqrt.pop %v102
  %v116 = vmul.f32 %v115, %v102
  %v117 = vmul.f32 %v116, %v115
  %v118 = vmul.f32 0.5, %v117
  %v119 = vsub.f32 1.5, %v118
  %v120 = vmul.f32 %v115, %v119
  %v121 = vmul.f32 %v102, %v120
  %vm122 = vcmp.eq.f32.partialorder %v102, inf
  %v123 = vsel %vm122, %v102, %v121
  %vm124 = vcmp.eq.f32.partialorder %v102, 0.0
  %v125 = vand.u32 %v102, 2147483648
  %v126 = vsel %vm124, %v125, %v123
  %v127 = vld [vmem:[%s3] sm:$0xff]
  %v128 = vld [vmem:[%s3 + $0x8] sm:$0xff]
  %v129 = vld [vmem:[%s3 + $0x10] sm:$0xff]
  %v130 = vld [vmem:[%s3 + $0x18] sm:$0xff]
  %v131 = vld [vmem:[%s3 + $0x20] sm:$0xff]
  %v132 = vld [vmem:[%s3 + $0x28] sm:$0xff]
  %v133 = vld [vmem:[%s3 + $0x30] sm:$0xff]
  %v134 = vld [vmem:[%s3 + $0x38] sm:$0xff]
  %v135 = vld [vmem:[%s3 + $0x40] sm:$0xff]
  %v136 = vld [vmem:[%s3 + $0x48] sm:$0xff]
  %v137 = vld [vmem:[%s3 + $0x50] sm:$0xff]
  %v138 = vld [vmem:[%s3 + $0x58] sm:$0xff]
  %v139 = vld [vmem:[%s3 + $0x60] sm:$0xff]
  %v140 = vld [vmem:[%s3 + $0x68] sm:$0xff]
  %v141 = vld [vmem:[%s3 + $0x70] sm:$0xff]
  %v142 = vld [vmem:[%s3 + $0x78] sm:$0xff]
  %v143 = vld [vmem:[%s4] sm:$0xff]
  %v145 = vsel %vm37, %v114, 0
  %v148 = vsel %vm37, %v126, 0
  %150 = vmatpush.msra.mxu0 0.0
  %151 = vmatpush.msra.mxu0 0.0
  %152 = vmatpush.msra.mxu0 0.0
  %153 = vmatpush.msra.mxu0 0.0
  %154 = vmatpush.msra.mxu0 0.0
  %155 = vmatpush.msra.mxu0 0.0
  %156 = vmatpush.msra.mxu0 0.0
  %157 = vmatpush.msra.mxu0 0.0
  %158 = vmatpush.msra.mxu0 0.0
  %159 = vmatpush.msra.mxu0 0.0
  %160 = vmatpush.msra.mxu0 0.0
  %161 = vmatpush.msra.mxu0 0.0
  %162 = vmatpush.msra.mxu0 0.0
  %163 = vmatpush.msra.mxu0 0.0
  %164 = vmatpush.msra.mxu0 0.0
  %165 = vmatpush.msra.mxu0 %v143
  %166 = vmatmul.f32.gmra.mxu0 %v145
  %v167 = vpop.f32.mrf.mxu0
  %v168 = vadd.f32 0.0, %v167
  %169 = vmatmul.f32.gmra.mxu0 %v148
  %v170 = vpop.f32.mrf.mxu0
  %v171 = vadd.f32 0.0, %v170
  %172 = vdwg.mxu0
  %173 = vmatpush.msra.mxu0 %v142
  %174 = vmatpush.msra.mxu0 %v141
  %175 = vmatpush.msra.mxu0 %v140
  %176 = vmatpush.msra.mxu0 %v139
  %177 = vmatpush.msra.mxu0 %v138
  %178 = vmatpush.msra.mxu0 %v137
  %179 = vmatpush.msra.mxu0 %v136
  %180 = vmatpush.msra.mxu0 %v135
  %181 = vmatpush.msra.mxu0 %v134
  %182 = vmatpush.msra.mxu0 %v133
  %183 = vmatpush.msra.mxu0 %v132
  %184 = vmatpush.msra.mxu0 %v131
  %185 = vmatpush.msra.mxu0 %v130
  %186 = vmatpush.msra.mxu0 %v129
  %187 = vmatpush.msra.mxu0 %v128
  %188 = vmatpush.msra.mxu0 %v127
  %189 = vmatmul.f32.gmra.mxu0 %v28
  %v190 = vpop.f32.mrf.mxu0
  %v191 = vadd.f32 %v168, %v190
  %192 = vmatmul.f32.gmra.mxu0 %v29
  %v193 = vpop.f32.mrf.mxu0
  %v194 = vadd.f32 %v171, %v193
  %195 = vdwg.mxu0
  %v196 = vld [vmem:[%s5] sm:$0x1]
  %v198 = vperm.slane %v196, 0
  %v200 = vadd.f32 %v191, %v198
  %v201 = vadd.f32 %v194, %v198
  %vm202 = vcmask 261120
  %203 = vst.msk [vmem:[%s7] sm:$0xff] %vm202, %v200
  %204 = vst.msk [vmem:[%s7 + $0x8] sm:$0xff] %vm202, %v201
  %v205 = vld [vmem:[%s6] sm:$0xff]
  %v207 = vsel %vm37, %v74, 0
  %v210 = vsel %vm37, %v77, 0
  %v213 = vsel %vm37, %v80, 0
  %v216 = vsel %vm37, %v83, 0
  %v219 = vsel %vm37, %v86, 0
  %v222 = vsel %vm37, %v89, 0
  %224 = vmatpush.msra.mxu0 0.0
  %225 = vmatpush.msra.mxu0 0.0
  %226 = vmatpush.msra.mxu0 0.0
  %227 = vmatpush.msra.mxu0 0.0
  %228 = vmatpush.msra.mxu0 0.0
  %229 = vmatpush.msra.mxu0 0.0
  %230 = vmatpush.msra.mxu0 0.0
  %231 = vmatpush.msra.mxu0 0.0
  %232 = vmatpush.msra.mxu0 0.0
  %233 = vmatpush.msra.mxu0 0.0
  %234 = vmatpush.msra.mxu0 0.0
  %235 = vmatpush.msra.mxu0 0.0
  %236 = vmatpush.msra.mxu0 0.0
  %237 = vmatpush.msra.mxu0 0.0
  %238 = vmatpush.msra.mxu0 0.0
  %239 = vmatpush.msra.mxu0 %v205
  %240 = vmatmul.f32.gmra.mxu0 %v207
  %v241 = vpop.f32.mrf.mxu0
  %v242 = vadd.f32 0.0, %v241
  %243 = vmatmul.f32.gmra.mxu0 %v210
  %v244 = vpop.f32.mrf.mxu0
  %v245 = vadd.f32 0.0, %v244
  %246 = vmatmul.f32.gmra.mxu0 %v213
  %v247 = vpop.f32.mrf.mxu0
  %v248 = vadd.f32 0.0, %v247
  %249 = vmatmul.f32.gmra.mxu0 %v216
  %v250 = vpop.f32.mrf.mxu0
  %v251 = vadd.f32 0.0, %v250
  %252 = vmatmul.f32.gmra.mxu0 %v219
  %v253 = vpop.f32.mrf.mxu0
  %v254 = vadd.f32 0.0, %v253
  %255 = vmatmul.f32.gmra.mxu0 %v222
  %v256 = vpop.f32.mrf.mxu0
  %v257 = vadd.f32 0.0, %v256
  %258 = vdwg.mxu0
  %vm259 = vcmask 31744
  %260 = vst.msk [vmem:[%s8] sm:$0xff] %vm259, %v242
  %261 = vst.msk [vmem:[%s8 + $0x8] sm:$0xff] %vm259, %v245
  %262 = vst.msk [vmem:[%s8 + $0x10] sm:$0xff] %vm259, %v248
  %263 = vst.msk [vmem:[%s8 + $0x18] sm:$0xff] %vm259, %v251
  %264 = vst.msk [vmem:[%s8 + $0x20] sm:$0xff] %vm259, %v254
  %265 = vst.msk [vmem:[%s8 + $0x28] sm:$0xff] %vm259, %v257
  // Predicated region
  $region30: #{dynamics_forward.20} parent=0 // pred_check
    _
  $region31: #{dynamics_forward.20} parent=0 // pred_check_branch
    %267 = sbr.rel (0) target = $region33
  $region32: #{dynamics_forward.20} parent=0 // pred_region
    _
  $region33: #{dynamics_forward.20} parent=0 // pred_fallthru
    _
  // Predicated region
  $region34: #{dynamics_forward.20} parent=0 // pred_check
    _
  $region35: #{dynamics_forward.20} parent=0 // pred_check_branch
    %269 = sbr.rel (0) target = $region37
  $region36: #{dynamics_forward.20} parent=0 // pred_region
    _
  $region37: #{dynamics_forward.20} parent=0 // pred_fallthru
    _
  // Predicated region
  $region38: #{dynamics_forward.20} parent=0 // pred_check
    _
  $region39: #{dynamics_forward.20} parent=0 // pred_check_branch
    %271 = sbr.rel (0) target = $region41
  $region40: #{dynamics_forward.20} parent=0 // pred_region
    _
  $region41: #{dynamics_forward.20} parent=0 // pred_fallthru
    _
  // Predicated region
  $region42: #{dynamics_forward.20} parent=0 // pred_check
    _
  $region43: #{dynamics_forward.20} parent=0 // pred_check_branch
    %273 = sbr.rel (0) target = $region45
  $region44: #{dynamics_forward.20} parent=0 // pred_region
    _
  $region45: #{dynamics_forward.20} parent=0 // pred_fallthru
    _

// kernel: dynamics_forward.19
$region0: #{dynamics_forward.19}
  #allocation0 [shape = 'u32[]', space=smem, size = 0x4, offset = 0x4, fixed_abs, tag = 'smem constant byte address 0x4 - core index']
  #allocation1 [shape = 'u32[72,128]{1,0:T(1,128)}', space=vmem, size = 0x9000, scoped, tag = 'internal scratch']
  %s0 = inlined_call_operand.vmem [shape: f32[16,32], index: 0, kind: input, shape index: {}]
  %s1 = inlined_call_operand.vmem [shape: f32[48,4], index: 1, kind: input, shape index: {}]
  %s2 = inlined_call_operand.vmem [shape: f32[4,8], index: 2, kind: input, shape index: {}]
  %s3 = inlined_call_operand.vmem [shape: f32[32,128], index: 3, kind: input, shape index: {}]
  %s4 = inlined_call_operand.vmem [shape: f32[8,128], index: 4, kind: input, shape index: {}]
  %s5 = inlined_call_operand.vmem [shape: f32[1,128], index: 5, kind: input, shape index: {}]
  %s6 = inlined_call_operand.vmem [shape: f32[8,8], index: 6, kind: input, shape index: {}]
  %s7 = inlined_call_operand.vmem [shape: f32[16,128], index: 7, kind: output, shape index: {0}]
  %s8 = inlined_call_operand.vmem [shape: f32[48,8], index: 8, kind: output, shape index: {1}]
  %9 = xla_tuple %s7, %s8
  %s10 = sld [smem:[#allocation0]]
  $region46: #{dynamics_forward.19} parent=0
    _
  %s12 = ssub.s32 1, %s10
  %s13 = scalar_select 0, %s12, %s10
  // Predicated region
  $region2: #{dynamics_forward.19} parent=0 // pred_check
    _
  $region3: #{dynamics_forward.19} parent=0 // pred_check_branch
    %15 = sbr.rel (0) target = $region5
  $region4: #{dynamics_forward.19} parent=0 // pred_region
    _
  $region5: #{dynamics_forward.19} parent=0 // pred_fallthru
    _
  // Predicated region
  $region6: #{dynamics_forward.19} parent=0 // pred_check
    _
  $region7: #{dynamics_forward.19} parent=0 // pred_check_branch
    %17 = sbr.rel (0) target = $region9
  $region8: #{dynamics_forward.19} parent=0 // pred_region
    _
  $region9: #{dynamics_forward.19} parent=0 // pred_fallthru
    _
  // Predicated region
  $region10: #{dynamics_forward.19} parent=0 // pred_check
    _
  $region11: #{dynamics_forward.19} parent=0 // pred_check_branch
    %19 = sbr.rel (0) target = $region13
  $region12: #{dynamics_forward.19} parent=0 // pred_region
    _
  $region13: #{dynamics_forward.19} parent=0 // pred_fallthru
    _
  // Predicated region
  $region14: #{dynamics_forward.19} parent=0 // pred_check
    _
  $region15: #{dynamics_forward.19} parent=0 // pred_check_branch
    %21 = sbr.rel (0) target = $region17
  $region16: #{dynamics_forward.19} parent=0 // pred_region
    _
  $region17: #{dynamics_forward.19} parent=0 // pred_fallthru
    _
  // Predicated region
  $region18: #{dynamics_forward.19} parent=0 // pred_check
    _
  $region19: #{dynamics_forward.19} parent=0 // pred_check_branch
    %23 = sbr.rel (0) target = $region21
  $region20: #{dynamics_forward.19} parent=0 // pred_region
    _
  $region21: #{dynamics_forward.19} parent=0 // pred_fallthru
    _
  // Predicated region
  $region22: #{dynamics_forward.19} parent=0 // pred_check
    _
  $region23: #{dynamics_forward.19} parent=0 // pred_check_branch
    %25 = sbr.rel (0) target = $region25
  $region24: #{dynamics_forward.19} parent=0 // pred_region
    _
  $region25: #{dynamics_forward.19} parent=0 // pred_fallthru
    _
  // Predicated region
  $region26: #{dynamics_forward.19} parent=0 // pred_check
    _
  $region27: #{dynamics_forward.19} parent=0 // pred_check_branch
    %27 = sbr.rel (0) target = $region29
  $region28: #{dynamics_forward.19} parent=0 // pred_region
    _
  $region29: #{dynamics_forward.19} parent=0 // pred_fallthru
    _
  %v28 = vld [vmem:[%s0] sm:$0xff]
  %v29 = vld [vmem:[%s0 + $0x8] sm:$0xff]
  %v30 = vld [vmem:[%s1] sm:$0xff]
  %v31 = vld [vmem:[%s1 + $0x8] sm:$0xff]
  %v32 = vld [vmem:[%s1 + $0x10] sm:$0xff]
  %v33 = vld [vmem:[%s1 + $0x18] sm:$0xff]
  %v34 = vld [vmem:[%s1 + $0x20] sm:$0xff]
  %v35 = vld [vmem:[%s1 + $0x28] sm:$0xff]
  %v36 = vld [vmem:[%s2] sm:$0xf]
  %vm37 = vcmask 31744
  %v39 = vsel %vm37, %v30, 0
  %v42 = vsel %vm37, %v31, 0
  %v45 = vsel %vm37, %v32, 0
  %v48 = vsel %vm37, %v33, 0
  %v51 = vsel %vm37, %v34, 0
  %v54 = vsel %vm37, %v35, 0
  %vm56 = vcmask 1043456
  %v58 = vsel %vm56, %v36, 0
  %60 = vmatpush.msra.mxu0 0.0
  %61 = vmatpush.msra.mxu0 0.0
  %62 = vmatpush.msra.mxu0 0.0
  %63 = vmatpush.msra.mxu0 0.0
  %64 = vmatpush.msra.mxu0 0.0
  %65 = vmatpush.msra.mxu0 0.0
  %66 = vmatpush.msra.mxu0 0.0
  %67 = vmatpush.msra.mxu0 0.0
  %68 = vmatpush.msra.mxu0 0.0
  %69 = vmatpush.msra.mxu0 0.0
  %70 = vmatpush.msra.mxu0 0.0
  %71 = vmatpush.msra.mxu0 0.0
  %72 = vmatpush.msra.mxu0 0.0
  %73 = vmatpush.msra.mxu0 0.0
  %74 = vmatpush.msra.mxu0 0.0
  %75 = vmatpush.msra.mxu0 %v58
  %76 = vmatmul.f32.gmra.mxu0 %v39
  %v77 = vpop.f32.mrf.mxu0
  %v78 = vadd.f32 0.0, %v77
  %79 = vmatmul.f32.gmra.mxu0 %v42
  %v80 = vpop.f32.mrf.mxu0
  %v81 = vadd.f32 0.0, %v80
  %82 = vmatmul.f32.gmra.mxu0 %v45
  %v83 = vpop.f32.mrf.mxu0
  %v84 = vadd.f32 0.0, %v83
  %85 = vmatmul.f32.gmra.mxu0 %v48
  %v86 = vpop.f32.mrf.mxu0
  %v87 = vadd.f32 0.0, %v86
  %88 = vmatmul.f32.gmra.mxu0 %v51
  %v89 = vpop.f32.mrf.mxu0
  %v90 = vadd.f32 0.0, %v89
  %91 = vmatmul.f32.gmra.mxu0 %v54
  %v92 = vpop.f32.mrf.mxu0
  %v93 = vadd.f32 0.0, %v92
  %94 = vdwg.mxu0
  %v95 = vmul.f32 %v78, %v78
  %v96 = vmul.f32 %v81, %v81
  %v97 = vmul.f32 %v84, %v84
  %v98 = vmul.f32 %v87, %v87
  %v99 = vadd.f32 %v95, %v97
  %v100 = vadd.f32 %v96, %v98
  %v101 = vmul.f32 %v90, %v90
  %v102 = vmul.f32 %v93, %v93
  %v103 = vadd.f32 %v99, %v101
  %v104 = vadd.f32 %v100, %v102
  %v105 = vmax.f32 %v103, 1e-08
  %v106 = vmax.f32 %v104, 1e-08
  %v107 = vrsqrt.pop %v105
  %v108 = vmul.f32 %v107, %v105
  %v109 = vmul.f32 %v108, %v107
  %v110 = vmul.f32 0.5, %v109
  %v111 = vsub.f32 1.5, %v110
  %v112 = vmul.f32 %v107, %v111
  %v113 = vmul.f32 %v105, %v112
  %vm114 = vcmp.eq.f32.partialorder %v105, inf
  %v115 = vsel %vm114, %v105, %v113
  %vm116 = vcmp.eq.f32.partialorder %v105, 0.0
  %v117 = vand.u32 %v105, 2147483648
  %v118 = vsel %vm116, %v117, %v115
  %v119 = vrsqrt.pop %v106
  %v120 = vmul.f32 %v119, %v106
  %v121 = vmul.f32 %v120, %v119
  %v122 = vmul.f32 0.5, %v121
  %v123 = vsub.f32 1.5, %v122
  %v124 = vmul.f32 %v119, %v123
  %v125 = vmul.f32 %v106, %v124
  %vm126 = vcmp.eq.f32.partialorder %v106, inf
  %v127 = vsel %vm126, %v106, %v125
  %vm128 = vcmp.eq.f32.partialorder %v106, 0.0
  %v129 = vand.u32 %v106, 2147483648
  %v130 = vsel %vm128, %v129, %v127
  %v131 = vld [vmem:[%s3] sm:$0xff]
  %v132 = vld [vmem:[%s3 + $0x8] sm:$0xff]
  %v133 = vld [vmem:[%s3 + $0x10] sm:$0xff]
  %v134 = vld [vmem:[%s3 + $0x18] sm:$0xff]
  %v135 = vld [vmem:[%s4] sm:$0xff]
  %vm136 = vcmask 64512
  %v138 = vsel %vm136, %v118, 0
  %v141 = vsel %vm136, %v130, 0
  %143 = vmatpush.msra.mxu0 0.0
  %144 = vmatpush.msra.mxu0 0.0
  %145 = vmatpush.msra.mxu0 0.0
  %146 = vmatpush.msra.mxu0 0.0
  %147 = vmatpush.msra.mxu0 0.0
  %148 = vmatpush.msra.mxu0 0.0
  %149 = vmatpush.msra.mxu0 0.0
  %150 = vmatpush.msra.mxu0 0.0
  %151 = vmatpush.msra.mxu0 0.0
  %152 = vmatpush.msra.mxu0 0.0
  %153 = vmatpush.msra.mxu0 0.0
  %154 = vmatpush.msra.mxu0 0.0
  %155 = vmatpush.msra.mxu0 0.0
  %156 = vmatpush.msra.mxu0 0.0
  %157 = vmatpush.msra.mxu0 0.0
  %158 = vmatpush.msra.mxu0 %v135
  %159 = vmatmul.f32.gmra.mxu0 %v138
  %v160 = vpop.f32.mrf.mxu0
  %v161 = vadd.f32 0.0, %v160
  %162 = vmatmul.f32.gmra.mxu0 %v141
  %v163 = vpop.f32.mrf.mxu0
  %v164 = vadd.f32 0.0, %v163
  %165 = vdwg.mxu0
  %vm166 = vcmask 261120
  %v168 = vsel %vm166, %v28, 0
  %v171 = vsel %vm166, %v29, 0
  %173 = vmatpush.msra.mxu0 0.0
  %174 = vmatpush.msra.mxu0 0.0
  %175 = vmatpush.msra.mxu0 0.0
  %176 = vmatpush.msra.mxu0 0.0
  %177 = vmatpush.msra.mxu0 0.0
  %178 = vmatpush.msra.mxu0 0.0
  %179 = vmatpush.msra.mxu0 0.0
  %180 = vmatpush.msra.mxu0 0.0
  %181 = vmatpush.msra.mxu0 0.0
  %182 = vmatpush.msra.mxu0 0.0
  %183 = vmatpush.msra.mxu0 0.0
  %184 = vmatpush.msra.mxu0 0.0
  %185 = vmatpush.msra.mxu0 %v134
  %186 = vmatpush.msra.mxu0 %v133
  %187 = vmatpush.msra.mxu0 %v132
  %188 = vmatpush.msra.mxu0 %v131
  %189 = vmatmul.f32.gmra.mxu0 %v168
  %v190 = vpop.f32.mrf.mxu0
  %v191 = vadd.f32 %v161, %v190
  %192 = vmatmul.f32.gmra.mxu0 %v171
  %v193 = vpop.f32.mrf.mxu0
  %v194 = vadd.f32 %v164, %v193
  %195 = vdwg.mxu0
  %v196 = vld [vmem:[%s5] sm:$0x1]
  %v198 = vperm.slane %v196, 0
  %v200 = vadd.f32 %v191, %v198
  %v201 = vadd.f32 %v194, %v198
  %v202 = vmax.f32 %v200, 0.0
  %v203 = vmax.f32 %v201, 0.0
  %204 = vst [vmem:[%s7] sm:$0xff] %v202
  %205 = vst [vmem:[%s7 + $0x8] sm:$0xff] %v203
  %v206 = vld [vmem:[%s6] sm:$0xff]
  %v208 = vsel %vm136, %v78, 0
  %v211 = vsel %vm136, %v81, 0
  %v214 = vsel %vm136, %v84, 0
  %v217 = vsel %vm136, %v87, 0
  %v220 = vsel %vm136, %v90, 0
  %v223 = vsel %vm136, %v93, 0
  %225 = vmatpush.msra.mxu0 0.0
  %226 = vmatpush.msra.mxu0 0.0
  %227 = vmatpush.msra.mxu0 0.0
  %228 = vmatpush.msra.mxu0 0.0
  %229 = vmatpush.msra.mxu0 0.0
  %230 = vmatpush.msra.mxu0 0.0
  %231 = vmatpush.msra.mxu0 0.0
  %232 = vmatpush.msra.mxu0 0.0
  %233 = vmatpush.msra.mxu0 0.0
  %234 = vmatpush.msra.mxu0 0.0
  %235 = vmatpush.msra.mxu0 0.0
  %236 = vmatpush.msra.mxu0 0.0
  %237 = vmatpush.msra.mxu0 0.0
  %238 = vmatpush.msra.mxu0 0.0
  %239 = vmatpush.msra.mxu0 0.0
  %240 = vmatpush.msra.mxu0 %v206
  %241 = vmatmul.f32.gmra.mxu0 %v208
  %v242 = vpop.f32.mrf.mxu0
  %v243 = vadd.f32 0.0, %v242
  %244 = vmatmul.f32.gmra.mxu0 %v211
  %v245 = vpop.f32.mrf.mxu0
  %v246 = vadd.f32 0.0, %v245
  %247 = vmatmul.f32.gmra.mxu0 %v214
  %v248 = vpop.f32.mrf.mxu0
  %v249 = vadd.f32 0.0, %v248
  %250 = vmatmul.f32.gmra.mxu0 %v217
  %v251 = vpop.f32.mrf.mxu0
  %v252 = vadd.f32 0.0, %v251
  %253 = vmatmul.f32.gmra.mxu0 %v220
  %v254 = vpop.f32.mrf.mxu0
  %v255 = vadd.f32 0.0, %v254
  %256 = vmatmul.f32.gmra.mxu0 %v223
  %v257 = vpop.f32.mrf.mxu0
  %v258 = vadd.f32 0.0, %v257
  %259 = vdwg.mxu0
  %v260 = vmul.f32 %v243, %v243
  %v261 = vmul.f32 %v246, %v246
  %v262 = vmul.f32 %v249, %v249
  %v263 = vmul.f32 %v252, %v252
  %v264 = vadd.f32 %v260, %v262
  %v265 = vadd.f32 %v261, %v263
  %v266 = vmul.f32 %v255, %v255
  %v267 = vmul.f32 %v258, %v258
  %v268 = vadd.f32 %v264, %v266
  %v269 = vadd.f32 %v265, %v267
  %v270 = vmax.f32 %v268, 1e-08
  %v271 = vmax.f32 %v269, 1e-08
  %v272 = vrsqrt.pop %v270
  %v273 = vmul.f32 %v272, %v270
  %v274 = vmul.f32 %v273, %v272
  %v275 = vmul.f32 0.5, %v274
  %v276 = vsub.f32 1.5, %v275
  %v277 = vmul.f32 %v272, %v276
  %v278 = vmul.f32 %v270, %v277
  %vm279 = vcmp.eq.f32.partialorder %v270, inf
  %v280 = vsel %vm279, %v270, %v278
  %vm281 = vcmp.eq.f32.partialorder %v270, 0.0
  %v282 = vand.u32 %v270, 2147483648
  %v283 = vsel %vm281, %v282, %v280
  %v284 = vrsqrt.pop %v271
  %v285 = vmul.f32 %v284, %v271
  %v286 = vmul.f32 %v285, %v284
  %v287 = vmul.f32 0.5, %v286
  %v288 = vsub.f32 1.5, %v287
  %v289 = vmul.f32 %v284, %v288
  %v290 = vmul.f32 %v271, %v289
  %vm291 = vcmp.eq.f32.partialorder %v271, inf
  %v292 = vsel %vm291, %v271, %v290
  %vm293 = vcmp.eq.f32.partialorder %v271, 0.0
  %v294 = vand.u32 %v271, 2147483648
  %v295 = vsel %vm293, %v294, %v292
  %v296 = vxor.u32 %v283, 2147483648
  %v297 = vxor.u32 %v295, 2147483648
  %v298 = vmul.f32 %v296, 1.442695
  %v299 = vpow.pop %v298
  %v300 = vmul.f32 %v297, 1.442695
  %v301 = vpow.pop %v300
  %v302 = vadd.f32 %v299, 1.0
  %v303 = vadd.f32 %v301, 1.0
  %v304 = vrcp.pop %v302
  %v305 = vmul.f32 %v302, %v304
  %v306 = vsub.f32 1.0, %v305
  %v307 = vmul.f32 %v304, %v306
  %v308 = vadd.f32 %v304, %v307
  %vm309 = vweird.f32 %v302
  %vm310 = vweird.f32 %v304
  %vm311 = vmor %vm309, %vm310
  %v312 = vsel %vm311, %v304, %v308
  %v313 = vand.u32 2147483647, %v302
  %vm314 = vcmp.eq.f32.partialorder %v313, 8.507059e+37
  %v315 = vand.u32 %v302, 2147483648
  %v316 = vor.u32 1.1754944e-38, %v315
  %v317 = vsel %vm314, %v316, %v312
  %v318 = vmul.f32 1.0, %v317
  %v319 = vrcp.pop %v303
  %v320 = vmul.f32 %v303, %v319
  %v321 = vsub.f32 1.0, %v320
  %v322 = vmul.f32 %v319, %v321
  %v323 = vadd.f32 %v319, %v322
  %vm324 = vweird.f32 %v303
  %vm325 = vweird.f32 %v319
  %vm326 = vmor %vm324, %vm325
  %v327 = vsel %vm326, %v319, %v323
  %v328 = vand.u32 2147483647, %v303
  %vm329 = vcmp.eq.f32.partialorder %v328, 8.507059e+37
  %v330 = vand.u32 %v303, 2147483648
  %v331 = vor.u32 1.1754944e-38, %v330
  %v332 = vsel %vm329, %v331, %v327
  %v333 = vmul.f32 1.0, %v332
  %v334 = vmul.f32 %v243, %v318
  %v335 = vmul.f32 %v246, %v333
  %v336 = vmul.f32 %v249, %v318
  %v337 = vmul.f32 %v252, %v333
  %v338 = vmul.f32 %v255, %v318
  %v339 = vmul.f32 %v258, %v333
  %340 = vst.msk [vmem:[%s8] sm:$0xff] %vm136, %v334
  %341 = vst.msk [vmem:[%s8 + $0x8] sm:$0xff] %vm136, %v335
  %342 = vst.msk [vmem:[%s8 + $0x10] sm:$0xff] %vm136, %v336
  %343 = vst.msk [vmem:[%s8 + $0x18] sm:$0xff] %vm136, %v337
  %344 = vst.msk [vmem:[%s8 + $0x20] sm:$0xff] %vm136, %v338
  %345 = vst.msk [vmem:[%s8 + $0x28] sm:$0xff] %vm136, %v339
  // Predicated region
  $region30: #{dynamics_forward.19} parent=0 // pred_check
    _
  $region31: #{dynamics_forward.19} parent=0 // pred_check_branch
    %347 = sbr.rel (0) target = $region33
  $region32: #{dynamics_forward.19} parent=0 // pred_region
    _
  $region33: #{dynamics_forward.19} parent=0 // pred_fallthru
    _
  // Predicated region
  $region34: #{dynamics_forward.19} parent=0 // pred_check
    _
  $region35: #{dynamics_forward.19} parent=0 // pred_check_branch
    %349 = sbr.rel (0) target = $region37
  $region36: #{dynamics_forward.19} parent=0 // pred_region
    _
  $region37: #{dynamics_forward.19} parent=0 // pred_fallthru
    _
  // Predicated region
  $region38: #{dynamics_forward.19} parent=0 // pred_check
    _
  $region39: #{dynamics_forward.19} parent=0 // pred_check_branch
    %351 = sbr.rel (0) target = $region41
  $region40: #{dynamics_forward.19} parent=0 // pred_region
    _
  $region41: #{dynamics_forward.19} parent=0 // pred_fallthru
    _
  // Predicated region
  $region42: #{dynamics_forward.19} parent=0 // pred_check
    _
  $region43: #{dynamics_forward.19} parent=0 // pred_check_branch
    %353 = sbr.rel (0) target = $region45
  $region44: #{dynamics_forward.19} parent=0 // pred_region
    _
  $region45: #{dynamics_forward.19} parent=0 // pred_fallthru
    _

// kernel: dynamics_forward.22
$region0: #{dynamics_forward.22}
  #allocation0 [shape = 'u32[]', space=smem, size = 0x4, offset = 0x4, fixed_abs, tag = 'smem constant byte address 0x4 - core index']
  #allocation1 [shape = 'u32[72,128]{1,0:T(1,128)}', space=vmem, size = 0x9000, scoped, tag = 'internal scratch']
  %s0 = inlined_call_operand.vmem [shape: f32[16,32], index: 0, kind: input, shape index: {}]
  %s1 = inlined_call_operand.vmem [shape: f32[48,4], index: 1, kind: input, shape index: {}]
  %s2 = inlined_call_operand.vmem [shape: f32[1,32], index: 2, kind: input, shape index: {}]
  %s3 = inlined_call_operand.vmem [shape: f32[1,32], index: 3, kind: input, shape index: {}]
  %s4 = inlined_call_operand.vmem [shape: f32[4,4], index: 4, kind: input, shape index: {}]
  %s5 = inlined_call_operand.vmem [shape: f32[32,16], index: 5, kind: input, shape index: {}]
  %s6 = inlined_call_operand.vmem [shape: f32[4,16], index: 6, kind: input, shape index: {}]
  %s7 = inlined_call_operand.vmem [shape: f32[1,16], index: 7, kind: input, shape index: {}]
  %s8 = inlined_call_operand.vmem [shape: f32[16,16], index: 8, kind: output, shape index: {}]
  %s9 = sld [smem:[#allocation0]]
  $region42: #{dynamics_forward.22} parent=0
    _
  %s11 = ssub.s32 1, %s9
  %s12 = scalar_select 0, %s11, %s9
  // Predicated region
  $region2: #{dynamics_forward.22} parent=0 // pred_check
    _
  $region3: #{dynamics_forward.22} parent=0 // pred_check_branch
    %14 = sbr.rel (0) target = $region5
  $region4: #{dynamics_forward.22} parent=0 // pred_region
    _
  $region5: #{dynamics_forward.22} parent=0 // pred_fallthru
    _
  // Predicated region
  $region6: #{dynamics_forward.22} parent=0 // pred_check
    _
  $region7: #{dynamics_forward.22} parent=0 // pred_check_branch
    %16 = sbr.rel (0) target = $region9
  $region8: #{dynamics_forward.22} parent=0 // pred_region
    _
  $region9: #{dynamics_forward.22} parent=0 // pred_fallthru
    _
  // Predicated region
  $region10: #{dynamics_forward.22} parent=0 // pred_check
    _
  $region11: #{dynamics_forward.22} parent=0 // pred_check_branch
    %18 = sbr.rel (0) target = $region13
  $region12: #{dynamics_forward.22} parent=0 // pred_region
    _
  $region13: #{dynamics_forward.22} parent=0 // pred_fallthru
    _
  // Predicated region
  $region14: #{dynamics_forward.22} parent=0 // pred_check
    _
  $region15: #{dynamics_forward.22} parent=0 // pred_check_branch
    %20 = sbr.rel (0) target = $region17
  $region16: #{dynamics_forward.22} parent=0 // pred_region
    _
  $region17: #{dynamics_forward.22} parent=0 // pred_fallthru
    _
  // Predicated region
  $region18: #{dynamics_forward.22} parent=0 // pred_check
    _
  $region19: #{dynamics_forward.22} parent=0 // pred_check_branch
    %22 = sbr.rel (0) target = $region21
  $region20: #{dynamics_forward.22} parent=0 // pred_region
    _
  $region21: #{dynamics_forward.22} parent=0 // pred_fallthru
    _
  // Predicated region
  $region22: #{dynamics_forward.22} parent=0 // pred_check
    _
  $region23: #{dynamics_forward.22} parent=0 // pred_check_branch
    %24 = sbr.rel (0) target = $region25
  $region24: #{dynamics_forward.22} parent=0 // pred_region
    _
  $region25: #{dynamics_forward.22} parent=0 // pred_fallthru
    _
  // Predicated region
  $region26: #{dynamics_forward.22} parent=0 // pred_check
    _
  $region27: #{dynamics_forward.22} parent=0 // pred_check_branch
    %26 = sbr.rel (0) target = $region29
  $region28: #{dynamics_forward.22} parent=0 // pred_region
    _
  $region29: #{dynamics_forward.22} parent=0 // pred_fallthru
    _
  // Predicated region
  $region30: #{dynamics_forward.22} parent=0 // pred_check
    _
  $region31: #{dynamics_forward.22} parent=0 // pred_check_branch
    %28 = sbr.rel (0) target = $region33
  $region32: #{dynamics_forward.22} parent=0 // pred_region
    _
  $region33: #{dynamics_forward.22} parent=0 // pred_fallthru
    _
  %v29 = vld [vmem:[%s0] sm:$0xff]
  %v30 = vld [vmem:[%s0 + $0x8] sm:$0xff]
  %v31 = vld [vmem:[%s1] sm:$0xff]
  %v32 = vld [vmem:[%s1 + $0x8] sm:$0xff]
  %v33 = vld [vmem:[%s1 + $0x10] sm:$0xff]
  %v34 = vld [vmem:[%s1 + $0x18] sm:$0xff]
  %v35 = vld [vmem:[%s1 + $0x20] sm:$0xff]
  %v36 = vld [vmem:[%s1 + $0x28] sm:$0xff]
  %vm37 = vcmask 261120
  %v38 = vsel %vm37, %v29, 0.0
  %39 = vadd.xlane.f32.xlu0 %v38
  %v40 = vpop.xlane.xlu0 %39
  %v41 = vsel %vm37, %v30, 0.0
  %42 = vadd.xlane.f32.xlu0 %v41
  %v43 = vpop.xlane.xlu0 %42
  %v44 = vrcp.pop 32.0
  %v45 = vmul.f32 32.0, %v44
  %v46 = vsub.f32 1.0, %v45
  %v47 = vmul.f32 %v44, %v46
  %v48 = vadd.f32 %v44, %v47
  %vm49 = vweird.f32 %v44
  %v50 = vsel %vm49, %v44, %v48
  %v51 = vmul.f32 %v40, %v50
  %v52 = vmul.f32 %v43, %v50
  %v53 = vsub.f32 %v29, %v51
  %v54 = vsub.f32 %v30, %v52
  %v55 = vmul.f32 %v53, %v53
  %v56 = vmul.f32 %v54, %v54
  %v57 = vsel %vm37, %v55, 0.0
  %58 = vadd.xlane.f32.xlu0 %v57
  %v59 = vpop.xlane.xlu0 %58
  %v60 = vsel %vm37, %v56, 0.0
  %61 = vadd.xlane.f32.xlu0 %v60
  %v62 = vpop.xlane.xlu0 %61
  %v63 = vmul.f32 %v59, %v50
  %v64 = vmul.f32 %v62, %v50
  %v65 = vadd.f32 %v63, 1e-05
  %v66 = vadd.f32 %v64, 1e-05
  %v67 = vrsqrt.pop %v65
  %v68 = vmul.f32 %v67, %v65
  %v69 = vmul.f32 %v68, %v67
  %v70 = vmul.f32 0.5, %v69
  %v71 = vsub.f32 1.5, %v70
  %v72 = vmul.f32 %v67, %v71
  %vm73 = vweird.f32 %v65
  %vm74 = vweird.f32 %v67
  %vm75 = vmor %vm73, %vm74
  %v76 = vsel %vm75, %v67, %v72
  %v77 = vrsqrt.pop %v66
  %v78 = vmul.f32 %v77, %v66
  %v79 = vmul.f32 %v78, %v77
  %v80 = vmul.f32 0.5, %v79
  %v81 = vsub.f32 1.5, %v80
  %v82 = vmul.f32 %v77, %v81
  %vm83 = vweird.f32 %v66
  %vm84 = vweird.f32 %v77
  %vm85 = vmor %vm83, %vm84
  %v86 = vsel %vm85, %v77, %v82
  %v87 = vmul.f32 %v53, %v76
  %v88 = vmul.f32 %v54, %v86
  %v89 = vld [vmem:[%s2] sm:$0x1]
  %v91 = vperm.slane %v89, 0
  %v93 = vmul.f32 %v87, %v91
  %v94 = vmul.f32 %v88, %v91
  %v95 = vld [vmem:[%s3] sm:$0x1]
  %v97 = vperm.slane %v95, 0
  %v99 = vadd.f32 %v93, %v97
  %v100 = vadd.f32 %v94, %v97
  %v101 = vmul.f32 %v31, %v31
  %v102 = vmul.f32 %v32, %v32
  %v103 = vmul.f32 %v33, %v33
  %v104 = vmul.f32 %v34, %v34
  %v105 = vadd.f32 %v101, %v103
  %v106 = vadd.f32 %v102, %v104
  %v107 = vmul.f32 %v35, %v35
  %v108 = vmul.f32 %v36, %v36
  %v109 = vadd.f32 %v105, %v107
  %v110 = vadd.f32 %v106, %v108
  %v111 = vmax.f32 %v109, 1e-08
  %v112 = vmax.f32 %v110, 1e-08
  %vm113 = vcmask 31744
  %v114 = vsel %vm113, %v111, 0.0
  %115 = vadd.xlane.f32.xlu0 %v114
  %v116 = vpop.xlane.xlu0 %115
  %v117 = vsel %vm113, %v112, 0.0
  %118 = vadd.xlane.f32.xlu0 %v117
  %v119 = vpop.xlane.xlu0 %118
  %v120 = vrcp.pop 4.0
  %v121 = vmul.f32 4.0, %v120
  %v122 = vsub.f32 1.0, %v121
  %v123 = vmul.f32 %v120, %v122
  %v124 = vadd.f32 %v120, %v123
  %vm125 = vweird.f32 %v120
  %v126 = vsel %vm125, %v120, %v124
  %v127 = vmul.f32 %v116, %v126
  %v128 = vmul.f32 %v119, %v126
  %v129 = vrsqrt.pop %v127
  %v130 = vmul.f32 %v129, %v127
  %v131 = vmul.f32 %v130, %v129
  %v132 = vmul.f32 0.5, %v131
  %v133 = vsub.f32 1.5, %v132
  %v134 = vmul.f32 %v129, %v133
  %vm135 = vweird.f32 %v127
  %vm136 = vweird.f32 %v129
  %vm137 = vmor %vm135, %vm136
  %v138 = vsel %vm137, %v129, %v134
  %v139 = vrsqrt.pop %v128
  %v140 = vmul.f32 %v139, %v128
  %v141 = vmul.f32 %v140, %v139
  %v142 = vmul.f32 0.5, %v141
  %v143 = vsub.f32 1.5, %v142
  %v144 = vmul.f32 %v139, %v143
  %vm145 = vweird.f32 %v128
  %vm146 = vweird.f32 %v139
  %vm147 = vmor %vm145, %vm146
  %v148 = vsel %vm147, %v139, %v144
  %150 = vset.pattern.permute.xlu0 0
  %151 = vperm.xlu0 %150, %v138
  %v152 = vpop.permute.xlu0 %151
  %155 = vset.pattern.permute.xlu0 0
  %156 = vperm.xlu0 %155, %v148
  %v157 = vpop.permute.xlu0 %156
  %v159 = vmul.f32 %v31, %v152
  %v160 = vmul.f32 %v32, %v157
  %v161 = vmul.f32 %v33, %v152
  %v162 = vmul.f32 %v34, %v157
  %v163 = vmul.f32 %v35, %v152
  %v164 = vmul.f32 %v36, %v157
  %v165 = vld [vmem:[%s4] sm:$0xf]
  %v167 = vsel %vm113, %v159, 0
  %v170 = vsel %vm113, %v160, 0
  %v173 = vsel %vm113, %v161, 0
  %v176 = vsel %vm113, %v162, 0
  %v179 = vsel %vm113, %v163, 0
  %v182 = vsel %vm113, %v164, 0
  %vm184 = vcmask 1043456
  %v186 = vsel %vm184, %v165, 0
  %188 = vmatpush.msra.mxu0 0.0
  %189 = vmatpush.msra.mxu0 0.0
  %190 = vmatpush.msra.mxu0 0.0
  %191 = vmatpush.msra.mxu0 0.0
  %192 = vmatpush.msra.mxu0 0.0
  %193 = vmatpush.msra.mxu0 0.0
  %194 = vmatpush.msra.mxu0 0.0
  %195 = vmatpush.msra.mxu0 0.0
  %196 = vmatpush.msra.mxu0 0.0
  %197 = vmatpush.msra.mxu0 0.0
  %198 = vmatpush.msra.mxu0 0.0
  %199 = vmatpush.msra.mxu0 0.0
  %200 = vmatpush.msra.mxu0 0.0
  %201 = vmatpush.msra.mxu0 0.0
  %202 = vmatpush.msra.mxu0 0.0
  %203 = vmatpush.msra.mxu0 %v186
  %204 = vmatmul.f32.gmra.mxu0 %v167
  %v205 = vpop.f32.mrf.mxu0
  %v206 = vadd.f32 0.0, %v205
  %207 = vmatmul.f32.gmra.mxu0 %v170
  %v208 = vpop.f32.mrf.mxu0
  %v209 = vadd.f32 0.0, %v208
  %210 = vmatmul.f32.gmra.mxu0 %v173
  %v211 = vpop.f32.mrf.mxu0
  %v212 = vadd.f32 0.0, %v211
  %213 = vmatmul.f32.gmra.mxu0 %v176
  %v214 = vpop.f32.mrf.mxu0
  %v215 = vadd.f32 0.0, %v214
  %216 = vmatmul.f32.gmra.mxu0 %v179
  %v217 = vpop.f32.mrf.mxu0
  %v218 = vadd.f32 0.0, %v217
  %219 = vmatmul.f32.gmra.mxu0 %v182
  %v220 = vpop.f32.mrf.mxu0
  %v221 = vadd.f32 0.0, %v220
  %222 = vdwg.mxu0
  %v223 = vmul.f32 %v206, %v206
  %v224 = vmul.f32 %v209, %v209
  %v225 = vmul.f32 %v212, %v212
  %v226 = vmul.f32 %v215, %v215
  %v227 = vadd.f32 %v223, %v225
  %v228 = vadd.f32 %v224, %v226
  %v229 = vmul.f32 %v218, %v218
  %v230 = vmul.f32 %v221, %v221
  %v231 = vadd.f32 %v227, %v229
  %v232 = vadd.f32 %v228, %v230
  %v233 = vmax.f32 %v231, 1e-08
  %v234 = vmax.f32 %v232, 1e-08
  %v235 = vrsqrt.pop %v233
  %v236 = vmul.f32 %v235, %v233
  %v237 = vmul.f32 %v236, %v235
  %v238 = vmul.f32 0.5, %v237
  %v239 = vsub.f32 1.5, %v238
  %v240 = vmul.f32 %v235, %v239
  %v241 = vmul.f32 %v233, %v240
  %vm242 = vcmp.eq.f32.partialorder %v233, inf
  %v243 = vsel %vm242, %v233, %v241
  %vm244 = vcmp.eq.f32.partialorder %v233, 0.0
  %v245 = vand.u32 %v233, 2147483648
  %v246 = vsel %vm244, %v245, %v243
  %v247 = vrsqrt.pop %v234
  %v248 = vmul.f32 %v247, %v234
  %v249 = vmul.f32 %v248, %v247
  %v250 = vmul.f32 0.5, %v249
  %v251 = vsub.f32 1.5, %v250
  %v252 = vmul.f32 %v247, %v251
  %v253 = vmul.f32 %v234, %v252
  %vm254 = vcmp.eq.f32.partialorder %v234, inf
  %v255 = vsel %vm254, %v234, %v253
  %vm256 = vcmp.eq.f32.partialorder %v234, 0.0
  %v257 = vand.u32 %v234, 2147483648
  %v258 = vsel %vm256, %v257, %v255
  %v259 = vld [vmem:[%s5] sm:$0xff]
  %v260 = vld [vmem:[%s5 + $0x8] sm:$0xff]
  %v261 = vld [vmem:[%s5 + $0x10] sm:$0xff]
  %v262 = vld [vmem:[%s5 + $0x18] sm:$0xff]
  %v263 = vld [vmem:[%s6] sm:$0xf]
  %v265 = vsel %vm113, %v246, 0
  %v268 = vsel %vm113, %v258, 0
  %v271 = vsel %vm184, %v263, 0
  %273 = vmatpush.msra.mxu0 0.0
  %274 = vmatpush.msra.mxu0 0.0
  %275 = vmatpush.msra.mxu0 0.0
  %276 = vmatpush.msra.mxu0 0.0
  %277 = vmatpush.msra.mxu0 0.0
  %278 = vmatpush.msra.mxu0 0.0
  %279 = vmatpush.msra.mxu0 0.0
  %280 = vmatpush.msra.mxu0 0.0
  %281 = vmatpush.msra.mxu0 0.0
  %282 = vmatpush.msra.mxu0 0.0
  %283 = vmatpush.msra.mxu0 0.0
  %284 = vmatpush.msra.mxu0 0.0
  %285 = vmatpush.msra.mxu0 0.0
  %286 = vmatpush.msra.mxu0 0.0
  %287 = vmatpush.msra.mxu0 0.0
  %288 = vmatpush.msra.mxu0 %v271
  %289 = vmatmul.f32.gmra.mxu0 %v265
  %v290 = vpop.f32.mrf.mxu0
  %v291 = vadd.f32 0.0, %v290
  %292 = vmatmul.f32.gmra.mxu0 %v268
  %v293 = vpop.f32.mrf.mxu0
  %v294 = vadd.f32 0.0, %v293
  %295 = vdwg.mxu0
  %v297 = vsel %vm37, %v99, 0
  %v300 = vsel %vm37, %v100, 0
  %302 = vmatpush.msra.mxu0 0.0
  %303 = vmatpush.msra.mxu0 0.0
  %304 = vmatpush.msra.mxu0 0.0
  %305 = vmatpush.msra.mxu0 0.0
  %306 = vmatpush.msra.mxu0 0.0
  %307 = vmatpush.msra.mxu0 0.0
  %308 = vmatpush.msra.mxu0 0.0
  %309 = vmatpush.msra.mxu0 0.0
  %310 = vmatpush.msra.mxu0 0.0
  %311 = vmatpush.msra.mxu0 0.0
  %312 = vmatpush.msra.mxu0 0.0
  %313 = vmatpush.msra.mxu0 0.0
  %314 = vmatpush.msra.mxu0 %v262
  %315 = vmatpush.msra.mxu0 %v261
  %316 = vmatpush.msra.mxu0 %v260
  %317 = vmatpush.msra.mxu0 %v259
  %318 = vmatmul.f32.gmra.mxu0 %v297
  %v319 = vpop.f32.mrf.mxu0
  %v320 = vadd.f32 %v291, %v319
  %321 = vmatmul.f32.gmra.mxu0 %v300
  %v322 = vpop.f32.mrf.mxu0
  %v323 = vadd.f32 %v294, %v322
  %324 = vdwg.mxu0
  %v325 = vld [vmem:[%s7] sm:$0x1]
  %v327 = vperm.slane %v325, 0
  %v329 = vadd.f32 %v320, %v327
  %v330 = vadd.f32 %v323, %v327
  %vm331 = vcmask 130048
  %332 = vst.msk [vmem:[%s8] sm:$0xff] %vm331, %v329
  %333 = vst.msk [vmem:[%s8 + $0x8] sm:$0xff] %vm331, %v330
  // Predicated region
  $region34: #{dynamics_forward.22} parent=0 // pred_check
    _
  $region35: #{dynamics_forward.22} parent=0 // pred_check_branch
    %335 = sbr.rel (0) target = $region37
  $region36: #{dynamics_forward.22} parent=0 // pred_region
    _
  $region37: #{dynamics_forward.22} parent=0 // pred_fallthru
    _
  // Predicated region
  $region38: #{dynamics_forward.22} parent=0 // pred_check
    _
  $region39: #{dynamics_forward.22} parent=0 // pred_check_branch
    %337 = sbr.rel (0) target = $region41
  $region40: #{dynamics_forward.22} parent=0 // pred_region
    _
  $region41: #{dynamics_forward.22} parent=0 // pred_fallthru
    _

// kernel: dynamics_forward.23
$region0: #{dynamics_forward.23}
  #allocation0 [shape = 'u32[]', space=smem, size = 0x4, offset = 0x4, fixed_abs, tag = 'smem constant byte address 0x4 - core index']
  #allocation1 [shape = 'u32[72,128]{1,0:T(1,128)}', space=vmem, size = 0x9000, scoped, tag = 'internal scratch']
  %s0 = inlined_call_operand.vmem [shape: f32[2,16], index: 0, kind: input, shape index: {}]
  %s1 = inlined_call_operand.vmem [shape: f32[16,8], index: 1, kind: input, shape index: {}]
  %s2 = inlined_call_operand.vmem [shape: f32[1,8], index: 2, kind: input, shape index: {}]
  %s3 = inlined_call_operand.vmem [shape: f32[8,11], index: 3, kind: input, shape index: {}]
  %s4 = inlined_call_operand.vmem [shape: f32[1,11], index: 4, kind: input, shape index: {}]
  %s5 = inlined_call_operand.hbm [shape: f32[2,11], index: 5, kind: output, shape index: {}]
  %s6 = sld [smem:[#allocation0]]
  $region30: #{dynamics_forward.23} parent=0
    _
  %s8 = ssub.s32 1, %s6
  %s9 = scalar_select 0, %s8, %s6
  $region1: #{dynamics_forward.23} parent=0
    #allocation2 [shape = 'u8[1024]{0}', space=vmem, size = 0x400, scoped, tag = 'output window, operand 0, single buffered']
    #allocation3 [shape = 's32[1]{0}', space=sflag, size = 0x4, scoped, tag = 'scoped memory for dynamics_forward.23']
    %10 = vsyncpa [#allocation3], 0
    // Predicated region
    $region2: #{dynamics_forward.23} parent=1 // pred_check
      _
    $region3: #{dynamics_forward.23} parent=1 // pred_check_branch
      %12 = sbr.rel (0) target = $region5
    $region4: #{dynamics_forward.23} parent=1 // pred_region
      _
    $region5: #{dynamics_forward.23} parent=1 // pred_fallthru
      _
    // Predicated region
    $region6: #{dynamics_forward.23} parent=1 // pred_check
      _
    $region7: #{dynamics_forward.23} parent=1 // pred_check_branch
      %14 = sbr.rel (0) target = $region9
    $region8: #{dynamics_forward.23} parent=1 // pred_region
      _
    $region9: #{dynamics_forward.23} parent=1 // pred_fallthru
      _
    // Predicated region
    $region10: #{dynamics_forward.23} parent=1 // pred_check
      _
    $region11: #{dynamics_forward.23} parent=1 // pred_check_branch
      %16 = sbr.rel (0) target = $region13
    $region12: #{dynamics_forward.23} parent=1 // pred_region
      _
    $region13: #{dynamics_forward.23} parent=1 // pred_fallthru
      _
    // Predicated region
    $region14: #{dynamics_forward.23} parent=1 // pred_check
      _
    $region15: #{dynamics_forward.23} parent=1 // pred_check_branch
      %18 = sbr.rel (0) target = $region17
    $region16: #{dynamics_forward.23} parent=1 // pred_region
      _
    $region17: #{dynamics_forward.23} parent=1 // pred_fallthru
      _
    // Predicated region
    $region18: #{dynamics_forward.23} parent=1 // pred_check
      _
    $region19: #{dynamics_forward.23} parent=1 // pred_check_branch
      %20 = sbr.rel (0) target = $region21
    $region20: #{dynamics_forward.23} parent=1 // pred_region
      _
    $region21: #{dynamics_forward.23} parent=1 // pred_fallthru
      _
    %v21 = vld [vmem:[%s0] sm:$0x3]
    %v22 = vld [vmem:[%s1] sm:$0xff]
    %v23 = vld [vmem:[%s1 + $0x8] sm:$0xff]
    %v24 = vld [vmem:[%s2] sm:$0x1]
    %v26 = vperm.slane %v24, 0
    %vm28 = vcmask 130048
    %v30 = vsel %vm28, %v21, 0
    %32 = vmatpush.msra.mxu0 0.0
    %33 = vmatpush.msra.mxu0 0.0
    %34 = vmatpush.msra.mxu0 0.0
    %35 = vmatpush.msra.mxu0 0.0
    %36 = vmatpush.msra.mxu0 0.0
    %37 = vmatpush.msra.mxu0 0.0
    %38 = vmatpush.msra.mxu0 0.0
    %39 = vmatpush.msra.mxu0 0.0
    %40 = vmatpush.msra.mxu0 0.0
    %41 = vmatpush.msra.mxu0 0.0
    %42 = vmatpush.msra.mxu0 0.0
    %43 = vmatpush.msra.mxu0 0.0
    %44 = vmatpush.msra.mxu0 0.0
    %45 = vmatpush.msra.mxu0 0.0
    %46 = vmatpush.msra.mxu0 %v23
    %47 = vmatpush.msra.mxu0 %v22
    %48 = vmatmul.f32.gmra.mxu0 %v30
    %v49 = vpop.f32.mrf.mxu0
    %v50 = vadd.f32 %v26, %v49
    %51 = vdwg.mxu0
    %vm52 = vcmp.gt.f32.partialorder %v50, 0.0
    %v53 = vmul.f32 %v50, 0.01
    %v54 = vsel %vm52, %v50, %v53
    %v55 = vld [vmem:[%s3] sm:$0xff]
    %v56 = vld [vmem:[%s4] sm:$0x1]
    %v58 = vperm.slane %v56, 0
    %vm60 = vcmask 64512
    %v62 = vsel %vm60, %v54, 0
    %64 = vmatpush.msra.mxu0 0.0
    %65 = vmatpush.msra.mxu0 0.0
    %66 = vmatpush.msra.mxu0 0.0
    %67 = vmatpush.msra.mxu0 0.0
    %68 = vmatpush.msra.mxu0 0.0
    %69 = vmatpush.msra.mxu0 0.0
    %70 = vmatpush.msra.mxu0 0.0
    %71 = vmatpush.msra.mxu0 0.0
    %72 = vmatpush.msra.mxu0 0.0
    %73 = vmatpush.msra.mxu0 0.0
    %74 = vmatpush.msra.mxu0 0.0
    %75 = vmatpush.msra.mxu0 0.0
    %76 = vmatpush.msra.mxu0 0.0
    %77 = vmatpush.msra.mxu0 0.0
    %78 = vmatpush.msra.mxu0 0.0
    %79 = vmatpush.msra.mxu0 %v55
    %80 = vmatmul.f32.gmra.mxu0 %v62
    %v81 = vpop.f32.mrf.mxu0
    %v82 = vadd.f32 %v58, %v81
    %83 = vdwg.mxu0
    %vm84 = vcmask 82944
    %85 = vst.msk [vmem:[#allocation2] sm:$0x3] %vm84, %v82
    // Predicated region
    $region22: #{dynamics_forward.23} parent=1 // pred_check
      _
    $region23: #{dynamics_forward.23} parent=1 // pred_check_branch
      %87 = sbr.rel (0) target = $region25
    $region24: #{dynamics_forward.23} parent=1 // pred_region
      %89 = vsyncadd [#allocation3], 0
      %s91 = sshll.u32 [#allocation2], 4
      %s92 = int_to_ptr.vmem [resolvable:$true] %s91
      %s93 = sshll.u32 %s5, 4
      %s94 = int_to_ptr.hbm [resolvable:$true] %s93
      %96 = dma.vmem_to_hbm [thread:$0]  %s92, 32, %s94, [#allocation3]
    $region25: #{dynamics_forward.23} parent=1 // pred_fallthru
      _
    // Predicated region
    $region26: #{dynamics_forward.23} parent=1 // pred_check
      _
    $region27: #{dynamics_forward.23} parent=1 // pred_check_branch
      %98 = sbr.rel (0) target = $region29
    $region28: #{dynamics_forward.23} parent=1 // pred_region
      %100 = dma.done [#allocation3], 32
    $region29: #{dynamics_forward.23} parent=1 // pred_fallthru
      _
    %101 = vsyncpa [#allocation3], 1

// kernel: dynamics_forward.12
$region0: #{dynamics_forward.12}
  #allocation0 [shape = 'u32[]', space=smem, size = 0x4, offset = 0x4, fixed_abs, tag = 'smem constant byte address 0x4 - core index']
  #allocation1 [shape = 'u32[72,128]{1,0:T(1,128)}', space=vmem, size = 0x9000, scoped, tag = 'internal scratch']
  %s0 = inlined_call_operand.vmem [shape: f32[16,156], index: 0, kind: input, shape index: {}]
  %s1 = inlined_call_operand.vmem [shape: f32[156,32], index: 1, kind: input, shape index: {}]
  %s2 = inlined_call_operand.vmem [shape: f32[1,32], index: 2, kind: input, shape index: {}]
  %s3 = inlined_call_operand.vmem [shape: f32[96,32], index: 3, kind: input, shape index: {}]
  %s4 = inlined_call_operand.vmem [shape: f32[1,32], index: 4, kind: input, shape index: {}]
  %s5 = inlined_call_operand.hbm [shape: f32[16,32], index: 5, kind: output, shape index: {}]
  %s6 = sld [smem:[#allocation0]]
  $region30: #{dynamics_forward.12} parent=0
    _
  %s8 = ssub.s32 1, %s6
  %s9 = scalar_select 0, %s8, %s6
  $region1: #{dynamics_forward.12} parent=0
    #allocation2 [shape = 'u8[8192]{0}', space=vmem, size = 0x2000, scoped, tag = 'output window, operand 0, single buffered']
    #allocation3 [shape = 's32[1]{0}', space=sflag, size = 0x4, scoped, tag = 'scoped memory for dynamics_forward.12']
    %10 = vsyncpa [#allocation3], 0
    // Predicated region
    $region2: #{dynamics_forward.12} parent=1 // pred_check
      _
    $region3: #{dynamics_forward.12} parent=1 // pred_check_branch
      %12 = sbr.rel (0) target = $region5
    $region4: #{dynamics_forward.12} parent=1 // pred_region
      _
    $region5: #{dynamics_forward.12} parent=1 // pred_fallthru
      _
    // Predicated region
    $region6: #{dynamics_forward.12} parent=1 // pred_check
      _
    $region7: #{dynamics_forward.12} parent=1 // pred_check_branch
      %14 = sbr.rel (0) target = $region9
    $region8: #{dynamics_forward.12} parent=1 // pred_region
      _
    $region9: #{dynamics_forward.12} parent=1 // pred_fallthru
      _
    // Predicated region
    $region10: #{dynamics_forward.12} parent=1 // pred_check
      _
    $region11: #{dynamics_forward.12} parent=1 // pred_check_branch
      %16 = sbr.rel (0) target = $region13
    $region12: #{dynamics_forward.12} parent=1 // pred_region
      _
    $region13: #{dynamics_forward.12} parent=1 // pred_fallthru
      _
    // Predicated region
    $region14: #{dynamics_forward.12} parent=1 // pred_check
      _
    $region15: #{dynamics_forward.12} parent=1 // pred_check_branch
      %18 = sbr.rel (0) target = $region17
    $region16: #{dynamics_forward.12} parent=1 // pred_region
      _
    $region17: #{dynamics_forward.12} parent=1 // pred_fallthru
      _
    // Predicated region
    $region18: #{dynamics_forward.12} parent=1 // pred_check
      _
    $region19: #{dynamics_forward.12} parent=1 // pred_check_branch
      %20 = sbr.rel (0) target = $region21
    $region20: #{dynamics_forward.12} parent=1 // pred_region
      _
    $region21: #{dynamics_forward.12} parent=1 // pred_fallthru
      _
    %v21 = vld [vmem:[%s0] sm:$0xff]
    %v22 = vld [vmem:[%s0 + $0x8] sm:$0xff]
    %v23 = vld [vmem:[%s0 + $0x10] sm:$0xff]
    %v24 = vld [vmem:[%s0 + $0x18] sm:$0xff]
    %v25 = vld [vmem:[%s1] sm:$0xff]
    %v26 = vld [vmem:[%s1 + $0x8] sm:$0xff]
    %v27 = vld [vmem:[%s1 + $0x10] sm:$0xff]
    %v28 = vld [vmem:[%s1 + $0x18] sm:$0xff]
    %v29 = vld [vmem:[%s1 + $0x20] sm:$0xff]
    %v30 = vld [vmem:[%s1 + $0x28] sm:$0xff]
    %v31 = vld [vmem:[%s1 + $0x30] sm:$0xff]
    %v32 = vld [vmem:[%s1 + $0x38] sm:$0xff]
    %v33 = vld [vmem:[%s1 + $0x40] sm:$0xff]
    %v34 = vld [vmem:[%s1 + $0x48] sm:$0xff]
    %v35 = vld [vmem:[%s1 + $0x50] sm:$0xff]
    %v36 = vld [vmem:[%s1 + $0x58] sm:$0xff]
    %v37 = vld [vmem:[%s1 + $0x60] sm:$0xff]
    %v38 = vld [vmem:[%s1 + $0x68] sm:$0xff]
    %v39 = vld [vmem:[%s1 + $0x70] sm:$0xff]
    %v40 = vld [vmem:[%s1 + $0x78] sm:$0xff]
    %v41 = vld [vmem:[%s1 + $0x80] sm:$0xff]
    %v42 = vld [vmem:[%s1 + $0x88] sm:$0xff]
    %v43 = vld [vmem:[%s1 + $0x90] sm:$0xff]
    %v44 = vld [vmem:[%s1 + $0x98] sm:$0xf]
    %v45 = vld [vmem:[%s2] sm:$0x1]
    %v47 = vperm.slane %v45, 0
    %vm49 = vcmask 228352
    %v51 = vsel %vm49, %v22, 0
    %v54 = vsel %vm49, %v24, 0
    %vm56 = vcmask 1043456
    %v58 = vsel %vm56, %v44, 0
    %60 = vmatpush.msra.mxu0 %v40
    %61 = vmatpush.msra.mxu0 %v39
    %62 = vmatpush.msra.mxu0 %v38
    %63 = vmatpush.msra.mxu0 %v37
    %64 = vmatpush.msra.mxu0 %v36
    %65 = vmatpush.msra.mxu0 %v35
    %66 = vmatpush.msra.mxu0 %v34
    %67 = vmatpush.msra.mxu0 %v33
    %68 = vmatpush.msra.mxu0 %v32
    %69 = vmatpush.msra.mxu0 %v31
    %70 = vmatpush.msra.mxu0 %v30
    %71 = vmatpush.msra.mxu0 %v29
    %72 = vmatpush.msra.mxu0 %v28
    %73 = vmatpush.msra.mxu0 %v27
    %74 = vmatpush.msra.mxu0 %v26
    %75 = vmatpush.msra.mxu0 %v25
    %76 = vmatmul.f32.gmra.mxu0 %v21
    %v77 = vpop.f32.mrf.mxu0
    %v78 = vadd.f32 %v47, %v77
    %79 = vmatmul.f32.gmra.mxu0 %v23
    %v80 = vpop.f32.mrf.mxu0
    %v81 = vadd.f32 %v47, %v80
    %82 = vdwg.mxu0
    %83 = vmatpush.msra.mxu0 0.0
    %84 = vmatpush.msra.mxu0 0.0
    %85 = vmatpush.msra.mxu0 0.0
    %86 = vmatpush.msra.mxu0 0.0
    %87 = vmatpush.msra.mxu0 0.0
    %88 = vmatpush.msra.mxu0 0.0
    %89 = vmatpush.msra.mxu0 0.0
    %90 = vmatpush.msra.mxu0 0.0
    %91 = vmatpush.msra.mxu0 0.0
    %92 = vmatpush.msra.mxu0 0.0
    %93 = vmatpush.msra.mxu0 0.0
    %94 = vmatpush.msra.mxu0 0.0
    %95 = vmatpush.msra.mxu0 %v58
    %96 = vmatpush.msra.mxu0 %v43
    %97 = vmatpush.msra.mxu0 %v42
    %98 = vmatpush.msra.mxu0 %v41
    %99 = vmatmul.f32.gmra.mxu0 %v51
    %v100 = vpop.f32.mrf.mxu0
    %v101 = vadd.f32 %v78, %v100
    %102 = vmatmul.f32.gmra.mxu0 %v54
    %v103 = vpop.f32.mrf.mxu0
    %v104 = vadd.f32 %v81, %v103
    %105 = vdwg.mxu0
    %v106 = vmax.f32 %v101, 0.0
    %v107 = vmax.f32 %v104, 0.0
    %v108 = vlaneseq
    %v109 = vshrl.u32 %v108, 7
    %v110 = vadd.s32 %v109, 8
    %v111 = vlaneseq
    %v112 = vand.u32 %v111, 127
    %v113 = vsub.s32 %v109, 1
    %v114 = vsub.s32 %v110, 1
    %vm115 = vcmp.eq.s32.totalorder %v112, %v113
    %vm116 = vcmp.eq.s32.totalorder %v112, %v114
    %vm117 = vcmp.lt.s32.totalorder %v109, 0
    %v118 = vsub.s32 0, %v109
    %v119 = vsel %vm117, %v118, %v109
    %v120 = vshrl.u32 %v119, 3
    %v121 = vand.u32 %v119, 7
    %v122 = vsub.s32 0, %v121
    %v123 = vsel %vm117, %v122, %v121
    %vm124 = vcmp.lt.s32.totalorder %v110, 0
    %v125 = vsub.s32 0, %v110
    %v126 = vsel %vm124, %v125, %v110
    %v127 = vshrl.u32 %v126, 3
    %v128 = vand.u32 %v126, 7
    %v129 = vsub.s32 0, %v128
    %v130 = vsel %vm124, %v129, %v128
    %vm131 = vcmp.ne.s32.totalorder %v123, 0
    %vm132 = vcmp.ne.s32.totalorder %v130, 0
    %vm133 = vcmp.lt.s32.totalorder %v123, 0
    %vm134 = vcmp.lt.s32.totalorder %v130, 0
    %vm135 = vmand %vm133, %vm131
    %vm136 = vmand %vm134, %vm132
    %v137 = vadd.s32 %v123, 8
    %v138 = vadd.s32 %v130, 8
    %v139 = vsel %vm135, %v137, %v123
    %v140 = vsel %vm136, %v138, %v130
    %vm141 = vcmp.ne.s32.totalorder %v139, 0
    %vm142 = vcmp.ne.s32.totalorder %v140, 0
    %vm143 = vmand %vm115, %vm141
    %vm144 = vmand %vm116, %vm142
    %v145 = vsel %vm143, 1.0, 0.0
    %v146 = vsel %vm144, 1.0, 0.0
    %v147 = vadd.s32 %v109, 1
    %v148 = vadd.s32 %v110, 1
    %vm149 = vcmp.eq.s32.totalorder %v112, %v147
    %vm150 = vcmp.eq.s32.totalorder %v112, %v148
    %vm151 = vcmp.ne.s32.totalorder %v139, 7
    %vm152 = vcmp.ne.s32.totalorder %v140, 7
    %vm153 = vmand %vm149, %vm151
    %vm154 = vmand %vm150, %vm152
    %v155 = vsel %vm153, 1.0, 0.0
    %v156 = vsel %vm154, 1.0, 0.0
    %vm157 = vcmask 130048
    %v159 = vsel %vm157, %v145, 0
    %v162 = vsel %vm157, %v146, 0
    %164 = vmatpush.msra.mxu0 0.0
    %165 = vmatpush.msra.mxu0 0.0
    %166 = vmatpush.msra.mxu0 0.0
    %167 = vmatpush.msra.mxu0 0.0
    %168 = vmatpush.msra.mxu0 0.0
    %169 = vmatpush.msra.mxu0 0.0
    %170 = vmatpush.msra.mxu0 0.0
    %171 = vmatpush.msra.mxu0 0.0
    %172 = vmatpush.msra.mxu0 0.0
    %173 = vmatpush.msra.mxu0 0.0
    %174 = vmatpush.msra.mxu0 0.0
    %175 = vmatpush.msra.mxu0 0.0
    %176 = vmatpush.msra.mxu0 0.0
    %177 = vmatpush.msra.mxu0 0.0
    %178 = vmatpush.msra.mxu0 %v107
    %179 = vmatpush.msra.mxu0 %v106
    %180 = vmatmul.f32.gmra.mxu0 %v159
    %v181 = vpop.f32.mrf.mxu0
    %v182 = vadd.f32 0.0, %v181
    %183 = vmatmul.f32.gmra.mxu0 %v162
    %v184 = vpop.f32.mrf.mxu0
    %v185 = vadd.f32 0.0, %v184
    %186 = vdwg.mxu0
    %v188 = vsel %vm157, %v155, 0
    %v191 = vsel %vm157, %v156, 0
    %193 = vmatpush.msra.mxu0 0.0
    %194 = vmatpush.msra.mxu0 0.0
    %195 = vmatpush.msra.mxu0 0.0
    %196 = vmatpush.msra.mxu0 0.0
    %197 = vmatpush.msra.mxu0 0.0
    %198 = vmatpush.msra.mxu0 0.0
    %199 = vmatpush.msra.mxu0 0.0
    %200 = vmatpush.msra.mxu0 0.0
    %201 = vmatpush.msra.mxu0 0.0
    %202 = vmatpush.msra.mxu0 0.0
    %203 = vmatpush.msra.mxu0 0.0
    %204 = vmatpush.msra.mxu0 0.0
    %205 = vmatpush.msra.mxu0 0.0
    %206 = vmatpush.msra.mxu0 0.0
    %207 = vmatpush.msra.mxu0 %v107
    %208 = vmatpush.msra.mxu0 %v106
    %209 = vmatmul.f32.gmra.mxu0 %v188
    %v210 = vpop.f32.mrf.mxu0
    %v211 = vadd.f32 0.0, %v210
    %212 = vmatmul.f32.gmra.mxu0 %v191
    %v213 = vpop.f32.mrf.mxu0
    %v214 = vadd.f32 0.0, %v213
    %215 = vdwg.mxu0
    %218 = vrot.lane.b32.xlu0 %v106, 32
    %v219 = vpop.permute.xlu0 %218
    %220 = vrot.lane.b32.xlu0 %v107, 32
    %v221 = vpop.permute.xlu0 %220
    %226 = vrot.lane.b32.xlu0 %v211, 64
    %v227 = vpop.permute.xlu0 %226
    %228 = vrot.lane.b32.xlu0 %v214, 64
    %v229 = vpop.permute.xlu0 %228
    %vm232 = vcmask 261120
    %v233 = vsel %vm232, %v182, %v219
    %v234 = vsel %vm232, %v185, %v221
    %vm235 = vcmask 523264
    %v236 = vsel %vm235, %v233, %v227
    %v237 = vsel %vm235, %v234, %v229
    %v238 = vld [vmem:[%s3] sm:$0xff]
    %v239 = vld [vmem:[%s3 + $0x8] sm:$0xff]
    %v240 = vld [vmem:[%s3 + $0x10] sm:$0xff]
    %v241 = vld [vmem:[%s3 + $0x18] sm:$0xff]
    %v242 = vld [vmem:[%s3 + $0x20] sm:$0xff]
    %v243 = vld [vmem:[%s3 + $0x28] sm:$0xff]
    %v244 = vld [vmem:[%s3 + $0x30] sm:$0xff]
    %v245 = vld [vmem:[%s3 + $0x38] sm:$0xff]
    %v246 = vld [vmem:[%s3 + $0x40] sm:$0xff]
    %v247 = vld [vmem:[%s3 + $0x48] sm:$0xff]
    %v248 = vld [vmem:[%s3 + $0x50] sm:$0xff]
    %v249 = vld [vmem:[%s3 + $0x58] sm:$0xff]
    %v250 = vld [vmem:[%s4] sm:$0x1]
    %v252 = vperm.slane %v250, 0
    %vm254 = vcmask 785408
    %v256 = vsel %vm254, %v236, 0
    %v259 = vsel %vm254, %v237, 0
    %261 = vmatpush.msra.mxu0 0.0
    %262 = vmatpush.msra.mxu0 0.0
    %263 = vmatpush.msra.mxu0 0.0
    %264 = vmatpush.msra.mxu0 0.0
    %265 = vmatpush.msra.mxu0 %v249
    %266 = vmatpush.msra.mxu0 %v248
    %267 = vmatpush.msra.mxu0 %v247
    %268 = vmatpush.msra.mxu0 %v246
    %269 = vmatpush.msra.mxu0 %v245
    %270 = vmatpush.msra.mxu0 %v244
    %271 = vmatpush.msra.mxu0 %v243
    %272 = vmatpush.msra.mxu0 %v242
    %273 = vmatpush.msra.mxu0 %v241
    %274 = vmatpush.msra.mxu0 %v240
    %275 = vmatpush.msra.mxu0 %v239
    %276 = vmatpush.msra.mxu0 %v238
    %277 = vmatmul.f32.gmra.mxu0 %v256
    %v278 = vpop.f32.mrf.mxu0
    %v279 = vadd.f32 %v252, %v278
    %280 = vmatmul.f32.gmra.mxu0 %v259
    %v281 = vpop.f32.mrf.mxu0
    %v282 = vadd.f32 %v252, %v281
    %283 = vdwg.mxu0
    %v284 = vmax.f32 %v279, 0.0
    %v285 = vmax.f32 %v282, 0.0
    %286 = vst.msk [vmem:[#allocation2] sm:$0xff] %vm232, %v284
    %287 = vst.msk [vmem:[#allocation2 + $0x8] sm:$0xff] %vm232, %v285
    // Predicated region
    $region22: #{dynamics_forward.12} parent=1 // pred_check
      _
    $region23: #{dynamics_forward.12} parent=1 // pred_check_branch
      %289 = sbr.rel (0) target = $region25
    $region24: #{dynamics_forward.12} parent=1 // pred_region
      %291 = vsyncadd [#allocation3], 0
      %s292 = sshll.u32 [#allocation2], 4
      %s293 = int_to_ptr.vmem [resolvable:$true] %s292
      %s294 = sshll.u32 %s5, 4
      %s295 = int_to_ptr.hbm [resolvable:$true] %s294
      %300 = dma.vmem_to_hbm [thread:$0]  %s293, 256, %s295, [#allocation3], 128, 128, 8
    $region25: #{dynamics_forward.12} parent=1 // pred_fallthru
      _
    // Predicated region
    $region26: #{dynamics_forward.12} parent=1 // pred_check
      _
    $region27: #{dynamics_forward.12} parent=1 // pred_check_branch
      %302 = sbr.rel (0) target = $region29
    $region28: #{dynamics_forward.12} parent=1 // pred_region
      %304 = dma.done [#allocation3], 256
    $region29: #{dynamics_forward.12} parent=1 // pred_fallthru
      _
    %305 = vsyncpa [#allocation3], 1

</llo_original>
